<compile_context>
chip_gen: v7x
topology: tpu7x:2x2x1
jax: 0.10.0
libtpu: 0.0.40
codegen_flags: <defaults>
</compile_context>

<pallas_src>
import functools
import math

import jax
import jax.numpy as jnp
from jax.experimental import pallas as pl
from jax.experimental.pallas import tpu as pltpu  # noqa: F401

EMB = 64
HEADS = 4
PATCH = 8
DEPTH = 4
FF_EXP = 4
LN_EPS = 1e-5


# ------------------------------ fused Pallas kernel --------------------------

def _transce_kernel(patches_ref, pe_wT_ref, pe_b_ref,
                    ln_g_ref, ln_b_ref,
                    wq_T_ref, bq_ref, wk_T_ref, bk_ref, wv_T_ref, bv_ref,
                    out_wT_ref, out_b_ref,
                    ff1_wT_ref, ff1_b_ref, ff2_wT_ref, ff2_b_ref,
                    hseg_ref, o_ref, *, batch, seq, emb, heads, depth):
    B, S, E, H = batch, seq, emb, heads
    Dh = E // H
    scale = 1.0 / math.sqrt(Dh)

    def linear(x, wT, b):
        return jnp.dot(x, wT, preferred_element_type=jnp.float32) + b

    def layernorm(x, g, b):
        mean = jnp.mean(x, axis=-1, keepdims=True)
        xc = x - mean
        var = jnp.mean(xc * xc, axis=-1, keepdims=True)
        return xc * jax.lax.rsqrt(var + LN_EPS) * g + b

    def gelu(y):
        # exact (erf-based) GELU, matching nn.GELU() default
        return 0.5 * y * (1.0 + jax.lax.erf(y * 0.7071067811865476))

    # block-diagonal (E, E) matrix: per-head segment sum + re-broadcast
    hseg = hseg_ref[...]

    # Patch embedding for both images (single merged matmul): (B*S, E)
    x = linear(patches_ref[...], pe_wT_ref[...], pe_b_ref[...])

    for d in range(depth):                       # static unroll over layers
        xn = layernorm(x, ln_g_ref[d], ln_b_ref[d])

        # ---- self-attention over the image-batch axis ----------------------
        q = linear(xn, wq_T_ref[d], bq_ref[d]) * scale
        k = linear(xn, wk_T_ref[d], bk_ref[d])
        v = linear(xn, wv_T_ref[d], bv_ref[d])

        # rows are ordered (b, s): block b occupies rows [b*S, (b+1)*S)
        qb = [q[b * S:(b + 1) * S, :] for b in range(B)]
        kb = [k[b * S:(b + 1) * S, :] for b in range(B)]
        vb = [v[b * S:(b + 1) * S, :] for b in range(B)]

        outs = []
        for b1 in range(B):
            # per-(patch, head) scores, replicated across each head's Dh lanes
            scores = [jnp.dot(qb[b1] * kb[b2], hseg,
                              preferred_element_type=jnp.float32)
                      for b2 in range(B)]
            m = scores[0]
            for sc in scores[1:]:
                m = jnp.maximum(m, sc)
            exps = [jnp.exp(sc - m) for sc in scores]
            denom = exps[0]
            for e in exps[1:]:
                denom = denom + e
            inv = pl.reciprocal(denom, approx=True)
            o = exps[0] * inv * vb[0]
            for b2 in range(1, B):
                o = o + exps[b2] * inv * vb[b2]
            outs.append(o)
        attn = outs[0] if B == 1 else jnp.concatenate(outs, axis=0)   # (B*S, E)

        x = x + linear(attn, out_wT_ref[d], out_b_ref[d])

        # ---- feed-forward applied twice (exact module semantics) -----------
        def ff(t):
            h = gelu(linear(t, ff1_wT_ref[d], ff1_b_ref[d]))
            return linear(h, ff2_wT_ref[d], ff2_b_ref[d])

        x_norm2 = x + ff(xn)       # x_norm = x + FF(LN(x_old))
        x = x + ff(x_norm2)        # x      = x + FF(x_norm)

    o_ref[...] = x


# ------------------------------ host-side wrapper -----------------------------

def _extract_patches(img, patch):
    """NCHW image -> (B, num_patches, C*patch*patch) patch matrix (pure layout)."""
    B, C, H, W = img.shape
    nh, nw = H // patch, W // patch
    p = img.reshape(B, C, nh, patch, nw, patch)
    p = p.transpose(0, 2, 4, 1, 3, 5)                 # (B, nh, nw, C, ph, pw)
    return p.reshape(B, nh * nw, C * patch * patch)


def transce_forward(x1, x2, packed):
    B, C, H, W = x1.shape
    nP = (H // PATCH) * (W // PATCH)
    S = 2 * nP
    M = B * S
    Kp = C * PATCH * PATCH

    # Host-side patch extraction for both images (tiny layout ops); everything
    # else runs inside a single fused Pallas kernel with weights resident in VMEM.
    patches = jnp.concatenate(
        [_extract_patches(x1, PATCH), _extract_patches(x2, PATCH)], axis=1
    ).reshape(M, Kp).astype(jnp.float32)

    kernel = functools.partial(_transce_kernel, batch=B, seq=S, emb=EMB,
                               heads=HEADS, depth=DEPTH)
    out2d = pl.pallas_call(
        kernel,
        out_shape=jax.ShapeDtypeStruct((M, EMB), jnp.float32),
    )(patches,
      packed["pe_wT"], packed["pe_b"],
      packed["ln_g"], packed["ln_b"],
      packed["wq_T"], packed["bq"],
      packed["wk_T"], packed["bk"],
      packed["wv_T"], packed["bv"],
      packed["out_wT"], packed["out_b"],
      packed["ff1_wT"], packed["ff1_b"],
      packed["ff2_wT"], packed["ff2_b"],
      packed["hseg"])
    return out2d.reshape(B, S, EMB)


# ------------------------------ parameters ------------------------------------

def init_params(key, in_channels=1):
    """PyTorch-layout parameters (Conv2d weight, nn.Linear (out, in) weights)."""
    def nrm(k, shape, s=0.05):
        return s * jax.random.normal(k, shape, dtype=jnp.float32)

    keys = jax.random.split(key, 2 + DEPTH)
    params = {
        "pe_w": nrm(keys[0], (EMB, in_channels, PATCH, PATCH)),
        "pe_b": nrm(keys[1], (EMB,)),
        "layers": [],
    }
    for d in range(DEPTH):
        ks = jax.random.split(keys[2 + d], 8)
        params["layers"].append({
            "ln1_g": jnp.ones((EMB,), jnp.float32),
            "ln1_b": jnp.zeros((EMB,), jnp.float32),
            "in_w": nrm(ks[0], (3 * EMB, EMB)),
            "in_b": nrm(ks[1], (3 * EMB,)),
            "out_w": nrm(ks[2], (EMB, EMB)),
            "out_b": nrm(ks[3], (EMB,)),
            "ff1_w": nrm(ks[4], (FF_EXP * EMB, EMB)),
            "ff1_b": nrm(ks[5], (FF_EXP * EMB,)),
            "ff2_w": nrm(ks[6], (EMB, FF_EXP * EMB)),
            "ff2_b": nrm(ks[7], (EMB,)),
        })
    return params


def pack_params(params):
    """One-time layout work: transpose all Linear weights, conv->matmul reshape,
    split the fused QKV projection, (1, N) bias shapes, stack the DEPTH layers,
    and build the per-head segment-sum matrix.  Keeps the per-call path free of
    reshapes/transposes."""
    E = EMB
    L = params["layers"]

    def stack(name):
        return jnp.stack([lp[name] for lp in L], axis=0)

    in_w = stack("in_w")                                   # (D, 3E, E)
    in_b = stack("in_b")                                   # (D, 3E)
    wq, wk, wv = in_w[:, :E, :], in_w[:, E:2 * E, :], in_w[:, 2 * E:, :]
    bq, bk, bv = in_b[:, :E], in_b[:, E:2 * E], in_b[:, 2 * E:]

    packed = {
        "pe_wT": params["pe_w"].reshape(E, -1).T,          # (C*p*p, E)
        "pe_b": params["pe_b"].reshape(1, E),
        "ln_g": stack("ln1_g").reshape(DEPTH, 1, E),
        "ln_b": stack("ln1_b").reshape(DEPTH, 1, E),
        "wq_T": jnp.transpose(wq, (0, 2, 1)),              # (D, E, E)
        "bq": bq.reshape(DEPTH, 1, E),
        "wk_T": jnp.transpose(wk, (0, 2, 1)),
        "bk": bk.reshape(DEPTH, 1, E),
        "wv_T": jnp.transpose(wv, (0, 2, 1)),
        "bv": bv.reshape(DEPTH, 1, E),
        "out_wT": jnp.transpose(stack("out_w"), (0, 2, 1)),        # (D, E, E)
        "out_b": stack("out_b").reshape(DEPTH, 1, E),
        "ff1_wT": jnp.transpose(stack("ff1_w"), (0, 2, 1)),        # (D, E, 4E)
        "ff1_b": stack("ff1_b").reshape(DEPTH, 1, FF_EXP * E),
        "ff2_wT": jnp.transpose(stack("ff2_w"), (0, 2, 1)),        # (D, 4E, E)
        "ff2_b": stack("ff2_b").reshape(DEPTH, 1, E),
    }
    head_id = jnp.arange(E) // (E // HEADS)
    packed["hseg"] = (head_id[:, None] == head_id[None, :]).astype(jnp.float32)
    return jax.tree_util.tree_map(lambda a: a.astype(jnp.float32), packed)


# ------------------------------ pure-JAX reference -----------------------------

def transce_reference(x1, x2, params):
    """Non-Pallas reference mirroring the PyTorch module (inference semantics)."""
    E, H = EMB, HEADS
    Dh = E // H

    def gelu(y):
        return 0.5 * y * (1.0 + jax.lax.erf(y * 0.7071067811865476))

    def ln(t, g, b):
        mu = jnp.mean(t, axis=-1, keepdims=True)
        var = jnp.mean((t - mu) ** 2, axis=-1, keepdims=True)
        return (t - mu) * jax.lax.rsqrt(var + LN_EPS) * g + b

    def patch_embed(img):
        p = _extract_patches(img, PATCH)
        w2 = params["pe_w"].reshape(E, -1)
        return p @ w2.T + params["pe_b"]

    x = jnp.concatenate([patch_embed(x1), patch_embed(x2)], axis=1)   # (B, S, E)
    B, S, _ = x.shape

    for lp in params["layers"]:
        xn = ln(x, lp["ln1_g"], lp["ln1_b"])
        qkv = xn @ lp["in_w"].T + lp["in_b"]
        q, k, v = qkv[..., :E], qkv[..., E:2 * E], qkv[..., 2 * E:]
        qh = q.reshape(B, S, H, Dh)
        kh = k.reshape(B, S, H, Dh)
        vh = v.reshape(B, S, H, Dh)
        # batch_first=False MHA fed a (B, S, E) tensor: attention over axis 0.
        s = jnp.einsum("lshd,mshd->shlm", qh, kh) / math.sqrt(Dh)
        p = jax.nn.softmax(s, axis=-1)
        o = jnp.einsum("shlm,mshd->lshd", p, vh).reshape(B, S, E)
        x = x + (o @ lp["out_w"].T + lp["out_b"])

        def ff(t):
            h1 = gelu(t @ lp["ff1_w"].T + lp["ff1_b"])
            return h1 @ lp["ff2_w"].T + lp["ff2_b"]

        x_norm2 = x + ff(xn)
        x = x + ff(x_norm2)
    return x


# --------------------------------- main ----------------------------------------

if __name__ == "__main__":
    key = jax.random.PRNGKey(0)
    kp, k1, k2 = jax.random.split(key, 3)

    params = init_params(kp, in_channels=1)
    packed = pack_params(params)

    # B=2, C=1, H=W=16 -> 2x2=4 patches per image, concat(x1, x2) -> seq 8, emb 64.
    x1 = jax.random.normal(k1, (2, 1, 16, 16), dtype=jnp.float32)
    x2 = jax.random.normal(k2, (2, 1, 16, 16), dtype=jnp.float32)

    out = jax.jit(transce_forward)(x1, x2, packed)
    out = jax.block_until_ready(out)

    assert out.shape == (2, 8, EMB), out.shape
    assert bool(jnp.all(jnp.isfinite(out)))

    ref = transce_reference(x1, x2, params)
    assert bool(jnp.allclose(out, ref, atol=5e-2, rtol=0.0)), \
        float(jnp.max(jnp.abs(out - ref)))

    print("KERNEL_OK")
</pallas_src>

<mosaic_0001>
module attributes {stable_mosaic.version = 11 : i64} {
  func.func @_transce_kernel(%arg0: memref<16x64xf32, #tpu.memory_space<vmem>>, %arg1: memref<64x64xf32, #tpu.memory_space<vmem>>, %arg2: memref<1x64xf32, #tpu.memory_space<vmem>>, %arg3: memref<4x1x64xf32, #tpu.memory_space<vmem>>, %arg4: memref<4x1x64xf32, #tpu.memory_space<vmem>>, %arg5: memref<4x64x64xf32, #tpu.memory_space<vmem>>, %arg6: memref<4x1x64xf32, #tpu.memory_space<vmem>>, %arg7: memref<4x64x64xf32, #tpu.memory_space<vmem>>, %arg8: memref<4x1x64xf32, #tpu.memory_space<vmem>>, %arg9: memref<4x64x64xf32, #tpu.memory_space<vmem>>, %arg10: memref<4x1x64xf32, #tpu.memory_space<vmem>>, %arg11: memref<4x64x64xf32, #tpu.memory_space<vmem>>, %arg12: memref<4x1x64xf32, #tpu.memory_space<vmem>>, %arg13: memref<4x64x256xf32, #tpu.memory_space<vmem>>, %arg14: memref<4x1x256xf32, #tpu.memory_space<vmem>>, %arg15: memref<4x256x64xf32, #tpu.memory_space<vmem>>, %arg16: memref<4x1x64xf32, #tpu.memory_space<vmem>>, %arg17: memref<64x64xf32, #tpu.memory_space<vmem>>, %arg18: memref<16x64xf32, #tpu.memory_space<vmem>>) attributes {dimension_semantics = [], scalar_prefetch = 0 : i64, scratch_operands = 0 : i64, tpu.core_type = #tpu.core_type<tc>} {
    %c0 = arith.constant 0 : index
    %c0_0 = arith.constant 0 : index
    %0 = vector.load %arg17[%c0, %c0_0] : memref<64x64xf32, #tpu.memory_space<vmem>>, vector<64x64xf32>
    %c0_1 = arith.constant 0 : index
    %c0_2 = arith.constant 0 : index
    %1 = vector.load %arg0[%c0_1, %c0_2] : memref<16x64xf32, #tpu.memory_space<vmem>>, vector<16x64xf32>
    %c0_3 = arith.constant 0 : index
    %c0_4 = arith.constant 0 : index
    %2 = vector.load %arg1[%c0_3, %c0_4] : memref<64x64xf32, #tpu.memory_space<vmem>>, vector<64x64xf32>
    %c0_5 = arith.constant 0 : index
    %c0_6 = arith.constant 0 : index
    %3 = vector.load %arg2[%c0_5, %c0_6] : memref<1x64xf32, #tpu.memory_space<vmem>>, vector<1x64xf32>
    %cst = arith.constant dense<0.000000e+00> : vector<16x64xf32>
    %4 = tpu.matmul %1, %2, %cst {dimension_numbers = #tpu.dot_dimension_numbers<[1], [0], [0], [1], [0, 0, 1, 1], [], []>} : vector<16x64xf32>, vector<64x64xf32>, vector<16x64xf32> -> vector<16x64xf32>
    %5 = vector.broadcast %3 : vector<1x64xf32> to vector<16x64xf32>
    %6 = arith.addf %4, %5 : vector<16x64xf32>
    %c0_7 = arith.constant 0 : index
    %c0_8 = arith.constant 0 : index
    %c0_9 = arith.constant 0 : index
    %7 = vector.load %arg3[%c0_7, %c0_8, %c0_9] : memref<4x1x64xf32, #tpu.memory_space<vmem>>, vector<1x1x64xf32>
    %8 = vector.shape_cast %7 : vector<1x1x64xf32> to vector<1x64xf32>
    %c0_10 = arith.constant 0 : index
    %c0_11 = arith.constant 0 : index
    %c0_12 = arith.constant 0 : index
    %9 = vector.load %arg4[%c0_10, %c0_11, %c0_12] : memref<4x1x64xf32, #tpu.memory_space<vmem>>, vector<1x1x64xf32>
    %10 = vector.shape_cast %9 : vector<1x1x64xf32> to vector<1x64xf32>
    %cst_13 = arith.constant dense<0.000000e+00> : vector<16xf32>
    %11 = vector.multi_reduction <add>, %6, %cst_13 [1] : vector<16x64xf32> to vector<16xf32>
    %12 = vector.shape_cast %11 : vector<16xf32> to vector<16x1xf32>
    %cst_14 = arith.constant 6.400000e+01 : f32
    %13 = vector.broadcast %cst_14 : f32 to vector<16x1xf32>
    %14 = arith.divf %12, %13 : vector<16x1xf32>
    %15 = vector.broadcast %14 : vector<16x1xf32> to vector<16x64xf32>
    %16 = arith.subf %6, %15 : vector<16x64xf32>
    %17 = arith.mulf %16, %16 : vector<16x64xf32>
    %cst_15 = arith.constant dense<0.000000e+00> : vector<16xf32>
    %18 = vector.multi_reduction <add>, %17, %cst_15 [1] : vector<16x64xf32> to vector<16xf32>
    %19 = vector.shape_cast %18 : vector<16xf32> to vector<16x1xf32>
    %cst_16 = arith.constant 6.400000e+01 : f32
    %20 = vector.broadcast %cst_16 : f32 to vector<16x1xf32>
    %21 = arith.divf %19, %20 : vector<16x1xf32>
    %cst_17 = arith.constant 9.99999974E-6 : f32
    %22 = vector.broadcast %cst_17 : f32 to vector<16x1xf32>
    %23 = arith.addf %21, %22 : vector<16x1xf32>
    %24 = math.rsqrt %23 : vector<16x1xf32>
    %25 = vector.broadcast %24 : vector<16x1xf32> to vector<16x64xf32>
    %26 = arith.mulf %16, %25 : vector<16x64xf32>
    %27 = vector.broadcast %8 : vector<1x64xf32> to vector<16x64xf32>
    %28 = arith.mulf %26, %27 : vector<16x64xf32>
    %29 = vector.broadcast %10 : vector<1x64xf32> to vector<16x64xf32>
    %30 = arith.addf %28, %29 : vector<16x64xf32>
    %c0_18 = arith.constant 0 : index
    %c0_19 = arith.constant 0 : index
    %c0_20 = arith.constant 0 : index
    %31 = vector.load %arg5[%c0_18, %c0_19, %c0_20] : memref<4x64x64xf32, #tpu.memory_space<vmem>>, vector<1x64x64xf32>
    %32 = vector.shape_cast %31 : vector<1x64x64xf32> to vector<64x64xf32>
    %c0_21 = arith.constant 0 : index
    %c0_22 = arith.constant 0 : index
    %c0_23 = arith.constant 0 : index
    %33 = vector.load %arg6[%c0_21, %c0_22, %c0_23] : memref<4x1x64xf32, #tpu.memory_space<vmem>>, vector<1x1x64xf32>
    %34 = vector.shape_cast %33 : vector<1x1x64xf32> to vector<1x64xf32>
    %cst_24 = arith.constant dense<0.000000e+00> : vector<16x64xf32>
    %35 = tpu.matmul %30, %32, %cst_24 {dimension_numbers = #tpu.dot_dimension_numbers<[1], [0], [0], [1], [0, 0, 1, 1], [], []>} : vector<16x64xf32>, vector<64x64xf32>, vector<16x64xf32> -> vector<16x64xf32>
    %36 = vector.broadcast %34 : vector<1x64xf32> to vector<16x64xf32>
    %37 = arith.addf %35, %36 : vector<16x64xf32>
    %cst_25 = arith.constant 2.500000e-01 : f32
    %38 = vector.broadcast %cst_25 : f32 to vector<16x64xf32>
    %39 = arith.mulf %37, %38 : vector<16x64xf32>
    %c0_26 = arith.constant 0 : index
    %c0_27 = arith.constant 0 : index
    %c0_28 = arith.constant 0 : index
    %40 = vector.load %arg7[%c0_26, %c0_27, %c0_28] : memref<4x64x64xf32, #tpu.memory_space<vmem>>, vector<1x64x64xf32>
    %41 = vector.shape_cast %40 : vector<1x64x64xf32> to vector<64x64xf32>
    %c0_29 = arith.constant 0 : index
    %c0_30 = arith.constant 0 : index
    %c0_31 = arith.constant 0 : index
    %42 = vector.load %arg8[%c0_29, %c0_30, %c0_31] : memref<4x1x64xf32, #tpu.memory_space<vmem>>, vector<1x1x64xf32>
    %43 = vector.shape_cast %42 : vector<1x1x64xf32> to vector<1x64xf32>
    %cst_32 = arith.constant dense<0.000000e+00> : vector<16x64xf32>
    %44 = tpu.matmul %30, %41, %cst_32 {dimension_numbers = #tpu.dot_dimension_numbers<[1], [0], [0], [1], [0, 0, 1, 1], [], []>} : vector<16x64xf32>, vector<64x64xf32>, vector<16x64xf32> -> vector<16x64xf32>
    %45 = vector.broadcast %43 : vector<1x64xf32> to vector<16x64xf32>
    %46 = arith.addf %44, %45 : vector<16x64xf32>
    %c0_33 = arith.constant 0 : index
    %c0_34 = arith.constant 0 : index
    %c0_35 = arith.constant 0 : index
    %47 = vector.load %arg9[%c0_33, %c0_34, %c0_35] : memref<4x64x64xf32, #tpu.memory_space<vmem>>, vector<1x64x64xf32>
    %48 = vector.shape_cast %47 : vector<1x64x64xf32> to vector<64x64xf32>
    %c0_36 = arith.constant 0 : index
    %c0_37 = arith.constant 0 : index
    %c0_38 = arith.constant 0 : index
    %49 = vector.load %arg10[%c0_36, %c0_37, %c0_38] : memref<4x1x64xf32, #tpu.memory_space<vmem>>, vector<1x1x64xf32>
    %50 = vector.shape_cast %49 : vector<1x1x64xf32> to vector<1x64xf32>
    %cst_39 = arith.constant dense<0.000000e+00> : vector<16x64xf32>
    %51 = tpu.matmul %30, %48, %cst_39 {dimension_numbers = #tpu.dot_dimension_numbers<[1], [0], [0], [1], [0, 0, 1, 1], [], []>} : vector<16x64xf32>, vector<64x64xf32>, vector<16x64xf32> -> vector<16x64xf32>
    %52 = vector.broadcast %50 : vector<1x64xf32> to vector<16x64xf32>
    %53 = arith.addf %51, %52 : vector<16x64xf32>
    %54 = vector.extract_strided_slice %39 {offsets = [0, 0], sizes = [8, 64], strides = [1, 1]} : vector<16x64xf32> to vector<8x64xf32>
    %55 = vector.extract_strided_slice %39 {offsets = [8, 0], sizes = [8, 64], strides = [1, 1]} : vector<16x64xf32> to vector<8x64xf32>
    %56 = vector.extract_strided_slice %46 {offsets = [0, 0], sizes = [8, 64], strides = [1, 1]} : vector<16x64xf32> to vector<8x64xf32>
    %57 = vector.extract_strided_slice %46 {offsets = [8, 0], sizes = [8, 64], strides = [1, 1]} : vector<16x64xf32> to vector<8x64xf32>
    %58 = vector.extract_strided_slice %53 {offsets = [0, 0], sizes = [8, 64], strides = [1, 1]} : vector<16x64xf32> to vector<8x64xf32>
    %59 = vector.extract_strided_slice %53 {offsets = [8, 0], sizes = [8, 64], strides = [1, 1]} : vector<16x64xf32> to vector<8x64xf32>
    %60 = arith.mulf %54, %56 : vector<8x64xf32>
    %cst_40 = arith.constant dense<0.000000e+00> : vector<8x64xf32>
    %61 = tpu.matmul %60, %0, %cst_40 {dimension_numbers = #tpu.dot_dimension_numbers<[1], [0], [0], [1], [0, 0, 1, 1], [], []>} : vector<8x64xf32>, vector<64x64xf32>, vector<8x64xf32> -> vector<8x64xf32>
    %62 = arith.mulf %54, %57 : vector<8x64xf32>
    %cst_41 = arith.constant dense<0.000000e+00> : vector<8x64xf32>
    %63 = tpu.matmul %62, %0, %cst_41 {dimension_numbers = #tpu.dot_dimension_numbers<[1], [0], [0], [1], [0, 0, 1, 1], [], []>} : vector<8x64xf32>, vector<64x64xf32>, vector<8x64xf32> -> vector<8x64xf32>
    %64 = arith.maximumf %61, %63 : vector<8x64xf32>
    %65 = arith.subf %61, %64 : vector<8x64xf32>
    %66 = math.exp %65 : vector<8x64xf32>
    %67 = arith.subf %63, %64 : vector<8x64xf32>
    %68 = math.exp %67 : vector<8x64xf32>
    %69 = arith.addf %66, %68 : vector<8x64xf32>
    %70 = tpu.reciprocal %69 {approx = true} : vector<8x64xf32> -> vector<8x64xf32>
    %71 = arith.mulf %66, %70 : vector<8x64xf32>
    %72 = arith.mulf %71, %58 : vector<8x64xf32>
    %73 = arith.mulf %68, %70 : vector<8x64xf32>
    %74 = arith.mulf %73, %59 : vector<8x64xf32>
    %75 = arith.addf %72, %74 : vector<8x64xf32>
    %76 = arith.mulf %55, %56 : vector<8x64xf32>
    %cst_42 = arith.constant dense<0.000000e+00> : vector<8x64xf32>
    %77 = tpu.matmul %76, %0, %cst_42 {dimension_numbers = #tpu.dot_dimension_numbers<[1], [0], [0], [1], [0, 0, 1, 1], [], []>} : vector<8x64xf32>, vector<64x64xf32>, vector<8x64xf32> -> vector<8x64xf32>
    %78 = arith.mulf %55, %57 : vector<8x64xf32>
    %cst_43 = arith.constant dense<0.000000e+00> : vector<8x64xf32>
    %79 = tpu.matmul %78, %0, %cst_43 {dimension_numbers = #tpu.dot_dimension_numbers<[1], [0], [0], [1], [0, 0, 1, 1], [], []>} : vector<8x64xf32>, vector<64x64xf32>, vector<8x64xf32> -> vector<8x64xf32>
    %80 = arith.maximumf %77, %79 : vector<8x64xf32>
    %81 = arith.subf %77, %80 : vector<8x64xf32>
    %82 = math.exp %81 : vector<8x64xf32>
    %83 = arith.subf %79, %80 : vector<8x64xf32>
    %84 = math.exp %83 : vector<8x64xf32>
    %85 = arith.addf %82, %84 : vector<8x64xf32>
    %86 = tpu.reciprocal %85 {approx = true} : vector<8x64xf32> -> vector<8x64xf32>
    %87 = arith.mulf %82, %86 : vector<8x64xf32>
    %88 = arith.mulf %87, %58 : vector<8x64xf32>
    %89 = arith.mulf %84, %86 : vector<8x64xf32>
    %90 = arith.mulf %89, %59 : vector<8x64xf32>
    %91 = arith.addf %88, %90 : vector<8x64xf32>
    %92 = tpu.concatenate %75, %91 in 0 : vector<8x64xf32>, vector<8x64xf32> -> vector<16x64xf32>
    %c0_44 = arith.constant 0 : index
    %c0_45 = arith.constant 0 : index
    %c0_46 = arith.constant 0 : index
    %93 = vector.load %arg11[%c0_44, %c0_45, %c0_46] : memref<4x64x64xf32, #tpu.memory_space<vmem>>, vector<1x64x64xf32>
    %94 = vector.shape_cast %93 : vector<1x64x64xf32> to vector<64x64xf32>
    %c0_47 = arith.constant 0 : index
    %c0_48 = arith.constant 0 : index
    %c0_49 = arith.constant 0 : index
    %95 = vector.load %arg12[%c0_47, %c0_48, %c0_49] : memref<4x1x64xf32, #tpu.memory_space<vmem>>, vector<1x1x64xf32>
    %96 = vector.shape_cast %95 : vector<1x1x64xf32> to vector<1x64xf32>
    %cst_50 = arith.constant dense<0.000000e+00> : vector<16x64xf32>
    %97 = tpu.matmul %92, %94, %cst_50 {dimension_numbers = #tpu.dot_dimension_numbers<[1], [0], [0], [1], [0, 0, 1, 1], [], []>} : vector<16x64xf32>, vector<64x64xf32>, vector<16x64xf32> -> vector<16x64xf32>
    %98 = vector.broadcast %96 : vector<1x64xf32> to vector<16x64xf32>
    %99 = arith.addf %97, %98 : vector<16x64xf32>
    %100 = arith.addf %6, %99 : vector<16x64xf32>
    %c0_51 = arith.constant 0 : index
    %c0_52 = arith.constant 0 : index
    %c0_53 = arith.constant 0 : index
    %101 = vector.load %arg13[%c0_51, %c0_52, %c0_53] : memref<4x64x256xf32, #tpu.memory_space<vmem>>, vector<1x64x256xf32>
    %102 = vector.shape_cast %101 : vector<1x64x256xf32> to vector<64x256xf32>
    %c0_54 = arith.constant 0 : index
    %c0_55 = arith.constant 0 : index
    %c0_56 = arith.constant 0 : index
    %103 = vector.load %arg14[%c0_54, %c0_55, %c0_56] : memref<4x1x256xf32, #tpu.memory_space<vmem>>, vector<1x1x256xf32>
    %104 = vector.shape_cast %103 : vector<1x1x256xf32> to vector<1x256xf32>
    %cst_57 = arith.constant dense<0.000000e+00> : vector<16x256xf32>
    %105 = tpu.matmul %30, %102, %cst_57 {dimension_numbers = #tpu.dot_dimension_numbers<[1], [0], [0], [1], [0, 0, 1, 1], [], []>} : vector<16x64xf32>, vector<64x256xf32>, vector<16x256xf32> -> vector<16x256xf32>
    %106 = vector.broadcast %104 : vector<1x256xf32> to vector<16x256xf32>
    %107 = arith.addf %105, %106 : vector<16x256xf32>
    %cst_58 = arith.constant 5.000000e-01 : f32
    %108 = vector.broadcast %cst_58 : f32 to vector<16x256xf32>
    %109 = arith.mulf %108, %107 : vector<16x256xf32>
    %cst_59 = arith.constant 0.707106769 : f32
    %110 = vector.broadcast %cst_59 : f32 to vector<16x256xf32>
    %111 = arith.mulf %107, %110 : vector<16x256xf32>
    %112 = math.erf %111 : vector<16x256xf32>
    %cst_60 = arith.constant 1.000000e+00 : f32
    %113 = vector.broadcast %cst_60 : f32 to vector<16x256xf32>
    %114 = arith.addf %113, %112 : vector<16x256xf32>
    %115 = arith.mulf %109, %114 : vector<16x256xf32>
    %c0_61 = arith.constant 0 : index
    %c0_62 = arith.constant 0 : index
    %c0_63 = arith.constant 0 : index
    %116 = vector.load %arg15[%c0_61, %c0_62, %c0_63] : memref<4x256x64xf32, #tpu.memory_space<vmem>>, vector<1x256x64xf32>
    %117 = vector.shape_cast %116 : vector<1x256x64xf32> to vector<256x64xf32>
    %c0_64 = arith.constant 0 : index
    %c0_65 = arith.constant 0 : index
    %c0_66 = arith.constant 0 : index
    %118 = vector.load %arg16[%c0_64, %c0_65, %c0_66] : memref<4x1x64xf32, #tpu.memory_space<vmem>>, vector<1x1x64xf32>
    %119 = vector.shape_cast %118 : vector<1x1x64xf32> to vector<1x64xf32>
    %cst_67 = arith.constant dense<0.000000e+00> : vector<16x64xf32>
    %120 = tpu.matmul %115, %117, %cst_67 {dimension_numbers = #tpu.dot_dimension_numbers<[1], [0], [0], [1], [0, 0, 1, 1], [], []>} : vector<16x256xf32>, vector<256x64xf32>, vector<16x64xf32> -> vector<16x64xf32>
    %121 = vector.broadcast %119 : vector<1x64xf32> to vector<16x64xf32>
    %122 = arith.addf %120, %121 : vector<16x64xf32>
    %123 = arith.addf %100, %122 : vector<16x64xf32>
    %c0_68 = arith.constant 0 : index
    %c0_69 = arith.constant 0 : index
    %c0_70 = arith.constant 0 : index
    %124 = vector.load %arg13[%c0_68, %c0_69, %c0_70] : memref<4x64x256xf32, #tpu.memory_space<vmem>>, vector<1x64x256xf32>
    %125 = vector.shape_cast %124 : vector<1x64x256xf32> to vector<64x256xf32>
    %c0_71 = arith.constant 0 : index
    %c0_72 = arith.constant 0 : index
    %c0_73 = arith.constant 0 : index
    %126 = vector.load %arg14[%c0_71, %c0_72, %c0_73] : memref<4x1x256xf32, #tpu.memory_space<vmem>>, vector<1x1x256xf32>
    %127 = vector.shape_cast %126 : vector<1x1x256xf32> to vector<1x256xf32>
    %cst_74 = arith.constant dense<0.000000e+00> : vector<16x256xf32>
    %128 = tpu.matmul %123, %125, %cst_74 {dimension_numbers = #tpu.dot_dimension_numbers<[1], [0], [0], [1], [0, 0, 1, 1], [], []>} : vector<16x64xf32>, vector<64x256xf32>, vector<16x256xf32> -> vector<16x256xf32>
    %129 = vector.broadcast %127 : vector<1x256xf32> to vector<16x256xf32>
    %130 = arith.addf %128, %129 : vector<16x256xf32>
    %cst_75 = arith.constant 5.000000e-01 : f32
    %131 = vector.broadcast %cst_75 : f32 to vector<16x256xf32>
    %132 = arith.mulf %131, %130 : vector<16x256xf32>
    %cst_76 = arith.constant 0.707106769 : f32
    %133 = vector.broadcast %cst_76 : f32 to vector<16x256xf32>
    %134 = arith.mulf %130, %133 : vector<16x256xf32>
    %135 = math.erf %134 : vector<16x256xf32>
    %cst_77 = arith.constant 1.000000e+00 : f32
    %136 = vector.broadcast %cst_77 : f32 to vector<16x256xf32>
    %137 = arith.addf %136, %135 : vector<16x256xf32>
    %138 = arith.mulf %132, %137 : vector<16x256xf32>
    %c0_78 = arith.constant 0 : index
    %c0_79 = arith.constant 0 : index
    %c0_80 = arith.constant 0 : index
    %139 = vector.load %arg15[%c0_78, %c0_79, %c0_80] : memref<4x256x64xf32, #tpu.memory_space<vmem>>, vector<1x256x64xf32>
    %140 = vector.shape_cast %139 : vector<1x256x64xf32> to vector<256x64xf32>
    %c0_81 = arith.constant 0 : index
    %c0_82 = arith.constant 0 : index
    %c0_83 = arith.constant 0 : index
    %141 = vector.load %arg16[%c0_81, %c0_82, %c0_83] : memref<4x1x64xf32, #tpu.memory_space<vmem>>, vector<1x1x64xf32>
    %142 = vector.shape_cast %141 : vector<1x1x64xf32> to vector<1x64xf32>
    %cst_84 = arith.constant dense<0.000000e+00> : vector<16x64xf32>
    %143 = tpu.matmul %138, %140, %cst_84 {dimension_numbers = #tpu.dot_dimension_numbers<[1], [0], [0], [1], [0, 0, 1, 1], [], []>} : vector<16x256xf32>, vector<256x64xf32>, vector<16x64xf32> -> vector<16x64xf32>
    %144 = vector.broadcast %142 : vector<1x64xf32> to vector<16x64xf32>
    %145 = arith.addf %143, %144 : vector<16x64xf32>
    %146 = arith.addf %100, %145 : vector<16x64xf32>
    %c1 = arith.constant 1 : index
    %c0_85 = arith.constant 0 : index
    %c0_86 = arith.constant 0 : index
    %147 = vector.load %arg3[%c1, %c0_85, %c0_86] : memref<4x1x64xf32, #tpu.memory_space<vmem>>, vector<1x1x64xf32>
    %148 = vector.shape_cast %147 : vector<1x1x64xf32> to vector<1x64xf32>
    %c1_87 = arith.constant 1 : index
    %c0_88 = arith.constant 0 : index
    %c0_89 = arith.constant 0 : index
    %149 = vector.load %arg4[%c1_87, %c0_88, %c0_89] : memref<4x1x64xf32, #tpu.memory_space<vmem>>, vector<1x1x64xf32>
    %150 = vector.shape_cast %149 : vector<1x1x64xf32> to vector<1x64xf32>
    %cst_90 = arith.constant dense<0.000000e+00> : vector<16xf32>
    %151 = vector.multi_reduction <add>, %146, %cst_90 [1] : vector<16x64xf32> to vector<16xf32>
    %152 = vector.shape_cast %151 : vector<16xf32> to vector<16x1xf32>
    %cst_91 = arith.constant 6.400000e+01 : f32
    %153 = vector.broadcast %cst_91 : f32 to vector<16x1xf32>
    %154 = arith.divf %152, %153 : vector<16x1xf32>
    %155 = vector.broadcast %154 : vector<16x1xf32> to vector<16x64xf32>
    %156 = arith.subf %146, %155 : vector<16x64xf32>
    %157 = arith.mulf %156, %156 : vector<16x64xf32>
    %cst_92 = arith.constant dense<0.000000e+00> : vector<16xf32>
    %158 = vector.multi_reduction <add>, %157, %cst_92 [1] : vector<16x64xf32> to vector<16xf32>
    %159 = vector.shape_cast %158 : vector<16xf32> to vector<16x1xf32>
    %cst_93 = arith.constant 6.400000e+01 : f32
    %160 = vector.broadcast %cst_93 : f32 to vector<16x1xf32>
    %161 = arith.divf %159, %160 : vector<16x1xf32>
    %cst_94 = arith.constant 9.99999974E-6 : f32
    %162 = vector.broadcast %cst_94 : f32 to vector<16x1xf32>
    %163 = arith.addf %161, %162 : vector<16x1xf32>
    %164 = math.rsqrt %163 : vector<16x1xf32>
    %165 = vector.broadcast %164 : vector<16x1xf32> to vector<16x64xf32>
    %166 = arith.mulf %156, %165 : vector<16x64xf32>
    %167 = vector.broadcast %148 : vector<1x64xf32> to vector<16x64xf32>
    %168 = arith.mulf %166, %167 : vector<16x64xf32>
    %169 = vector.broadcast %150 : vector<1x64xf32> to vector<16x64xf32>
    %170 = arith.addf %168, %169 : vector<16x64xf32>
    %c1_95 = arith.constant 1 : index
    %c0_96 = arith.constant 0 : index
    %c0_97 = arith.constant 0 : index
    %171 = vector.load %arg5[%c1_95, %c0_96, %c0_97] : memref<4x64x64xf32, #tpu.memory_space<vmem>>, vector<1x64x64xf32>
    %172 = vector.shape_cast %171 : vector<1x64x64xf32> to vector<64x64xf32>
    %c1_98 = arith.constant 1 : index
    %c0_99 = arith.constant 0 : index
    %c0_100 = arith.constant 0 : index
    %173 = vector.load %arg6[%c1_98, %c0_99, %c0_100] : memref<4x1x64xf32, #tpu.memory_space<vmem>>, vector<1x1x64xf32>
    %174 = vector.shape_cast %173 : vector<1x1x64xf32> to vector<1x64xf32>
    %cst_101 = arith.constant dense<0.000000e+00> : vector<16x64xf32>
    %175 = tpu.matmul %170, %172, %cst_101 {dimension_numbers = #tpu.dot_dimension_numbers<[1], [0], [0], [1], [0, 0, 1, 1], [], []>} : vector<16x64xf32>, vector<64x64xf32>, vector<16x64xf32> -> vector<16x64xf32>
    %176 = vector.broadcast %174 : vector<1x64xf32> to vector<16x64xf32>
    %177 = arith.addf %175, %176 : vector<16x64xf32>
    %cst_102 = arith.constant 2.500000e-01 : f32
    %178 = vector.broadcast %cst_102 : f32 to vector<16x64xf32>
    %179 = arith.mulf %177, %178 : vector<16x64xf32>
    %c1_103 = arith.constant 1 : index
    %c0_104 = arith.constant 0 : index
    %c0_105 = arith.constant 0 : index
    %180 = vector.load %arg7[%c1_103, %c0_104, %c0_105] : memref<4x64x64xf32, #tpu.memory_space<vmem>>, vector<1x64x64xf32>
    %181 = vector.shape_cast %180 : vector<1x64x64xf32> to vector<64x64xf32>
    %c1_106 = arith.constant 1 : index
    %c0_107 = arith.constant 0 : index
    %c0_108 = arith.constant 0 : index
    %182 = vector.load %arg8[%c1_106, %c0_107, %c0_108] : memref<4x1x64xf32, #tpu.memory_space<vmem>>, vector<1x1x64xf32>
    %183 = vector.shape_cast %182 : vector<1x1x64xf32> to vector<1x64xf32>
    %cst_109 = arith.constant dense<0.000000e+00> : vector<16x64xf32>
    %184 = tpu.matmul %170, %181, %cst_109 {dimension_numbers = #tpu.dot_dimension_numbers<[1], [0], [0], [1], [0, 0, 1, 1], [], []>} : vector<16x64xf32>, vector<64x64xf32>, vector<16x64xf32> -> vector<16x64xf32>
    %185 = vector.broadcast %183 : vector<1x64xf32> to vector<16x64xf32>
    %186 = arith.addf %184, %185 : vector<16x64xf32>
    %c1_110 = arith.constant 1 : index
    %c0_111 = arith.constant 0 : index
    %c0_112 = arith.constant 0 : index
    %187 = vector.load %arg9[%c1_110, %c0_111, %c0_112] : memref<4x64x64xf32, #tpu.memory_space<vmem>>, vector<1x64x64xf32>
    %188 = vector.shape_cast %187 : vector<1x64x64xf32> to vector<64x64xf32>
    %c1_113 = arith.constant 1 : index
    %c0_114 = arith.constant 0 : index
    %c0_115 = arith.constant 0 : index
    %189 = vector.load %arg10[%c1_113, %c0_114, %c0_115] : memref<4x1x64xf32, #tpu.memory_space<vmem>>, vector<1x1x64xf32>
    %190 = vector.shape_cast %189 : vector<1x1x64xf32> to vector<1x64xf32>
    %cst_116 = arith.constant dense<0.000000e+00> : vector<16x64xf32>
    %191 = tpu.matmul %170, %188, %cst_116 {dimension_numbers = #tpu.dot_dimension_numbers<[1], [0], [0], [1], [0, 0, 1, 1], [], []>} : vector<16x64xf32>, vector<64x64xf32>, vector<16x64xf32> -> vector<16x64xf32>
    %192 = vector.broadcast %190 : vector<1x64xf32> to vector<16x64xf32>
    %193 = arith.addf %191, %192 : vector<16x64xf32>
    %194 = vector.extract_strided_slice %179 {offsets = [0, 0], sizes = [8, 64], strides = [1, 1]} : vector<16x64xf32> to vector<8x64xf32>
    %195 = vector.extract_strided_slice %179 {offsets = [8, 0], sizes = [8, 64], strides = [1, 1]} : vector<16x64xf32> to vector<8x64xf32>
    %196 = vector.extract_strided_slice %186 {offsets = [0, 0], sizes = [8, 64], strides = [1, 1]} : vector<16x64xf32> to vector<8x64xf32>
    %197 = vector.extract_strided_slice %186 {offsets = [8, 0], sizes = [8, 64], strides = [1, 1]} : vector<16x64xf32> to vector<8x64xf32>
    %198 = vector.extract_strided_slice %193 {offsets = [0, 0], sizes = [8, 64], strides = [1, 1]} : vector<16x64xf32> to vector<8x64xf32>
    %199 = vector.extract_strided_slice %193 {offsets = [8, 0], sizes = [8, 64], strides = [1, 1]} : vector<16x64xf32> to vector<8x64xf32>
    %200 = arith.mulf %194, %196 : vector<8x64xf32>
    %cst_117 = arith.constant dense<0.000000e+00> : vector<8x64xf32>
    %201 = tpu.matmul %200, %0, %cst_117 {dimension_numbers = #tpu.dot_dimension_numbers<[1], [0], [0], [1], [0, 0, 1, 1], [], []>} : vector<8x64xf32>, vector<64x64xf32>, vector<8x64xf32> -> vector<8x64xf32>
    %202 = arith.mulf %194, %197 : vector<8x64xf32>
    %cst_118 = arith.constant dense<0.000000e+00> : vector<8x64xf32>
    %203 = tpu.matmul %202, %0, %cst_118 {dimension_numbers = #tpu.dot_dimension_numbers<[1], [0], [0], [1], [0, 0, 1, 1], [], []>} : vector<8x64xf32>, vector<64x64xf32>, vector<8x64xf32> -> vector<8x64xf32>
    %204 = arith.maximumf %201, %203 : vector<8x64xf32>
    %205 = arith.subf %201, %204 : vector<8x64xf32>
    %206 = math.exp %205 : vector<8x64xf32>
    %207 = arith.subf %203, %204 : vector<8x64xf32>
    %208 = math.exp %207 : vector<8x64xf32>
    %209 = arith.addf %206, %208 : vector<8x64xf32>
    %210 = tpu.reciprocal %209 {approx = true} : vector<8x64xf32> -> vector<8x64xf32>
    %211 = arith.mulf %206, %210 : vector<8x64xf32>
    %212 = arith.mulf %211, %198 : vector<8x64xf32>
    %213 = arith.mulf %208, %210 : vector<8x64xf32>
    %214 = arith.mulf %213, %199 : vector<8x64xf32>
    %215 = arith.addf %212, %214 : vector<8x64xf32>
    %216 = arith.mulf %195, %196 : vector<8x64xf32>
    %cst_119 = arith.constant dense<0.000000e+00> : vector<8x64xf32>
    %217 = tpu.matmul %216, %0, %cst_119 {dimension_numbers = #tpu.dot_dimension_numbers<[1], [0], [0], [1], [0, 0, 1, 1], [], []>} : vector<8x64xf32>, vector<64x64xf32>, vector<8x64xf32> -> vector<8x64xf32>
    %218 = arith.mulf %195, %197 : vector<8x64xf32>
    %cst_120 = arith.constant dense<0.000000e+00> : vector<8x64xf32>
    %219 = tpu.matmul %218, %0, %cst_120 {dimension_numbers = #tpu.dot_dimension_numbers<[1], [0], [0], [1], [0, 0, 1, 1], [], []>} : vector<8x64xf32>, vector<64x64xf32>, vector<8x64xf32> -> vector<8x64xf32>
    %220 = arith.maximumf %217, %219 : vector<8x64xf32>
    %221 = arith.subf %217, %220 : vector<8x64xf32>
    %222 = math.exp %221 : vector<8x64xf32>
    %223 = arith.subf %219, %220 : vector<8x64xf32>
    %224 = math.exp %223 : vector<8x64xf32>
    %225 = arith.addf %222, %224 : vector<8x64xf32>
    %226 = tpu.reciprocal %225 {approx = true} : vector<8x64xf32> -> vector<8x64xf32>
    %227 = arith.mulf %222, %226 : vector<8x64xf32>
    %228 = arith.mulf %227, %198 : vector<8x64xf32>
    %229 = arith.mulf %224, %226 : vector<8x64xf32>
    %230 = arith.mulf %229, %199 : vector<8x64xf32>
    %231 = arith.addf %228, %230 : vector<8x64xf32>
    %232 = tpu.concatenate %215, %231 in 0 : vector<8x64xf32>, vector<8x64xf32> -> vector<16x64xf32>
    %c1_121 = arith.constant 1 : index
    %c0_122 = arith.constant 0 : index
    %c0_123 = arith.constant 0 : index
    %233 = vector.load %arg11[%c1_121, %c0_122, %c0_123] : memref<4x64x64xf32, #tpu.memory_space<vmem>>, vector<1x64x64xf32>
    %234 = vector.shape_cast %233 : vector<1x64x64xf32> to vector<64x64xf32>
    %c1_124 = arith.constant 1 : index
    %c0_125 = arith.constant 0 : index
    %c0_126 = arith.constant 0 : index
    %235 = vector.load %arg12[%c1_124, %c0_125, %c0_126] : memref<4x1x64xf32, #tpu.memory_space<vmem>>, vector<1x1x64xf32>
    %236 = vector.shape_cast %235 : vector<1x1x64xf32> to vector<1x64xf32>
    %cst_127 = arith.constant dense<0.000000e+00> : vector<16x64xf32>
    %237 = tpu.matmul %232, %234, %cst_127 {dimension_numbers = #tpu.dot_dimension_numbers<[1], [0], [0], [1], [0, 0, 1, 1], [], []>} : vector<16x64xf32>, vector<64x64xf32>, vector<16x64xf32> -> vector<16x64xf32>
    %238 = vector.broadcast %236 : vector<1x64xf32> to vector<16x64xf32>
    %239 = arith.addf %237, %238 : vector<16x64xf32>
    %240 = arith.addf %146, %239 : vector<16x64xf32>
    %c1_128 = arith.constant 1 : index
    %c0_129 = arith.constant 0 : index
    %c0_130 = arith.constant 0 : index
    %241 = vector.load %arg13[%c1_128, %c0_129, %c0_130] : memref<4x64x256xf32, #tpu.memory_space<vmem>>, vector<1x64x256xf32>
    %242 = vector.shape_cast %241 : vector<1x64x256xf32> to vector<64x256xf32>
    %c1_131 = arith.constant 1 : index
    %c0_132 = arith.constant 0 : index
    %c0_133 = arith.constant 0 : index
    %243 = vector.load %arg14[%c1_131, %c0_132, %c0_133] : memref<4x1x256xf32, #tpu.memory_space<vmem>>, vector<1x1x256xf32>
    %244 = vector.shape_cast %243 : vector<1x1x256xf32> to vector<1x256xf32>
    %cst_134 = arith.constant dense<0.000000e+00> : vector<16x256xf32>
    %245 = tpu.matmul %170, %242, %cst_134 {dimension_numbers = #tpu.dot_dimension_numbers<[1], [0], [0], [1], [0, 0, 1, 1], [], []>} : vector<16x64xf32>, vector<64x256xf32>, vector<16x256xf32> -> vector<16x256xf32>
    %246 = vector.broadcast %244 : vector<1x256xf32> to vector<16x256xf32>
    %247 = arith.addf %245, %246 : vector<16x256xf32>
    %cst_135 = arith.constant 5.000000e-01 : f32
    %248 = vector.broadcast %cst_135 : f32 to vector<16x256xf32>
    %249 = arith.mulf %248, %247 : vector<16x256xf32>
    %cst_136 = arith.constant 0.707106769 : f32
    %250 = vector.broadcast %cst_136 : f32 to vector<16x256xf32>
    %251 = arith.mulf %247, %250 : vector<16x256xf32>
    %252 = math.erf %251 : vector<16x256xf32>
    %cst_137 = arith.constant 1.000000e+00 : f32
    %253 = vector.broadcast %cst_137 : f32 to vector<16x256xf32>
    %254 = arith.addf %253, %252 : vector<16x256xf32>
    %255 = arith.mulf %249, %254 : vector<16x256xf32>
    %c1_138 = arith.constant 1 : index
    %c0_139 = arith.constant 0 : index
    %c0_140 = arith.constant 0 : index
    %256 = vector.load %arg15[%c1_138, %c0_139, %c0_140] : memref<4x256x64xf32, #tpu.memory_space<vmem>>, vector<1x256x64xf32>
    %257 = vector.shape_cast %256 : vector<1x256x64xf32> to vector<256x64xf32>
    %c1_141 = arith.constant 1 : index
    %c0_142 = arith.constant 0 : index
    %c0_143 = arith.constant 0 : index
    %258 = vector.load %arg16[%c1_141, %c0_142, %c0_143] : memref<4x1x64xf32, #tpu.memory_space<vmem>>, vector<1x1x64xf32>
    %259 = vector.shape_cast %258 : vector<1x1x64xf32> to vector<1x64xf32>
    %cst_144 = arith.constant dense<0.000000e+00> : vector<16x64xf32>
    %260 = tpu.matmul %255, %257, %cst_144 {dimension_numbers = #tpu.dot_dimension_numbers<[1], [0], [0], [1], [0, 0, 1, 1], [], []>} : vector<16x256xf32>, vector<256x64xf32>, vector<16x64xf32> -> vector<16x64xf32>
    %261 = vector.broadcast %259 : vector<1x64xf32> to vector<16x64xf32>
    %262 = arith.addf %260, %261 : vector<16x64xf32>
    %263 = arith.addf %240, %262 : vector<16x64xf32>
    %c1_145 = arith.constant 1 : index
    %c0_146 = arith.constant 0 : index
    %c0_147 = arith.constant 0 : index
    %264 = vector.load %arg13[%c1_145, %c0_146, %c0_147] : memref<4x64x256xf32, #tpu.memory_space<vmem>>, vector<1x64x256xf32>
    %265 = vector.shape_cast %264 : vector<1x64x256xf32> to vector<64x256xf32>
    %c1_148 = arith.constant 1 : index
    %c0_149 = arith.constant 0 : index
    %c0_150 = arith.constant 0 : index
    %266 = vector.load %arg14[%c1_148, %c0_149, %c0_150] : memref<4x1x256xf32, #tpu.memory_space<vmem>>, vector<1x1x256xf32>
    %267 = vector.shape_cast %266 : vector<1x1x256xf32> to vector<1x256xf32>
    %cst_151 = arith.constant dense<0.000000e+00> : vector<16x256xf32>
    %268 = tpu.matmul %263, %265, %cst_151 {dimension_numbers = #tpu.dot_dimension_numbers<[1], [0], [0], [1], [0, 0, 1, 1], [], []>} : vector<16x64xf32>, vector<64x256xf32>, vector<16x256xf32> -> vector<16x256xf32>
    %269 = vector.broadcast %267 : vector<1x256xf32> to vector<16x256xf32>
    %270 = arith.addf %268, %269 : vector<16x256xf32>
    %cst_152 = arith.constant 5.000000e-01 : f32
    %271 = vector.broadcast %cst_152 : f32 to vector<16x256xf32>
    %272 = arith.mulf %271, %270 : vector<16x256xf32>
    %cst_153 = arith.constant 0.707106769 : f32
    %273 = vector.broadcast %cst_153 : f32 to vector<16x256xf32>
    %274 = arith.mulf %270, %273 : vector<16x256xf32>
    %275 = math.erf %274 : vector<16x256xf32>
    %cst_154 = arith.constant 1.000000e+00 : f32
    %276 = vector.broadcast %cst_154 : f32 to vector<16x256xf32>
    %277 = arith.addf %276, %275 : vector<16x256xf32>
    %278 = arith.mulf %272, %277 : vector<16x256xf32>
    %c1_155 = arith.constant 1 : index
    %c0_156 = arith.constant 0 : index
    %c0_157 = arith.constant 0 : index
    %279 = vector.load %arg15[%c1_155, %c0_156, %c0_157] : memref<4x256x64xf32, #tpu.memory_space<vmem>>, vector<1x256x64xf32>
    %280 = vector.shape_cast %279 : vector<1x256x64xf32> to vector<256x64xf32>
    %c1_158 = arith.constant 1 : index
    %c0_159 = arith.constant 0 : index
    %c0_160 = arith.constant 0 : index
    %281 = vector.load %arg16[%c1_158, %c0_159, %c0_160] : memref<4x1x64xf32, #tpu.memory_space<vmem>>, vector<1x1x64xf32>
    %282 = vector.shape_cast %281 : vector<1x1x64xf32> to vector<1x64xf32>
    %cst_161 = arith.constant dense<0.000000e+00> : vector<16x64xf32>
    %283 = tpu.matmul %278, %280, %cst_161 {dimension_numbers = #tpu.dot_dimension_numbers<[1], [0], [0], [1], [0, 0, 1, 1], [], []>} : vector<16x256xf32>, vector<256x64xf32>, vector<16x64xf32> -> vector<16x64xf32>
    %284 = vector.broadcast %282 : vector<1x64xf32> to vector<16x64xf32>
    %285 = arith.addf %283, %284 : vector<16x64xf32>
    %286 = arith.addf %240, %285 : vector<16x64xf32>
    %c2 = arith.constant 2 : index
    %c0_162 = arith.constant 0 : index
    %c0_163 = arith.constant 0 : index
    %287 = vector.load %arg3[%c2, %c0_162, %c0_163] : memref<4x1x64xf32, #tpu.memory_space<vmem>>, vector<1x1x64xf32>
    %288 = vector.shape_cast %287 : vector<1x1x64xf32> to vector<1x64xf32>
    %c2_164 = arith.constant 2 : index
    %c0_165 = arith.constant 0 : index
    %c0_166 = arith.constant 0 : index
    %289 = vector.load %arg4[%c2_164, %c0_165, %c0_166] : memref<4x1x64xf32, #tpu.memory_space<vmem>>, vector<1x1x64xf32>
    %290 = vector.shape_cast %289 : vector<1x1x64xf32> to vector<1x64xf32>
    %cst_167 = arith.constant dense<0.000000e+00> : vector<16xf32>
    %291 = vector.multi_reduction <add>, %286, %cst_167 [1] : vector<16x64xf32> to vector<16xf32>
    %292 = vector.shape_cast %291 : vector<16xf32> to vector<16x1xf32>
    %cst_168 = arith.constant 6.400000e+01 : f32
    %293 = vector.broadcast %cst_168 : f32 to vector<16x1xf32>
    %294 = arith.divf %292, %293 : vector<16x1xf32>
    %295 = vector.broadcast %294 : vector<16x1xf32> to vector<16x64xf32>
    %296 = arith.subf %286, %295 : vector<16x64xf32>
    %297 = arith.mulf %296, %296 : vector<16x64xf32>
    %cst_169 = arith.constant dense<0.000000e+00> : vector<16xf32>
    %298 = vector.multi_reduction <add>, %297, %cst_169 [1] : vector<16x64xf32> to vector<16xf32>
    %299 = vector.shape_cast %298 : vector<16xf32> to vector<16x1xf32>
    %cst_170 = arith.constant 6.400000e+01 : f32
    %300 = vector.broadcast %cst_170 : f32 to vector<16x1xf32>
    %301 = arith.divf %299, %300 : vector<16x1xf32>
    %cst_171 = arith.constant 9.99999974E-6 : f32
    %302 = vector.broadcast %cst_171 : f32 to vector<16x1xf32>
    %303 = arith.addf %301, %302 : vector<16x1xf32>
    %304 = math.rsqrt %303 : vector<16x1xf32>
    %305 = vector.broadcast %304 : vector<16x1xf32> to vector<16x64xf32>
    %306 = arith.mulf %296, %305 : vector<16x64xf32>
    %307 = vector.broadcast %288 : vector<1x64xf32> to vector<16x64xf32>
    %308 = arith.mulf %306, %307 : vector<16x64xf32>
    %309 = vector.broadcast %290 : vector<1x64xf32> to vector<16x64xf32>
    %310 = arith.addf %308, %309 : vector<16x64xf32>
    %c2_172 = arith.constant 2 : index
    %c0_173 = arith.constant 0 : index
    %c0_174 = arith.constant 0 : index
    %311 = vector.load %arg5[%c2_172, %c0_173, %c0_174] : memref<4x64x64xf32, #tpu.memory_space<vmem>>, vector<1x64x64xf32>
    %312 = vector.shape_cast %311 : vector<1x64x64xf32> to vector<64x64xf32>
    %c2_175 = arith.constant 2 : index
    %c0_176 = arith.constant 0 : index
    %c0_177 = arith.constant 0 : index
    %313 = vector.load %arg6[%c2_175, %c0_176, %c0_177] : memref<4x1x64xf32, #tpu.memory_space<vmem>>, vector<1x1x64xf32>
    %314 = vector.shape_cast %313 : vector<1x1x64xf32> to vector<1x64xf32>
    %cst_178 = arith.constant dense<0.000000e+00> : vector<16x64xf32>
    %315 = tpu.matmul %310, %312, %cst_178 {dimension_numbers = #tpu.dot_dimension_numbers<[1], [0], [0], [1], [0, 0, 1, 1], [], []>} : vector<16x64xf32>, vector<64x64xf32>, vector<16x64xf32> -> vector<16x64xf32>
    %316 = vector.broadcast %314 : vector<1x64xf32> to vector<16x64xf32>
    %317 = arith.addf %315, %316 : vector<16x64xf32>
    %cst_179 = arith.constant 2.500000e-01 : f32
    %318 = vector.broadcast %cst_179 : f32 to vector<16x64xf32>
    %319 = arith.mulf %317, %318 : vector<16x64xf32>
    %c2_180 = arith.constant 2 : index
    %c0_181 = arith.constant 0 : index
    %c0_182 = arith.constant 0 : index
    %320 = vector.load %arg7[%c2_180, %c0_181, %c0_182] : memref<4x64x64xf32, #tpu.memory_space<vmem>>, vector<1x64x64xf32>
    %321 = vector.shape_cast %320 : vector<1x64x64xf32> to vector<64x64xf32>
    %c2_183 = arith.constant 2 : index
    %c0_184 = arith.constant 0 : index
    %c0_185 = arith.constant 0 : index
    %322 = vector.load %arg8[%c2_183, %c0_184, %c0_185] : memref<4x1x64xf32, #tpu.memory_space<vmem>>, vector<1x1x64xf32>
    %323 = vector.shape_cast %322 : vector<1x1x64xf32> to vector<1x64xf32>
    %cst_186 = arith.constant dense<0.000000e+00> : vector<16x64xf32>
    %324 = tpu.matmul %310, %321, %cst_186 {dimension_numbers = #tpu.dot_dimension_numbers<[1], [0], [0], [1], [0, 0, 1, 1], [], []>} : vector<16x64xf32>, vector<64x64xf32>, vector<16x64xf32> -> vector<16x64xf32>
    %325 = vector.broadcast %323 : vector<1x64xf32> to vector<16x64xf32>
    %326 = arith.addf %324, %325 : vector<16x64xf32>
    %c2_187 = arith.constant 2 : index
    %c0_188 = arith.constant 0 : index
    %c0_189 = arith.constant 0 : index
    %327 = vector.load %arg9[%c2_187, %c0_188, %c0_189] : memref<4x64x64xf32, #tpu.memory_space<vmem>>, vector<1x64x64xf32>
    %328 = vector.shape_cast %327 : vector<1x64x64xf32> to vector<64x64xf32>
    %c2_190 = arith.constant 2 : index
    %c0_191 = arith.constant 0 : index
    %c0_192 = arith.constant 0 : index
    %329 = vector.load %arg10[%c2_190, %c0_191, %c0_192] : memref<4x1x64xf32, #tpu.memory_space<vmem>>, vector<1x1x64xf32>
    %330 = vector.shape_cast %329 : vector<1x1x64xf32> to vector<1x64xf32>
    %cst_193 = arith.constant dense<0.000000e+00> : vector<16x64xf32>
    %331 = tpu.matmul %310, %328, %cst_193 {dimension_numbers = #tpu.dot_dimension_numbers<[1], [0], [0], [1], [0, 0, 1, 1], [], []>} : vector<16x64xf32>, vector<64x64xf32>, vector<16x64xf32> -> vector<16x64xf32>
    %332 = vector.broadcast %330 : vector<1x64xf32> to vector<16x64xf32>
    %333 = arith.addf %331, %332 : vector<16x64xf32>
    %334 = vector.extract_strided_slice %319 {offsets = [0, 0], sizes = [8, 64], strides = [1, 1]} : vector<16x64xf32> to vector<8x64xf32>
    %335 = vector.extract_strided_slice %319 {offsets = [8, 0], sizes = [8, 64], strides = [1, 1]} : vector<16x64xf32> to vector<8x64xf32>
    %336 = vector.extract_strided_slice %326 {offsets = [0, 0], sizes = [8, 64], strides = [1, 1]} : vector<16x64xf32> to vector<8x64xf32>
    %337 = vector.extract_strided_slice %326 {offsets = [8, 0], sizes = [8, 64], strides = [1, 1]} : vector<16x64xf32> to vector<8x64xf32>
    %338 = vector.extract_strided_slice %333 {offsets = [0, 0], sizes = [8, 64], strides = [1, 1]} : vector<16x64xf32> to vector<8x64xf32>
    %339 = vector.extract_strided_slice %333 {offsets = [8, 0], sizes = [8, 64], strides = [1, 1]} : vector<16x64xf32> to vector<8x64xf32>
    %340 = arith.mulf %334, %336 : vector<8x64xf32>
    %cst_194 = arith.constant dense<0.000000e+00> : vector<8x64xf32>
    %341 = tpu.matmul %340, %0, %cst_194 {dimension_numbers = #tpu.dot_dimension_numbers<[1], [0], [0], [1], [0, 0, 1, 1], [], []>} : vector<8x64xf32>, vector<64x64xf32>, vector<8x64xf32> -> vector<8x64xf32>
    %342 = arith.mulf %334, %337 : vector<8x64xf32>
    %cst_195 = arith.constant dense<0.000000e+00> : vector<8x64xf32>
    %343 = tpu.matmul %342, %0, %cst_195 {dimension_numbers = #tpu.dot_dimension_numbers<[1], [0], [0], [1], [0, 0, 1, 1], [], []>} : vector<8x64xf32>, vector<64x64xf32>, vector<8x64xf32> -> vector<8x64xf32>
    %344 = arith.maximumf %341, %343 : vector<8x64xf32>
    %345 = arith.subf %341, %344 : vector<8x64xf32>
    %346 = math.exp %345 : vector<8x64xf32>
    %347 = arith.subf %343, %344 : vector<8x64xf32>
    %348 = math.exp %347 : vector<8x64xf32>
    %349 = arith.addf %346, %348 : vector<8x64xf32>
    %350 = tpu.reciprocal %349 {approx = true} : vector<8x64xf32> -> vector<8x64xf32>
    %351 = arith.mulf %346, %350 : vector<8x64xf32>
    %352 = arith.mulf %351, %338 : vector<8x64xf32>
    %353 = arith.mulf %348, %350 : vector<8x64xf32>
    %354 = arith.mulf %353, %339 : vector<8x64xf32>
    %355 = arith.addf %352, %354 : vector<8x64xf32>
    %356 = arith.mulf %335, %336 : vector<8x64xf32>
    %cst_196 = arith.constant dense<0.000000e+00> : vector<8x64xf32>
    %357 = tpu.matmul %356, %0, %cst_196 {dimension_numbers = #tpu.dot_dimension_numbers<[1], [0], [0], [1], [0, 0, 1, 1], [], []>} : vector<8x64xf32>, vector<64x64xf32>, vector<8x64xf32> -> vector<8x64xf32>
    %358 = arith.mulf %335, %337 : vector<8x64xf32>
    %cst_197 = arith.constant dense<0.000000e+00> : vector<8x64xf32>
    %359 = tpu.matmul %358, %0, %cst_197 {dimension_numbers = #tpu.dot_dimension_numbers<[1], [0], [0], [1], [0, 0, 1, 1], [], []>} : vector<8x64xf32>, vector<64x64xf32>, vector<8x64xf32> -> vector<8x64xf32>
    %360 = arith.maximumf %357, %359 : vector<8x64xf32>
    %361 = arith.subf %357, %360 : vector<8x64xf32>
    %362 = math.exp %361 : vector<8x64xf32>
    %363 = arith.subf %359, %360 : vector<8x64xf32>
    %364 = math.exp %363 : vector<8x64xf32>
    %365 = arith.addf %362, %364 : vector<8x64xf32>
    %366 = tpu.reciprocal %365 {approx = true} : vector<8x64xf32> -> vector<8x64xf32>
    %367 = arith.mulf %362, %366 : vector<8x64xf32>
    %368 = arith.mulf %367, %338 : vector<8x64xf32>
    %369 = arith.mulf %364, %366 : vector<8x64xf32>
    %370 = arith.mulf %369, %339 : vector<8x64xf32>
    %371 = arith.addf %368, %370 : vector<8x64xf32>
    %372 = tpu.concatenate %355, %371 in 0 : vector<8x64xf32>, vector<8x64xf32> -> vector<16x64xf32>
    %c2_198 = arith.constant 2 : index
    %c0_199 = arith.constant 0 : index
    %c0_200 = arith.constant 0 : index
    %373 = vector.load %arg11[%c2_198, %c0_199, %c0_200] : memref<4x64x64xf32, #tpu.memory_space<vmem>>, vector<1x64x64xf32>
    %374 = vector.shape_cast %373 : vector<1x64x64xf32> to vector<64x64xf32>
    %c2_201 = arith.constant 2 : index
    %c0_202 = arith.constant 0 : index
    %c0_203 = arith.constant 0 : index
    %375 = vector.load %arg12[%c2_201, %c0_202, %c0_203] : memref<4x1x64xf32, #tpu.memory_space<vmem>>, vector<1x1x64xf32>
    %376 = vector.shape_cast %375 : vector<1x1x64xf32> to vector<1x64xf32>
    %cst_204 = arith.constant dense<0.000000e+00> : vector<16x64xf32>
    %377 = tpu.matmul %372, %374, %cst_204 {dimension_numbers = #tpu.dot_dimension_numbers<[1], [0], [0], [1], [0, 0, 1, 1], [], []>} : vector<16x64xf32>, vector<64x64xf32>, vector<16x64xf32> -> vector<16x64xf32>
    %378 = vector.broadcast %376 : vector<1x64xf32> to vector<16x64xf32>
    %379 = arith.addf %377, %378 : vector<16x64xf32>
    %380 = arith.addf %286, %379 : vector<16x64xf32>
    %c2_205 = arith.constant 2 : index
    %c0_206 = arith.constant 0 : index
    %c0_207 = arith.constant 0 : index
    %381 = vector.load %arg13[%c2_205, %c0_206, %c0_207] : memref<4x64x256xf32, #tpu.memory_space<vmem>>, vector<1x64x256xf32>
    %382 = vector.shape_cast %381 : vector<1x64x256xf32> to vector<64x256xf32>
    %c2_208 = arith.constant 2 : index
    %c0_209 = arith.constant 0 : index
    %c0_210 = arith.constant 0 : index
    %383 = vector.load %arg14[%c2_208, %c0_209, %c0_210] : memref<4x1x256xf32, #tpu.memory_space<vmem>>, vector<1x1x256xf32>
    %384 = vector.shape_cast %383 : vector<1x1x256xf32> to vector<1x256xf32>
    %cst_211 = arith.constant dense<0.000000e+00> : vector<16x256xf32>
    %385 = tpu.matmul %310, %382, %cst_211 {dimension_numbers = #tpu.dot_dimension_numbers<[1], [0], [0], [1], [0, 0, 1, 1], [], []>} : vector<16x64xf32>, vector<64x256xf32>, vector<16x256xf32> -> vector<16x256xf32>
    %386 = vector.broadcast %384 : vector<1x256xf32> to vector<16x256xf32>
    %387 = arith.addf %385, %386 : vector<16x256xf32>
    %cst_212 = arith.constant 5.000000e-01 : f32
    %388 = vector.broadcast %cst_212 : f32 to vector<16x256xf32>
    %389 = arith.mulf %388, %387 : vector<16x256xf32>
    %cst_213 = arith.constant 0.707106769 : f32
    %390 = vector.broadcast %cst_213 : f32 to vector<16x256xf32>
    %391 = arith.mulf %387, %390 : vector<16x256xf32>
    %392 = math.erf %391 : vector<16x256xf32>
    %cst_214 = arith.constant 1.000000e+00 : f32
    %393 = vector.broadcast %cst_214 : f32 to vector<16x256xf32>
    %394 = arith.addf %393, %392 : vector<16x256xf32>
    %395 = arith.mulf %389, %394 : vector<16x256xf32>
    %c2_215 = arith.constant 2 : index
    %c0_216 = arith.constant 0 : index
    %c0_217 = arith.constant 0 : index
    %396 = vector.load %arg15[%c2_215, %c0_216, %c0_217] : memref<4x256x64xf32, #tpu.memory_space<vmem>>, vector<1x256x64xf32>
    %397 = vector.shape_cast %396 : vector<1x256x64xf32> to vector<256x64xf32>
    %c2_218 = arith.constant 2 : index
    %c0_219 = arith.constant 0 : index
    %c0_220 = arith.constant 0 : index
    %398 = vector.load %arg16[%c2_218, %c0_219, %c0_220] : memref<4x1x64xf32, #tpu.memory_space<vmem>>, vector<1x1x64xf32>
    %399 = vector.shape_cast %398 : vector<1x1x64xf32> to vector<1x64xf32>
    %cst_221 = arith.constant dense<0.000000e+00> : vector<16x64xf32>
    %400 = tpu.matmul %395, %397, %cst_221 {dimension_numbers = #tpu.dot_dimension_numbers<[1], [0], [0], [1], [0, 0, 1, 1], [], []>} : vector<16x256xf32>, vector<256x64xf32>, vector<16x64xf32> -> vector<16x64xf32>
    %401 = vector.broadcast %399 : vector<1x64xf32> to vector<16x64xf32>
    %402 = arith.addf %400, %401 : vector<16x64xf32>
    %403 = arith.addf %380, %402 : vector<16x64xf32>
    %c2_222 = arith.constant 2 : index
    %c0_223 = arith.constant 0 : index
    %c0_224 = arith.constant 0 : index
    %404 = vector.load %arg13[%c2_222, %c0_223, %c0_224] : memref<4x64x256xf32, #tpu.memory_space<vmem>>, vector<1x64x256xf32>
    %405 = vector.shape_cast %404 : vector<1x64x256xf32> to vector<64x256xf32>
    %c2_225 = arith.constant 2 : index
    %c0_226 = arith.constant 0 : index
    %c0_227 = arith.constant 0 : index
    %406 = vector.load %arg14[%c2_225, %c0_226, %c0_227] : memref<4x1x256xf32, #tpu.memory_space<vmem>>, vector<1x1x256xf32>
    %407 = vector.shape_cast %406 : vector<1x1x256xf32> to vector<1x256xf32>
    %cst_228 = arith.constant dense<0.000000e+00> : vector<16x256xf32>
    %408 = tpu.matmul %403, %405, %cst_228 {dimension_numbers = #tpu.dot_dimension_numbers<[1], [0], [0], [1], [0, 0, 1, 1], [], []>} : vector<16x64xf32>, vector<64x256xf32>, vector<16x256xf32> -> vector<16x256xf32>
    %409 = vector.broadcast %407 : vector<1x256xf32> to vector<16x256xf32>
    %410 = arith.addf %408, %409 : vector<16x256xf32>
    %cst_229 = arith.constant 5.000000e-01 : f32
    %411 = vector.broadcast %cst_229 : f32 to vector<16x256xf32>
    %412 = arith.mulf %411, %410 : vector<16x256xf32>
    %cst_230 = arith.constant 0.707106769 : f32
    %413 = vector.broadcast %cst_230 : f32 to vector<16x256xf32>
    %414 = arith.mulf %410, %413 : vector<16x256xf32>
    %415 = math.erf %414 : vector<16x256xf32>
    %cst_231 = arith.constant 1.000000e+00 : f32
    %416 = vector.broadcast %cst_231 : f32 to vector<16x256xf32>
    %417 = arith.addf %416, %415 : vector<16x256xf32>
    %418 = arith.mulf %412, %417 : vector<16x256xf32>
    %c2_232 = arith.constant 2 : index
    %c0_233 = arith.constant 0 : index
    %c0_234 = arith.constant 0 : index
    %419 = vector.load %arg15[%c2_232, %c0_233, %c0_234] : memref<4x256x64xf32, #tpu.memory_space<vmem>>, vector<1x256x64xf32>
    %420 = vector.shape_cast %419 : vector<1x256x64xf32> to vector<256x64xf32>
    %c2_235 = arith.constant 2 : index
    %c0_236 = arith.constant 0 : index
    %c0_237 = arith.constant 0 : index
    %421 = vector.load %arg16[%c2_235, %c0_236, %c0_237] : memref<4x1x64xf32, #tpu.memory_space<vmem>>, vector<1x1x64xf32>
    %422 = vector.shape_cast %421 : vector<1x1x64xf32> to vector<1x64xf32>
    %cst_238 = arith.constant dense<0.000000e+00> : vector<16x64xf32>
    %423 = tpu.matmul %418, %420, %cst_238 {dimension_numbers = #tpu.dot_dimension_numbers<[1], [0], [0], [1], [0, 0, 1, 1], [], []>} : vector<16x256xf32>, vector<256x64xf32>, vector<16x64xf32> -> vector<16x64xf32>
    %424 = vector.broadcast %422 : vector<1x64xf32> to vector<16x64xf32>
    %425 = arith.addf %423, %424 : vector<16x64xf32>
    %426 = arith.addf %380, %425 : vector<16x64xf32>
    %c3 = arith.constant 3 : index
    %c0_239 = arith.constant 0 : index
    %c0_240 = arith.constant 0 : index
    %427 = vector.load %arg3[%c3, %c0_239, %c0_240] : memref<4x1x64xf32, #tpu.memory_space<vmem>>, vector<1x1x64xf32>
    %428 = vector.shape_cast %427 : vector<1x1x64xf32> to vector<1x64xf32>
    %c3_241 = arith.constant 3 : index
    %c0_242 = arith.constant 0 : index
    %c0_243 = arith.constant 0 : index
    %429 = vector.load %arg4[%c3_241, %c0_242, %c0_243] : memref<4x1x64xf32, #tpu.memory_space<vmem>>, vector<1x1x64xf32>
    %430 = vector.shape_cast %429 : vector<1x1x64xf32> to vector<1x64xf32>
    %cst_244 = arith.constant dense<0.000000e+00> : vector<16xf32>
    %431 = vector.multi_reduction <add>, %426, %cst_244 [1] : vector<16x64xf32> to vector<16xf32>
    %432 = vector.shape_cast %431 : vector<16xf32> to vector<16x1xf32>
    %cst_245 = arith.constant 6.400000e+01 : f32
    %433 = vector.broadcast %cst_245 : f32 to vector<16x1xf32>
    %434 = arith.divf %432, %433 : vector<16x1xf32>
    %435 = vector.broadcast %434 : vector<16x1xf32> to vector<16x64xf32>
    %436 = arith.subf %426, %435 : vector<16x64xf32>
    %437 = arith.mulf %436, %436 : vector<16x64xf32>
    %cst_246 = arith.constant dense<0.000000e+00> : vector<16xf32>
    %438 = vector.multi_reduction <add>, %437, %cst_246 [1] : vector<16x64xf32> to vector<16xf32>
    %439 = vector.shape_cast %438 : vector<16xf32> to vector<16x1xf32>
    %cst_247 = arith.constant 6.400000e+01 : f32
    %440 = vector.broadcast %cst_247 : f32 to vector<16x1xf32>
    %441 = arith.divf %439, %440 : vector<16x1xf32>
    %cst_248 = arith.constant 9.99999974E-6 : f32
    %442 = vector.broadcast %cst_248 : f32 to vector<16x1xf32>
    %443 = arith.addf %441, %442 : vector<16x1xf32>
    %444 = math.rsqrt %443 : vector<16x1xf32>
    %445 = vector.broadcast %444 : vector<16x1xf32> to vector<16x64xf32>
    %446 = arith.mulf %436, %445 : vector<16x64xf32>
    %447 = vector.broadcast %428 : vector<1x64xf32> to vector<16x64xf32>
    %448 = arith.mulf %446, %447 : vector<16x64xf32>
    %449 = vector.broadcast %430 : vector<1x64xf32> to vector<16x64xf32>
    %450 = arith.addf %448, %449 : vector<16x64xf32>
    %c3_249 = arith.constant 3 : index
    %c0_250 = arith.constant 0 : index
    %c0_251 = arith.constant 0 : index
    %451 = vector.load %arg5[%c3_249, %c0_250, %c0_251] : memref<4x64x64xf32, #tpu.memory_space<vmem>>, vector<1x64x64xf32>
    %452 = vector.shape_cast %451 : vector<1x64x64xf32> to vector<64x64xf32>
    %c3_252 = arith.constant 3 : index
    %c0_253 = arith.constant 0 : index
    %c0_254 = arith.constant 0 : index
    %453 = vector.load %arg6[%c3_252, %c0_253, %c0_254] : memref<4x1x64xf32, #tpu.memory_space<vmem>>, vector<1x1x64xf32>
    %454 = vector.shape_cast %453 : vector<1x1x64xf32> to vector<1x64xf32>
    %cst_255 = arith.constant dense<0.000000e+00> : vector<16x64xf32>
    %455 = tpu.matmul %450, %452, %cst_255 {dimension_numbers = #tpu.dot_dimension_numbers<[1], [0], [0], [1], [0, 0, 1, 1], [], []>} : vector<16x64xf32>, vector<64x64xf32>, vector<16x64xf32> -> vector<16x64xf32>
    %456 = vector.broadcast %454 : vector<1x64xf32> to vector<16x64xf32>
    %457 = arith.addf %455, %456 : vector<16x64xf32>
    %cst_256 = arith.constant 2.500000e-01 : f32
    %458 = vector.broadcast %cst_256 : f32 to vector<16x64xf32>
    %459 = arith.mulf %457, %458 : vector<16x64xf32>
    %c3_257 = arith.constant 3 : index
    %c0_258 = arith.constant 0 : index
    %c0_259 = arith.constant 0 : index
    %460 = vector.load %arg7[%c3_257, %c0_258, %c0_259] : memref<4x64x64xf32, #tpu.memory_space<vmem>>, vector<1x64x64xf32>
    %461 = vector.shape_cast %460 : vector<1x64x64xf32> to vector<64x64xf32>
    %c3_260 = arith.constant 3 : index
    %c0_261 = arith.constant 0 : index
    %c0_262 = arith.constant 0 : index
    %462 = vector.load %arg8[%c3_260, %c0_261, %c0_262] : memref<4x1x64xf32, #tpu.memory_space<vmem>>, vector<1x1x64xf32>
    %463 = vector.shape_cast %462 : vector<1x1x64xf32> to vector<1x64xf32>
    %cst_263 = arith.constant dense<0.000000e+00> : vector<16x64xf32>
    %464 = tpu.matmul %450, %461, %cst_263 {dimension_numbers = #tpu.dot_dimension_numbers<[1], [0], [0], [1], [0, 0, 1, 1], [], []>} : vector<16x64xf32>, vector<64x64xf32>, vector<16x64xf32> -> vector<16x64xf32>
    %465 = vector.broadcast %463 : vector<1x64xf32> to vector<16x64xf32>
    %466 = arith.addf %464, %465 : vector<16x64xf32>
    %c3_264 = arith.constant 3 : index
    %c0_265 = arith.constant 0 : index
    %c0_266 = arith.constant 0 : index
    %467 = vector.load %arg9[%c3_264, %c0_265, %c0_266] : memref<4x64x64xf32, #tpu.memory_space<vmem>>, vector<1x64x64xf32>
    %468 = vector.shape_cast %467 : vector<1x64x64xf32> to vector<64x64xf32>
    %c3_267 = arith.constant 3 : index
    %c0_268 = arith.constant 0 : index
    %c0_269 = arith.constant 0 : index
    %469 = vector.load %arg10[%c3_267, %c0_268, %c0_269] : memref<4x1x64xf32, #tpu.memory_space<vmem>>, vector<1x1x64xf32>
    %470 = vector.shape_cast %469 : vector<1x1x64xf32> to vector<1x64xf32>
    %cst_270 = arith.constant dense<0.000000e+00> : vector<16x64xf32>
    %471 = tpu.matmul %450, %468, %cst_270 {dimension_numbers = #tpu.dot_dimension_numbers<[1], [0], [0], [1], [0, 0, 1, 1], [], []>} : vector<16x64xf32>, vector<64x64xf32>, vector<16x64xf32> -> vector<16x64xf32>
    %472 = vector.broadcast %470 : vector<1x64xf32> to vector<16x64xf32>
    %473 = arith.addf %471, %472 : vector<16x64xf32>
    %474 = vector.extract_strided_slice %459 {offsets = [0, 0], sizes = [8, 64], strides = [1, 1]} : vector<16x64xf32> to vector<8x64xf32>
    %475 = vector.extract_strided_slice %459 {offsets = [8, 0], sizes = [8, 64], strides = [1, 1]} : vector<16x64xf32> to vector<8x64xf32>
    %476 = vector.extract_strided_slice %466 {offsets = [0, 0], sizes = [8, 64], strides = [1, 1]} : vector<16x64xf32> to vector<8x64xf32>
    %477 = vector.extract_strided_slice %466 {offsets = [8, 0], sizes = [8, 64], strides = [1, 1]} : vector<16x64xf32> to vector<8x64xf32>
    %478 = vector.extract_strided_slice %473 {offsets = [0, 0], sizes = [8, 64], strides = [1, 1]} : vector<16x64xf32> to vector<8x64xf32>
    %479 = vector.extract_strided_slice %473 {offsets = [8, 0], sizes = [8, 64], strides = [1, 1]} : vector<16x64xf32> to vector<8x64xf32>
    %480 = arith.mulf %474, %476 : vector<8x64xf32>
    %cst_271 = arith.constant dense<0.000000e+00> : vector<8x64xf32>
    %481 = tpu.matmul %480, %0, %cst_271 {dimension_numbers = #tpu.dot_dimension_numbers<[1], [0], [0], [1], [0, 0, 1, 1], [], []>} : vector<8x64xf32>, vector<64x64xf32>, vector<8x64xf32> -> vector<8x64xf32>
    %482 = arith.mulf %474, %477 : vector<8x64xf32>
    %cst_272 = arith.constant dense<0.000000e+00> : vector<8x64xf32>
    %483 = tpu.matmul %482, %0, %cst_272 {dimension_numbers = #tpu.dot_dimension_numbers<[1], [0], [0], [1], [0, 0, 1, 1], [], []>} : vector<8x64xf32>, vector<64x64xf32>, vector<8x64xf32> -> vector<8x64xf32>
    %484 = arith.maximumf %481, %483 : vector<8x64xf32>
    %485 = arith.subf %481, %484 : vector<8x64xf32>
    %486 = math.exp %485 : vector<8x64xf32>
    %487 = arith.subf %483, %484 : vector<8x64xf32>
    %488 = math.exp %487 : vector<8x64xf32>
    %489 = arith.addf %486, %488 : vector<8x64xf32>
    %490 = tpu.reciprocal %489 {approx = true} : vector<8x64xf32> -> vector<8x64xf32>
    %491 = arith.mulf %486, %490 : vector<8x64xf32>
    %492 = arith.mulf %491, %478 : vector<8x64xf32>
    %493 = arith.mulf %488, %490 : vector<8x64xf32>
    %494 = arith.mulf %493, %479 : vector<8x64xf32>
    %495 = arith.addf %492, %494 : vector<8x64xf32>
    %496 = arith.mulf %475, %476 : vector<8x64xf32>
    %cst_273 = arith.constant dense<0.000000e+00> : vector<8x64xf32>
    %497 = tpu.matmul %496, %0, %cst_273 {dimension_numbers = #tpu.dot_dimension_numbers<[1], [0], [0], [1], [0, 0, 1, 1], [], []>} : vector<8x64xf32>, vector<64x64xf32>, vector<8x64xf32> -> vector<8x64xf32>
    %498 = arith.mulf %475, %477 : vector<8x64xf32>
    %cst_274 = arith.constant dense<0.000000e+00> : vector<8x64xf32>
    %499 = tpu.matmul %498, %0, %cst_274 {dimension_numbers = #tpu.dot_dimension_numbers<[1], [0], [0], [1], [0, 0, 1, 1], [], []>} : vector<8x64xf32>, vector<64x64xf32>, vector<8x64xf32> -> vector<8x64xf32>
    %500 = arith.maximumf %497, %499 : vector<8x64xf32>
    %501 = arith.subf %497, %500 : vector<8x64xf32>
    %502 = math.exp %501 : vector<8x64xf32>
    %503 = arith.subf %499, %500 : vector<8x64xf32>
    %504 = math.exp %503 : vector<8x64xf32>
    %505 = arith.addf %502, %504 : vector<8x64xf32>
    %506 = tpu.reciprocal %505 {approx = true} : vector<8x64xf32> -> vector<8x64xf32>
    %507 = arith.mulf %502, %506 : vector<8x64xf32>
    %508 = arith.mulf %507, %478 : vector<8x64xf32>
    %509 = arith.mulf %504, %506 : vector<8x64xf32>
    %510 = arith.mulf %509, %479 : vector<8x64xf32>
    %511 = arith.addf %508, %510 : vector<8x64xf32>
    %512 = tpu.concatenate %495, %511 in 0 : vector<8x64xf32>, vector<8x64xf32> -> vector<16x64xf32>
    %c3_275 = arith.constant 3 : index
    %c0_276 = arith.constant 0 : index
    %c0_277 = arith.constant 0 : index
    %513 = vector.load %arg11[%c3_275, %c0_276, %c0_277] : memref<4x64x64xf32, #tpu.memory_space<vmem>>, vector<1x64x64xf32>
    %514 = vector.shape_cast %513 : vector<1x64x64xf32> to vector<64x64xf32>
    %c3_278 = arith.constant 3 : index
    %c0_279 = arith.constant 0 : index
    %c0_280 = arith.constant 0 : index
    %515 = vector.load %arg12[%c3_278, %c0_279, %c0_280] : memref<4x1x64xf32, #tpu.memory_space<vmem>>, vector<1x1x64xf32>
    %516 = vector.shape_cast %515 : vector<1x1x64xf32> to vector<1x64xf32>
    %cst_281 = arith.constant dense<0.000000e+00> : vector<16x64xf32>
    %517 = tpu.matmul %512, %514, %cst_281 {dimension_numbers = #tpu.dot_dimension_numbers<[1], [0], [0], [1], [0, 0, 1, 1], [], []>} : vector<16x64xf32>, vector<64x64xf32>, vector<16x64xf32> -> vector<16x64xf32>
    %518 = vector.broadcast %516 : vector<1x64xf32> to vector<16x64xf32>
    %519 = arith.addf %517, %518 : vector<16x64xf32>
    %520 = arith.addf %426, %519 : vector<16x64xf32>
    %c3_282 = arith.constant 3 : index
    %c0_283 = arith.constant 0 : index
    %c0_284 = arith.constant 0 : index
    %521 = vector.load %arg13[%c3_282, %c0_283, %c0_284] : memref<4x64x256xf32, #tpu.memory_space<vmem>>, vector<1x64x256xf32>
    %522 = vector.shape_cast %521 : vector<1x64x256xf32> to vector<64x256xf32>
    %c3_285 = arith.constant 3 : index
    %c0_286 = arith.constant 0 : index
    %c0_287 = arith.constant 0 : index
    %523 = vector.load %arg14[%c3_285, %c0_286, %c0_287] : memref<4x1x256xf32, #tpu.memory_space<vmem>>, vector<1x1x256xf32>
    %524 = vector.shape_cast %523 : vector<1x1x256xf32> to vector<1x256xf32>
    %cst_288 = arith.constant dense<0.000000e+00> : vector<16x256xf32>
    %525 = tpu.matmul %450, %522, %cst_288 {dimension_numbers = #tpu.dot_dimension_numbers<[1], [0], [0], [1], [0, 0, 1, 1], [], []>} : vector<16x64xf32>, vector<64x256xf32>, vector<16x256xf32> -> vector<16x256xf32>
    %526 = vector.broadcast %524 : vector<1x256xf32> to vector<16x256xf32>
    %527 = arith.addf %525, %526 : vector<16x256xf32>
    %cst_289 = arith.constant 5.000000e-01 : f32
    %528 = vector.broadcast %cst_289 : f32 to vector<16x256xf32>
    %529 = arith.mulf %528, %527 : vector<16x256xf32>
    %cst_290 = arith.constant 0.707106769 : f32
    %530 = vector.broadcast %cst_290 : f32 to vector<16x256xf32>
    %531 = arith.mulf %527, %530 : vector<16x256xf32>
    %532 = math.erf %531 : vector<16x256xf32>
    %cst_291 = arith.constant 1.000000e+00 : f32
    %533 = vector.broadcast %cst_291 : f32 to vector<16x256xf32>
    %534 = arith.addf %533, %532 : vector<16x256xf32>
    %535 = arith.mulf %529, %534 : vector<16x256xf32>
    %c3_292 = arith.constant 3 : index
    %c0_293 = arith.constant 0 : index
    %c0_294 = arith.constant 0 : index
    %536 = vector.load %arg15[%c3_292, %c0_293, %c0_294] : memref<4x256x64xf32, #tpu.memory_space<vmem>>, vector<1x256x64xf32>
    %537 = vector.shape_cast %536 : vector<1x256x64xf32> to vector<256x64xf32>
    %c3_295 = arith.constant 3 : index
    %c0_296 = arith.constant 0 : index
    %c0_297 = arith.constant 0 : index
    %538 = vector.load %arg16[%c3_295, %c0_296, %c0_297] : memref<4x1x64xf32, #tpu.memory_space<vmem>>, vector<1x1x64xf32>
    %539 = vector.shape_cast %538 : vector<1x1x64xf32> to vector<1x64xf32>
    %cst_298 = arith.constant dense<0.000000e+00> : vector<16x64xf32>
    %540 = tpu.matmul %535, %537, %cst_298 {dimension_numbers = #tpu.dot_dimension_numbers<[1], [0], [0], [1], [0, 0, 1, 1], [], []>} : vector<16x256xf32>, vector<256x64xf32>, vector<16x64xf32> -> vector<16x64xf32>
    %541 = vector.broadcast %539 : vector<1x64xf32> to vector<16x64xf32>
    %542 = arith.addf %540, %541 : vector<16x64xf32>
    %543 = arith.addf %520, %542 : vector<16x64xf32>
    %c3_299 = arith.constant 3 : index
    %c0_300 = arith.constant 0 : index
    %c0_301 = arith.constant 0 : index
    %544 = vector.load %arg13[%c3_299, %c0_300, %c0_301] : memref<4x64x256xf32, #tpu.memory_space<vmem>>, vector<1x64x256xf32>
    %545 = vector.shape_cast %544 : vector<1x64x256xf32> to vector<64x256xf32>
    %c3_302 = arith.constant 3 : index
    %c0_303 = arith.constant 0 : index
    %c0_304 = arith.constant 0 : index
    %546 = vector.load %arg14[%c3_302, %c0_303, %c0_304] : memref<4x1x256xf32, #tpu.memory_space<vmem>>, vector<1x1x256xf32>
    %547 = vector.shape_cast %546 : vector<1x1x256xf32> to vector<1x256xf32>
    %cst_305 = arith.constant dense<0.000000e+00> : vector<16x256xf32>
    %548 = tpu.matmul %543, %545, %cst_305 {dimension_numbers = #tpu.dot_dimension_numbers<[1], [0], [0], [1], [0, 0, 1, 1], [], []>} : vector<16x64xf32>, vector<64x256xf32>, vector<16x256xf32> -> vector<16x256xf32>
    %549 = vector.broadcast %547 : vector<1x256xf32> to vector<16x256xf32>
    %550 = arith.addf %548, %549 : vector<16x256xf32>
    %cst_306 = arith.constant 5.000000e-01 : f32
    %551 = vector.broadcast %cst_306 : f32 to vector<16x256xf32>
    %552 = arith.mulf %551, %550 : vector<16x256xf32>
    %cst_307 = arith.constant 0.707106769 : f32
    %553 = vector.broadcast %cst_307 : f32 to vector<16x256xf32>
    %554 = arith.mulf %550, %553 : vector<16x256xf32>
    %555 = math.erf %554 : vector<16x256xf32>
    %cst_308 = arith.constant 1.000000e+00 : f32
    %556 = vector.broadcast %cst_308 : f32 to vector<16x256xf32>
    %557 = arith.addf %556, %555 : vector<16x256xf32>
    %558 = arith.mulf %552, %557 : vector<16x256xf32>
    %c3_309 = arith.constant 3 : index
    %c0_310 = arith.constant 0 : index
    %c0_311 = arith.constant 0 : index
    %559 = vector.load %arg15[%c3_309, %c0_310, %c0_311] : memref<4x256x64xf32, #tpu.memory_space<vmem>>, vector<1x256x64xf32>
    %560 = vector.shape_cast %559 : vector<1x256x64xf32> to vector<256x64xf32>
    %c3_312 = arith.constant 3 : index
    %c0_313 = arith.constant 0 : index
    %c0_314 = arith.constant 0 : index
    %561 = vector.load %arg16[%c3_312, %c0_313, %c0_314] : memref<4x1x64xf32, #tpu.memory_space<vmem>>, vector<1x1x64xf32>
    %562 = vector.shape_cast %561 : vector<1x1x64xf32> to vector<1x64xf32>
    %cst_315 = arith.constant dense<0.000000e+00> : vector<16x64xf32>
    %563 = tpu.matmul %558, %560, %cst_315 {dimension_numbers = #tpu.dot_dimension_numbers<[1], [0], [0], [1], [0, 0, 1, 1], [], []>} : vector<16x256xf32>, vector<256x64xf32>, vector<16x64xf32> -> vector<16x64xf32>
    %564 = vector.broadcast %562 : vector<1x64xf32> to vector<16x64xf32>
    %565 = arith.addf %563, %564 : vector<16x64xf32>
    %566 = arith.addf %520, %565 : vector<16x64xf32>
    %c0_316 = arith.constant 0 : index
    %c0_317 = arith.constant 0 : index
    %567 = vector.load %arg18[%c0_316, %c0_317] : memref<16x64xf32, #tpu.memory_space<vmem>>, vector<16x64xf32>
    tpu.vector_store %arg18[%c0_316, %c0_317], %566 {strides = array<i32>} : memref<16x64xf32, #tpu.memory_space<vmem>>, vector<16x64xf32>,
    return
  }
}

</mosaic_0001>

<llo_original>
// kernel: transce_forward.1
$region0: #{transce_forward.1}
  #allocation0 [shape = 'u32[]', space=smem, size = 0x4, offset = 0x4, fixed_abs, tag = 'smem constant byte address 0x4 - core index']
  #allocation1 [shape = 'u32[144,128]{1,0:T(1,128)}', space=vmem, size = 0x12000, scoped, tag = 'internal scratch']
  %s0 = inlined_call_operand.vmem [shape: f32[16,64], index: 0, kind: input, shape index: {}]
  %s1 = inlined_call_operand.vmem [shape: f32[64,64], index: 1, kind: input, shape index: {}]
  %s2 = inlined_call_operand.vmem [shape: f32[1,64], index: 2, kind: input, shape index: {}]
  %s3 = inlined_call_operand.vmem [shape: f32[4,1,64], index: 3, kind: input, shape index: {}]
  %s4 = inlined_call_operand.vmem [shape: f32[4,1,64], index: 4, kind: input, shape index: {}]
  %s5 = inlined_call_operand.vmem [shape: f32[4,64,64], index: 5, kind: input, shape index: {}]
  %s6 = inlined_call_operand.vmem [shape: f32[4,1,64], index: 6, kind: input, shape index: {}]
  %s7 = inlined_call_operand.vmem [shape: f32[4,64,64], index: 7, kind: input, shape index: {}]
  %s8 = inlined_call_operand.hbm [shape: f32[4,1,64], index: 8, kind: input, shape index: {}]
  %s9 = inlined_call_operand.vmem [shape: f32[4,64,64], index: 9, kind: input, shape index: {}]
  %s10 = inlined_call_operand.hbm [shape: f32[4,1,64], index: 10, kind: input, shape index: {}]
  %s11 = inlined_call_operand.vmem [shape: f32[4,64,64], index: 11, kind: input, shape index: {}]
  %s12 = inlined_call_operand.vmem [shape: f32[4,1,64], index: 12, kind: input, shape index: {}]
  %s13 = inlined_call_operand.vmem [shape: f32[4,64,256], index: 13, kind: input, shape index: {}]
  %s14 = inlined_call_operand.vmem [shape: f32[4,1,256], index: 14, kind: input, shape index: {}]
  %s15 = inlined_call_operand.vmem [shape: f32[4,256,64], index: 15, kind: input, shape index: {}]
  %s16 = inlined_call_operand.hbm [shape: f32[4,1,64], index: 16, kind: input, shape index: {}]
  %s17 = inlined_call_operand.vmem [shape: f32[64,64], index: 17, kind: input, shape index: {}]
  %s18 = inlined_call_operand.hbm [shape: f32[16,64], index: 18, kind: output, shape index: {}]
  %s19 = sld [smem:[#allocation0]]
  $region94: #{transce_forward.1} parent=0
    _
  %s21 = ssub.s32 1, %s19
  %s22 = scalar_select 0, %s21, %s19
  $region1: #{transce_forward.1} parent=0
    #allocation2 [shape = 'u8[2048]{0}', space=vmem, size = 0x800, scoped, tag = 'input window, operand 8, single buffered']
    #allocation3 [shape = 's32[1]{0}', space=sflag, size = 0x4, scoped, tag = 'scoped memory for transce_forward.1']
    #allocation4 [shape = 's32[1]{0}', space=sflag, size = 0x4, scoped, tag = 'scoped memory for transce_forward.1']
    #allocation5 [shape = 'u8[2048]{0}', space=vmem, size = 0x800, scoped, tag = 'input window, operand 10, single buffered']
    #allocation6 [shape = 's32[1]{0}', space=sflag, size = 0x4, scoped, tag = 'scoped memory for transce_forward.1']
    #allocation7 [shape = 'u8[2048]{0}', space=vmem, size = 0x800, scoped, tag = 'input window, operand 16, single buffered']
    #allocation8 [shape = 'u8[8192]{0}', space=vmem, size = 0x2000, scoped, tag = 'output window, operand 0, single buffered']
    %23 = vsyncpa [#allocation3], 0
    %24 = vsyncpa [#allocation6], 0
    %25 = vsyncpa [#allocation4], 0
    // Predicated region
    $region2: #{transce_forward.1} parent=1 // pred_check
      _
    $region3: #{transce_forward.1} parent=1 // pred_check_branch
      %27 = sbr.rel (0) target = $region5
    $region4: #{transce_forward.1} parent=1 // pred_region
      _
    $region5: #{transce_forward.1} parent=1 // pred_fallthru
      _
    // Predicated region
    $region6: #{transce_forward.1} parent=1 // pred_check
      _
    $region7: #{transce_forward.1} parent=1 // pred_check_branch
      %29 = sbr.rel (0) target = $region9
    $region8: #{transce_forward.1} parent=1 // pred_region
      _
    $region9: #{transce_forward.1} parent=1 // pred_fallthru
      _
    // Predicated region
    $region10: #{transce_forward.1} parent=1 // pred_check
      _
    $region11: #{transce_forward.1} parent=1 // pred_check_branch
      %31 = sbr.rel (0) target = $region13
    $region12: #{transce_forward.1} parent=1 // pred_region
      _
    $region13: #{transce_forward.1} parent=1 // pred_fallthru
      _
    // Predicated region
    $region14: #{transce_forward.1} parent=1 // pred_check
      _
    $region15: #{transce_forward.1} parent=1 // pred_check_branch
      %33 = sbr.rel (0) target = $region17
    $region16: #{transce_forward.1} parent=1 // pred_region
      _
    $region17: #{transce_forward.1} parent=1 // pred_fallthru
      _
    // Predicated region
    $region18: #{transce_forward.1} parent=1 // pred_check
      _
    $region19: #{transce_forward.1} parent=1 // pred_check_branch
      %35 = sbr.rel (0) target = $region21
    $region20: #{transce_forward.1} parent=1 // pred_region
      _
    $region21: #{transce_forward.1} parent=1 // pred_fallthru
      _
    // Predicated region
    $region22: #{transce_forward.1} parent=1 // pred_check
      _
    $region23: #{transce_forward.1} parent=1 // pred_check_branch
      %37 = sbr.rel (0) target = $region25
    $region24: #{transce_forward.1} parent=1 // pred_region
      _
    $region25: #{transce_forward.1} parent=1 // pred_fallthru
      _
    // Predicated region
    $region26: #{transce_forward.1} parent=1 // pred_check
      _
    $region27: #{transce_forward.1} parent=1 // pred_check_branch
      %39 = sbr.rel (0) target = $region29
    $region28: #{transce_forward.1} parent=1 // pred_region
      _
    $region29: #{transce_forward.1} parent=1 // pred_fallthru
      _
    // Predicated region
    $region30: #{transce_forward.1} parent=1 // pred_check
      _
    $region31: #{transce_forward.1} parent=1 // pred_check_branch
      %41 = sbr.rel (0) target = $region33
    $region32: #{transce_forward.1} parent=1 // pred_region
      _
    $region33: #{transce_forward.1} parent=1 // pred_fallthru
      _
    // Predicated region
    $region34: #{transce_forward.1} parent=1 // pred_check
      _
    $region35: #{transce_forward.1} parent=1 // pred_check_branch
      %43 = sbr.rel (0) target = $region37
    $region36: #{transce_forward.1} parent=1 // pred_region
      %s45 = ssub.s32 64, 64
      %46 = vsyncadd [#allocation3], %s45
      %s47 = sshll.u32 [#allocation2], 4
      %s48 = int_to_ptr.vmem [resolvable:$true] %s47
      %53 = dma.hbm_to_vmem [thread:$0]  %s8, 64, %s48, [#allocation3], 16, 16, 1
    $region37: #{transce_forward.1} parent=1 // pred_fallthru
      _
    // Predicated region
    $region38: #{transce_forward.1} parent=1 // pred_check
      _
    $region39: #{transce_forward.1} parent=1 // pred_check_branch
      %55 = sbr.rel (0) target = $region41
    $region40: #{transce_forward.1} parent=1 // pred_region
      _
    $region41: #{transce_forward.1} parent=1 // pred_fallthru
      _
    // Predicated region
    $region42: #{transce_forward.1} parent=1 // pred_check
      _
    $region43: #{transce_forward.1} parent=1 // pred_check_branch
      %57 = sbr.rel (0) target = $region45
    $region44: #{transce_forward.1} parent=1 // pred_region
      %s59 = ssub.s32 64, 64
      %60 = vsyncadd [#allocation6], %s59
      %s61 = sshll.u32 [#allocation5], 4
      %s62 = int_to_ptr.vmem [resolvable:$true] %s61
      %67 = dma.hbm_to_vmem [thread:$0]  %s10, 64, %s62, [#allocation6], 16, 16, 1
    $region45: #{transce_forward.1} parent=1 // pred_fallthru
      _
    // Predicated region
    $region46: #{transce_forward.1} parent=1 // pred_check
      _
    $region47: #{transce_forward.1} parent=1 // pred_check_branch
      %69 = sbr.rel (0) target = $region49
    $region48: #{transce_forward.1} parent=1 // pred_region
      _
    $region49: #{transce_forward.1} parent=1 // pred_fallthru
      _
    // Predicated region
    $region50: #{transce_forward.1} parent=1 // pred_check
      _
    $region51: #{transce_forward.1} parent=1 // pred_check_branch
      %71 = sbr.rel (0) target = $region53
    $region52: #{transce_forward.1} parent=1 // pred_region
      _
    $region53: #{transce_forward.1} parent=1 // pred_fallthru
      _
    // Predicated region
    $region54: #{transce_forward.1} parent=1 // pred_check
      _
    $region55: #{transce_forward.1} parent=1 // pred_check_branch
      %73 = sbr.rel (0) target = $region57
    $region56: #{transce_forward.1} parent=1 // pred_region
      _
    $region57: #{transce_forward.1} parent=1 // pred_fallthru
      _
    // Predicated region
    $region58: #{transce_forward.1} parent=1 // pred_check
      _
    $region59: #{transce_forward.1} parent=1 // pred_check_branch
      %75 = sbr.rel (0) target = $region61
    $region60: #{transce_forward.1} parent=1 // pred_region
      _
    $region61: #{transce_forward.1} parent=1 // pred_fallthru
      _
    // Predicated region
    $region62: #{transce_forward.1} parent=1 // pred_check
      _
    $region63: #{transce_forward.1} parent=1 // pred_check_branch
      %77 = sbr.rel (0) target = $region65
    $region64: #{transce_forward.1} parent=1 // pred_region
      _
    $region65: #{transce_forward.1} parent=1 // pred_fallthru
      _
    // Predicated region
    $region66: #{transce_forward.1} parent=1 // pred_check
      _
    $region67: #{transce_forward.1} parent=1 // pred_check_branch
      %79 = sbr.rel (0) target = $region69
    $region68: #{transce_forward.1} parent=1 // pred_region
      %s81 = ssub.s32 64, 64
      %82 = vsyncadd [#allocation6], %s81
      %s83 = sshll.u32 [#allocation7], 4
      %s84 = int_to_ptr.vmem [resolvable:$true] %s83
      %89 = dma.hbm_to_vmem [thread:$0]  %s16, 64, %s84, [#allocation6], 16, 16, 1
    $region69: #{transce_forward.1} parent=1 // pred_fallthru
      _
    // Predicated region
    $region70: #{transce_forward.1} parent=1 // pred_check
      _
    $region71: #{transce_forward.1} parent=1 // pred_check_branch
      %91 = sbr.rel (0) target = $region73
    $region72: #{transce_forward.1} parent=1 // pred_region
      _
    $region73: #{transce_forward.1} parent=1 // pred_fallthru
      _
    // Predicated region
    $region74: #{transce_forward.1} parent=1 // pred_check
      _
    $region75: #{transce_forward.1} parent=1 // pred_check_branch
      %93 = sbr.rel (0) target = $region77
    $region76: #{transce_forward.1} parent=1 // pred_region
      %94 = dma.done [#allocation3], 64
    $region77: #{transce_forward.1} parent=1 // pred_fallthru
      _
    // Predicated region
    $region78: #{transce_forward.1} parent=1 // pred_check
      _
    $region79: #{transce_forward.1} parent=1 // pred_check_branch
      %96 = sbr.rel (0) target = $region81
    $region80: #{transce_forward.1} parent=1 // pred_region
      %97 = dma.done [#allocation6], 64
    $region81: #{transce_forward.1} parent=1 // pred_fallthru
      _
    // Predicated region
    $region82: #{transce_forward.1} parent=1 // pred_check
      _
    $region83: #{transce_forward.1} parent=1 // pred_check_branch
      %99 = sbr.rel (0) target = $region85
    $region84: #{transce_forward.1} parent=1 // pred_region
      %100 = dma.done [#allocation6], 64
    $region85: #{transce_forward.1} parent=1 // pred_fallthru
      _
    %v101 = vld [vmem:[%s17] sm:$0xff]
    %v102 = vld [vmem:[%s17 + $0x8] sm:$0xff]
    %v103 = vld [vmem:[%s17 + $0x10] sm:$0xff]
    %v104 = vld [vmem:[%s17 + $0x18] sm:$0xff]
    %v105 = vld [vmem:[%s17 + $0x20] sm:$0xff]
    %v106 = vld [vmem:[%s17 + $0x28] sm:$0xff]
    %v107 = vld [vmem:[%s17 + $0x30] sm:$0xff]
    %v108 = vld [vmem:[%s17 + $0x38] sm:$0xff]
    %v109 = vld [vmem:[%s0] sm:$0xff]
    %v110 = vld [vmem:[%s0 + $0x8] sm:$0xff]
    %v111 = vld [vmem:[%s1] sm:$0xff]
    %v112 = vld [vmem:[%s1 + $0x8] sm:$0xff]
    %v113 = vld [vmem:[%s1 + $0x10] sm:$0xff]
    %v114 = vld [vmem:[%s1 + $0x18] sm:$0xff]
    %v115 = vld [vmem:[%s1 + $0x20] sm:$0xff]
    %v116 = vld [vmem:[%s1 + $0x28] sm:$0xff]
    %v117 = vld [vmem:[%s1 + $0x30] sm:$0xff]
    %v118 = vld [vmem:[%s1 + $0x38] sm:$0xff]
    %v119 = vld [vmem:[%s2] sm:$0x1]
    %v121 = vlaneseq
    %v122 = vshrl.u32 %v121, 7
    %v123 = vsub.s32 0, %v122
    %v124 = vrot.slane %v119, %v123
    %vm126 = vcmask 523264
    %v128 = vsel %vm126, %v109, 0
    %v131 = vsel %vm126, %v110, 0
    %133 = vmatprep.subr.mxu0 0.0
    %134 = vmatpush1.msra.mxu0 %v111
    %135 = vmatprep.subr.mxu0 0.0
    %136 = vmatpush1.msra.mxu0 %v112
    %137 = vmatprep.subr.mxu0 0.0
    %138 = vmatpush1.msra.mxu0 %v113
    %139 = vmatprep.subr.mxu0 0.0
    %140 = vmatpush1.msra.mxu0 %v114
    %141 = vmatprep.subr.mxu0 0.0
    %142 = vmatpush1.msra.mxu0 %v115
    %143 = vmatprep.subr.mxu0 0.0
    %144 = vmatpush1.msra.mxu0 %v116
    %145 = vmatprep.subr.mxu0 0.0
    %146 = vmatpush1.msra.mxu0 %v117
    %147 = vmatprep.subr.mxu0 0.0
    %148 = vmatpush1.msra.mxu0 %v118
    %149 = vmatprep.subr.mxu0 0.0
    %150 = vmatpush1.msra.mxu0 0.0
    %151 = vmatprep.subr.mxu0 0.0
    %152 = vmatpush1.msra.mxu0 0.0
    %153 = vmatprep.subr.mxu0 0.0
    %154 = vmatpush1.msra.mxu0 0.0
    %155 = vmatprep.subr.mxu0 0.0
    %156 = vmatpush1.msra.mxu0 0.0
    %157 = vmatprep.subr.mxu0 0.0
    %158 = vmatpush1.msra.mxu0 0.0
    %159 = vmatprep.subr.mxu0 0.0
    %160 = vmatpush1.msra.mxu0 0.0
    %161 = vmatprep.subr.mxu0 0.0
    %162 = vmatpush1.msra.mxu0 0.0
    %163 = vmatprep.subr.mxu0 0.0
    %164 = vmatpush1.msra.mxu0 0.0
    %165 = vmatprep.subr.mxu0 0.0
    %166 = vmatpush1.msra.mxu0 0.0
    %167 = vmatprep.subr.mxu0 0.0
    %168 = vmatpush1.msra.mxu0 0.0
    %169 = vmatprep.subr.mxu0 0.0
    %170 = vmatpush1.msra.mxu0 0.0
    %171 = vmatprep.subr.mxu0 0.0
    %172 = vmatpush1.msra.mxu0 0.0
    %173 = vmatprep.subr.mxu0 0.0
    %174 = vmatpush1.msra.mxu0 0.0
    %175 = vmatprep.subr.mxu0 0.0
    %176 = vmatpush1.msra.mxu0 0.0
    %177 = vmatprep.subr.mxu0 0.0
    %178 = vmatpush1.msra.mxu0 0.0
    %179 = vmatprep.subr.mxu0 0.0
    %180 = vmatpush1.msra.mxu0 0.0
    %181 = vmatprep.subr.mxu0 0.0
    %182 = vmatpush1.msra.mxu0 0.0
    %183 = vmatprep.subr.mxu0 0.0
    %184 = vmatpush1.msra.mxu0 0.0
    %185 = vmatprep.subr.mxu0 0.0
    %186 = vmatpush1.msra.mxu0 0.0
    %187 = vmatprep.subr.mxu0 0.0
    %188 = vmatpush1.msra.mxu0 0.0
    %189 = vmatprep.subr.mxu0 0.0
    %190 = vmatpush1.msra.mxu0 0.0
    %191 = vmatprep.subr.mxu0 0.0
    %192 = vmatpush1.msra.mxu0 0.0
    %193 = vmatprep.subr.mxu0 0.0
    %194 = vmatpush1.msra.mxu0 0.0
    %195 = vmatprep.subr.mxu0 0.0
    %196 = vmatpush1.msra.mxu0 0.0
    %197 = vmatprep.mubr.f32.mxu0 0.0
    %198 = vmatmul.mubr.f32.gmra.mrb[0].mxu0 %v128
    %v199 = vpop.f32.mrb[0].mxu0
    %v200 = vadd.f32 %v124, %v199
    %v201 = vpop.f32.mrb[0].mxu0
    %202 = vmatprep.mubr.f32.mxu0 0.0
    %203 = vmatmul.mubr.f32.gmra.mrb[0].mxu0 %v131
    %v204 = vpop.f32.mrb[0].mxu0
    %v205 = vadd.f32 %v124, %v204
    %v206 = vpop.f32.mrb[0].mxu0
    %207 = vdwg.mxu0
    %v208 = vld [vmem:[%s3] sm:$0x1]
    %v209 = vld [vmem:[%s4] sm:$0x1]
    %v210 = vsel %vm126, %v200, 0.0
    %211 = vadd.xlane.f32.xlu0 %v210
    %v212 = vpop.xlane.xlu0 %211
    %v213 = vsel %vm126, %v205, 0.0
    %214 = vadd.xlane.f32.xlu0 %v213
    %v215 = vpop.xlane.xlu0 %214
    %v216 = vrcp.pop 64.0
    %v217 = vmul.f32 %v212, %v216
    %v218 = vmul.f32 %v215, %v216
    %v219 = vsub.f32 %v200, %v217
    %v220 = vsub.f32 %v205, %v218
    %v221 = vmul.f32 %v219, %v219
    %v222 = vmul.f32 %v220, %v220
    %v223 = vsel %vm126, %v221, 0.0
    %224 = vadd.xlane.f32.xlu0 %v223
    %v225 = vpop.xlane.xlu0 %224
    %v226 = vsel %vm126, %v222, 0.0
    %227 = vadd.xlane.f32.xlu0 %v226
    %v228 = vpop.xlane.xlu0 %227
    %v229 = vmul.f32 %v225, %v216
    %v230 = vmul.f32 %v228, %v216
    %v231 = vadd.f32 %v229, 1e-05
    %v232 = vadd.f32 %v230, 1e-05
    %v233 = vrsqrt.pop %v231
    %v234 = vrsqrt.pop %v232
    %v235 = vmul.f32 %v219, %v233
    %v236 = vmul.f32 %v220, %v234
    %v238 = vlaneseq
    %v239 = vshrl.u32 %v238, 7
    %v240 = vsub.s32 0, %v239
    %v241 = vrot.slane %v208, %v240
    %v243 = vmul.f32 %v235, %v241
    %v244 = vmul.f32 %v236, %v241
    %v246 = vlaneseq
    %v247 = vshrl.u32 %v246, 7
    %v248 = vsub.s32 0, %v247
    %v249 = vrot.slane %v209, %v248
    %v251 = vadd.f32 %v243, %v249
    %v252 = vadd.f32 %v244, %v249
    %v253 = vld [vmem:[%s5] sm:$0xff]
    %v254 = vld [vmem:[%s5 + $0x8] sm:$0xff]
    %v255 = vld [vmem:[%s5 + $0x10] sm:$0xff]
    %v256 = vld [vmem:[%s5 + $0x18] sm:$0xff]
    %v257 = vld [vmem:[%s5 + $0x20] sm:$0xff]
    %v258 = vld [vmem:[%s5 + $0x28] sm:$0xff]
    %v259 = vld [vmem:[%s5 + $0x30] sm:$0xff]
    %v260 = vld [vmem:[%s5 + $0x38] sm:$0xff]
    %v261 = vld [vmem:[%s6] sm:$0x1]
    %v263 = vlaneseq
    %v264 = vshrl.u32 %v263, 7
    %v265 = vsub.s32 0, %v264
    %v266 = vrot.slane %v261, %v265
    %v269 = vsel %vm126, %v251, 0
    %v272 = vsel %vm126, %v252, 0
    %274 = vmatprep.subr.mxu0 0.0
    %275 = vmatpush1.msra.mxu0 %v253
    %276 = vmatprep.subr.mxu0 0.0
    %277 = vmatpush1.msra.mxu0 %v254
    %278 = vmatprep.subr.mxu0 0.0
    %279 = vmatpush1.msra.mxu0 %v255
    %280 = vmatprep.subr.mxu0 0.0
    %281 = vmatpush1.msra.mxu0 %v256
    %282 = vmatprep.subr.mxu0 0.0
    %283 = vmatpush1.msra.mxu0 %v257
    %284 = vmatprep.subr.mxu0 0.0
    %285 = vmatpush1.msra.mxu0 %v258
    %286 = vmatprep.subr.mxu0 0.0
    %287 = vmatpush1.msra.mxu0 %v259
    %288 = vmatprep.subr.mxu0 0.0
    %289 = vmatpush1.msra.mxu0 %v260
    %290 = vmatprep.subr.mxu0 0.0
    %291 = vmatpush1.msra.mxu0 0.0
    %292 = vmatprep.subr.mxu0 0.0
    %293 = vmatpush1.msra.mxu0 0.0
    %294 = vmatprep.subr.mxu0 0.0
    %295 = vmatpush1.msra.mxu0 0.0
    %296 = vmatprep.subr.mxu0 0.0
    %297 = vmatpush1.msra.mxu0 0.0
    %298 = vmatprep.subr.mxu0 0.0
    %299 = vmatpush1.msra.mxu0 0.0
    %300 = vmatprep.subr.mxu0 0.0
    %301 = vmatpush1.msra.mxu0 0.0
    %302 = vmatprep.subr.mxu0 0.0
    %303 = vmatpush1.msra.mxu0 0.0
    %304 = vmatprep.subr.mxu0 0.0
    %305 = vmatpush1.msra.mxu0 0.0
    %306 = vmatprep.subr.mxu0 0.0
    %307 = vmatpush1.msra.mxu0 0.0
    %308 = vmatprep.subr.mxu0 0.0
    %309 = vmatpush1.msra.mxu0 0.0
    %310 = vmatprep.subr.mxu0 0.0
    %311 = vmatpush1.msra.mxu0 0.0
    %312 = vmatprep.subr.mxu0 0.0
    %313 = vmatpush1.msra.mxu0 0.0
    %314 = vmatprep.subr.mxu0 0.0
    %315 = vmatpush1.msra.mxu0 0.0
    %316 = vmatprep.subr.mxu0 0.0
    %317 = vmatpush1.msra.mxu0 0.0
    %318 = vmatprep.subr.mxu0 0.0
    %319 = vmatpush1.msra.mxu0 0.0
    %320 = vmatprep.subr.mxu0 0.0
    %321 = vmatpush1.msra.mxu0 0.0
    %322 = vmatprep.subr.mxu0 0.0
    %323 = vmatpush1.msra.mxu0 0.0
    %324 = vmatprep.subr.mxu0 0.0
    %325 = vmatpush1.msra.mxu0 0.0
    %326 = vmatprep.subr.mxu0 0.0
    %327 = vmatpush1.msra.mxu0 0.0
    %328 = vmatprep.subr.mxu0 0.0
    %329 = vmatpush1.msra.mxu0 0.0
    %330 = vmatprep.subr.mxu0 0.0
    %331 = vmatpush1.msra.mxu0 0.0
    %332 = vmatprep.subr.mxu0 0.0
    %333 = vmatpush1.msra.mxu0 0.0
    %334 = vmatprep.subr.mxu0 0.0
    %335 = vmatpush1.msra.mxu0 0.0
    %336 = vmatprep.subr.mxu0 0.0
    %337 = vmatpush1.msra.mxu0 0.0
    %338 = vmatprep.mubr.f32.mxu0 0.0
    %339 = vmatmul.mubr.f32.gmra.mrb[0].mxu0 %v269
    %v340 = vpop.f32.mrb[0].mxu0
    %v341 = vadd.f32 %v266, %v340
    %v342 = vpop.f32.mrb[0].mxu0
    %343 = vmatprep.mubr.f32.mxu0 0.0
    %344 = vmatmul.mubr.f32.gmra.mrb[0].mxu0 %v272
    %v345 = vpop.f32.mrb[0].mxu0
    %v346 = vadd.f32 %v266, %v345
    %v347 = vpop.f32.mrb[0].mxu0
    %348 = vdwg.mxu0
    %v349 = vmul.f32 %v341, 0.25
    %v350 = vmul.f32 %v346, 0.25
    %v351 = vld [vmem:[%s7] sm:$0xff]
    %v352 = vld [vmem:[%s7 + $0x8] sm:$0xff]
    %v353 = vld [vmem:[%s7 + $0x10] sm:$0xff]
    %v354 = vld [vmem:[%s7 + $0x18] sm:$0xff]
    %v355 = vld [vmem:[%s7 + $0x20] sm:$0xff]
    %v356 = vld [vmem:[%s7 + $0x28] sm:$0xff]
    %v357 = vld [vmem:[%s7 + $0x30] sm:$0xff]
    %v358 = vld [vmem:[%s7 + $0x38] sm:$0xff]
    %v359 = vld [vmem:[#allocation2] sm:$0x1]
    %v361 = vlaneseq
    %v362 = vshrl.u32 %v361, 7
    %v363 = vsub.s32 0, %v362
    %v364 = vrot.slane %v359, %v363
    %366 = vmatprep.subr.mxu0 0.0
    %367 = vmatpush1.msra.mxu0 %v351
    %368 = vmatprep.subr.mxu0 0.0
    %369 = vmatpush1.msra.mxu0 %v352
    %370 = vmatprep.subr.mxu0 0.0
    %371 = vmatpush1.msra.mxu0 %v353
    %372 = vmatprep.subr.mxu0 0.0
    %373 = vmatpush1.msra.mxu0 %v354
    %374 = vmatprep.subr.mxu0 0.0
    %375 = vmatpush1.msra.mxu0 %v355
    %376 = vmatprep.subr.mxu0 0.0
    %377 = vmatpush1.msra.mxu0 %v356
    %378 = vmatprep.subr.mxu0 0.0
    %379 = vmatpush1.msra.mxu0 %v357
    %380 = vmatprep.subr.mxu0 0.0
    %381 = vmatpush1.msra.mxu0 %v358
    %382 = vmatprep.subr.mxu0 0.0
    %383 = vmatpush1.msra.mxu0 0.0
    %384 = vmatprep.subr.mxu0 0.0
    %385 = vmatpush1.msra.mxu0 0.0
    %386 = vmatprep.subr.mxu0 0.0
    %387 = vmatpush1.msra.mxu0 0.0
    %388 = vmatprep.subr.mxu0 0.0
    %389 = vmatpush1.msra.mxu0 0.0
    %390 = vmatprep.subr.mxu0 0.0
    %391 = vmatpush1.msra.mxu0 0.0
    %392 = vmatprep.subr.mxu0 0.0
    %393 = vmatpush1.msra.mxu0 0.0
    %394 = vmatprep.subr.mxu0 0.0
    %395 = vmatpush1.msra.mxu0 0.0
    %396 = vmatprep.subr.mxu0 0.0
    %397 = vmatpush1.msra.mxu0 0.0
    %398 = vmatprep.subr.mxu0 0.0
    %399 = vmatpush1.msra.mxu0 0.0
    %400 = vmatprep.subr.mxu0 0.0
    %401 = vmatpush1.msra.mxu0 0.0
    %402 = vmatprep.subr.mxu0 0.0
    %403 = vmatpush1.msra.mxu0 0.0
    %404 = vmatprep.subr.mxu0 0.0
    %405 = vmatpush1.msra.mxu0 0.0
    %406 = vmatprep.subr.mxu0 0.0
    %407 = vmatpush1.msra.mxu0 0.0
    %408 = vmatprep.subr.mxu0 0.0
    %409 = vmatpush1.msra.mxu0 0.0
    %410 = vmatprep.subr.mxu0 0.0
    %411 = vmatpush1.msra.mxu0 0.0
    %412 = vmatprep.subr.mxu0 0.0
    %413 = vmatpush1.msra.mxu0 0.0
    %414 = vmatprep.subr.mxu0 0.0
    %415 = vmatpush1.msra.mxu0 0.0
    %416 = vmatprep.subr.mxu0 0.0
    %417 = vmatpush1.msra.mxu0 0.0
    %418 = vmatprep.subr.mxu0 0.0
    %419 = vmatpush1.msra.mxu0 0.0
    %420 = vmatprep.subr.mxu0 0.0
    %421 = vmatpush1.msra.mxu0 0.0
    %422 = vmatprep.subr.mxu0 0.0
    %423 = vmatpush1.msra.mxu0 0.0
    %424 = vmatprep.subr.mxu0 0.0
    %425 = vmatpush1.msra.mxu0 0.0
    %426 = vmatprep.subr.mxu0 0.0
    %427 = vmatpush1.msra.mxu0 0.0
    %428 = vmatprep.subr.mxu0 0.0
    %429 = vmatpush1.msra.mxu0 0.0
    %430 = vmatprep.mubr.f32.mxu0 0.0
    %431 = vmatmul.mubr.f32.gmra.mrb[0].mxu0 %v269
    %v432 = vpop.f32.mrb[0].mxu0
    %v433 = vadd.f32 %v364, %v432
    %v434 = vpop.f32.mrb[0].mxu0
    %435 = vmatprep.mubr.f32.mxu0 0.0
    %436 = vmatmul.mubr.f32.gmra.mrb[0].mxu0 %v272
    %v437 = vpop.f32.mrb[0].mxu0
    %v438 = vadd.f32 %v364, %v437
    %v439 = vpop.f32.mrb[0].mxu0
    %440 = vdwg.mxu0
    %v441 = vld [vmem:[%s9] sm:$0xff]
    %v442 = vld [vmem:[%s9 + $0x8] sm:$0xff]
    %v443 = vld [vmem:[%s9 + $0x10] sm:$0xff]
    %v444 = vld [vmem:[%s9 + $0x18] sm:$0xff]
    %v445 = vld [vmem:[%s9 + $0x20] sm:$0xff]
    %v446 = vld [vmem:[%s9 + $0x28] sm:$0xff]
    %v447 = vld [vmem:[%s9 + $0x30] sm:$0xff]
    %v448 = vld [vmem:[%s9 + $0x38] sm:$0xff]
    %v449 = vld [vmem:[#allocation5] sm:$0x1]
    %v451 = vlaneseq
    %v452 = vshrl.u32 %v451, 7
    %v453 = vsub.s32 0, %v452
    %v454 = vrot.slane %v449, %v453
    %456 = vmatprep.subr.mxu0 0.0
    %457 = vmatpush1.msra.mxu0 %v441
    %458 = vmatprep.subr.mxu0 0.0
    %459 = vmatpush1.msra.mxu0 %v442
    %460 = vmatprep.subr.mxu0 0.0
    %461 = vmatpush1.msra.mxu0 %v443
    %462 = vmatprep.subr.mxu0 0.0
    %463 = vmatpush1.msra.mxu0 %v444
    %464 = vmatprep.subr.mxu0 0.0
    %465 = vmatpush1.msra.mxu0 %v445
    %466 = vmatprep.subr.mxu0 0.0
    %467 = vmatpush1.msra.mxu0 %v446
    %468 = vmatprep.subr.mxu0 0.0
    %469 = vmatpush1.msra.mxu0 %v447
    %470 = vmatprep.subr.mxu0 0.0
    %471 = vmatpush1.msra.mxu0 %v448
    %472 = vmatprep.subr.mxu0 0.0
    %473 = vmatpush1.msra.mxu0 0.0
    %474 = vmatprep.subr.mxu0 0.0
    %475 = vmatpush1.msra.mxu0 0.0
    %476 = vmatprep.subr.mxu0 0.0
    %477 = vmatpush1.msra.mxu0 0.0
    %478 = vmatprep.subr.mxu0 0.0
    %479 = vmatpush1.msra.mxu0 0.0
    %480 = vmatprep.subr.mxu0 0.0
    %481 = vmatpush1.msra.mxu0 0.0
    %482 = vmatprep.subr.mxu0 0.0
    %483 = vmatpush1.msra.mxu0 0.0
    %484 = vmatprep.subr.mxu0 0.0
    %485 = vmatpush1.msra.mxu0 0.0
    %486 = vmatprep.subr.mxu0 0.0
    %487 = vmatpush1.msra.mxu0 0.0
    %488 = vmatprep.subr.mxu0 0.0
    %489 = vmatpush1.msra.mxu0 0.0
    %490 = vmatprep.subr.mxu0 0.0
    %491 = vmatpush1.msra.mxu0 0.0
    %492 = vmatprep.subr.mxu0 0.0
    %493 = vmatpush1.msra.mxu0 0.0
    %494 = vmatprep.subr.mxu0 0.0
    %495 = vmatpush1.msra.mxu0 0.0
    %496 = vmatprep.subr.mxu0 0.0
    %497 = vmatpush1.msra.mxu0 0.0
    %498 = vmatprep.subr.mxu0 0.0
    %499 = vmatpush1.msra.mxu0 0.0
    %500 = vmatprep.subr.mxu0 0.0
    %501 = vmatpush1.msra.mxu0 0.0
    %502 = vmatprep.subr.mxu0 0.0
    %503 = vmatpush1.msra.mxu0 0.0
    %504 = vmatprep.subr.mxu0 0.0
    %505 = vmatpush1.msra.mxu0 0.0
    %506 = vmatprep.subr.mxu0 0.0
    %507 = vmatpush1.msra.mxu0 0.0
    %508 = vmatprep.subr.mxu0 0.0
    %509 = vmatpush1.msra.mxu0 0.0
    %510 = vmatprep.subr.mxu0 0.0
    %511 = vmatpush1.msra.mxu0 0.0
    %512 = vmatprep.subr.mxu0 0.0
    %513 = vmatpush1.msra.mxu0 0.0
    %514 = vmatprep.subr.mxu0 0.0
    %515 = vmatpush1.msra.mxu0 0.0
    %516 = vmatprep.subr.mxu0 0.0
    %517 = vmatpush1.msra.mxu0 0.0
    %518 = vmatprep.subr.mxu0 0.0
    %519 = vmatpush1.msra.mxu0 0.0
    %520 = vmatprep.mubr.f32.mxu0 0.0
    %521 = vmatmul.mubr.f32.gmra.mrb[0].mxu0 %v269
    %v522 = vpop.f32.mrb[0].mxu0
    %v523 = vadd.f32 %v454, %v522
    %v524 = vpop.f32.mrb[0].mxu0
    %525 = vmatprep.mubr.f32.mxu0 0.0
    %526 = vmatmul.mubr.f32.gmra.mrb[0].mxu0 %v272
    %v527 = vpop.f32.mrb[0].mxu0
    %v528 = vadd.f32 %v454, %v527
    %v529 = vpop.f32.mrb[0].mxu0
    %530 = vdwg.mxu0
    %v531 = vmul.f32 %v349, %v433
    %v533 = vsel %vm126, %v531, 0
    %535 = vmatprep.subr.mxu0 0.0
    %536 = vmatpush1.msra.mxu0 %v101
    %537 = vmatprep.subr.mxu0 0.0
    %538 = vmatpush1.msra.mxu0 %v102
    %539 = vmatprep.subr.mxu0 0.0
    %540 = vmatpush1.msra.mxu0 %v103
    %541 = vmatprep.subr.mxu0 0.0
    %542 = vmatpush1.msra.mxu0 %v104
    %543 = vmatprep.subr.mxu0 0.0
    %544 = vmatpush1.msra.mxu0 %v105
    %545 = vmatprep.subr.mxu0 0.0
    %546 = vmatpush1.msra.mxu0 %v106
    %547 = vmatprep.subr.mxu0 0.0
    %548 = vmatpush1.msra.mxu0 %v107
    %549 = vmatprep.subr.mxu0 0.0
    %550 = vmatpush1.msra.mxu0 %v108
    %551 = vmatprep.subr.mxu0 0.0
    %552 = vmatpush1.msra.mxu0 0.0
    %553 = vmatprep.subr.mxu0 0.0
    %554 = vmatpush1.msra.mxu0 0.0
    %555 = vmatprep.subr.mxu0 0.0
    %556 = vmatpush1.msra.mxu0 0.0
    %557 = vmatprep.subr.mxu0 0.0
    %558 = vmatpush1.msra.mxu0 0.0
    %559 = vmatprep.subr.mxu0 0.0
    %560 = vmatpush1.msra.mxu0 0.0
    %561 = vmatprep.subr.mxu0 0.0
    %562 = vmatpush1.msra.mxu0 0.0
    %563 = vmatprep.subr.mxu0 0.0
    %564 = vmatpush1.msra.mxu0 0.0
    %565 = vmatprep.subr.mxu0 0.0
    %566 = vmatpush1.msra.mxu0 0.0
    %567 = vmatprep.subr.mxu0 0.0
    %568 = vmatpush1.msra.mxu0 0.0
    %569 = vmatprep.subr.mxu0 0.0
    %570 = vmatpush1.msra.mxu0 0.0
    %571 = vmatprep.subr.mxu0 0.0
    %572 = vmatpush1.msra.mxu0 0.0
    %573 = vmatprep.subr.mxu0 0.0
    %574 = vmatpush1.msra.mxu0 0.0
    %575 = vmatprep.subr.mxu0 0.0
    %576 = vmatpush1.msra.mxu0 0.0
    %577 = vmatprep.subr.mxu0 0.0
    %578 = vmatpush1.msra.mxu0 0.0
    %579 = vmatprep.subr.mxu0 0.0
    %580 = vmatpush1.msra.mxu0 0.0
    %581 = vmatprep.subr.mxu0 0.0
    %582 = vmatpush1.msra.mxu0 0.0
    %583 = vmatprep.subr.mxu0 0.0
    %584 = vmatpush1.msra.mxu0 0.0
    %585 = vmatprep.subr.mxu0 0.0
    %586 = vmatpush1.msra.mxu0 0.0
    %587 = vmatprep.subr.mxu0 0.0
    %588 = vmatpush1.msra.mxu0 0.0
    %589 = vmatprep.subr.mxu0 0.0
    %590 = vmatpush1.msra.mxu0 0.0
    %591 = vmatprep.subr.mxu0 0.0
    %592 = vmatpush1.msra.mxu0 0.0
    %593 = vmatprep.subr.mxu0 0.0
    %594 = vmatpush1.msra.mxu0 0.0
    %595 = vmatprep.subr.mxu0 0.0
    %596 = vmatpush1.msra.mxu0 0.0
    %597 = vmatprep.subr.mxu0 0.0
    %598 = vmatpush1.msra.mxu0 0.0
    %599 = vmatprep.mubr.f32.mxu0 0.0
    %600 = vmatmul.mubr.f32.gmra.mrb[0].mxu0 %v533
    %v601 = vpop.f32.mrb[0].mxu0
    %v602 = vadd.f32 0.0, %v601
    %v603 = vpop.f32.mrb[0].mxu0
    %604 = vdwg.mxu0
    %v605 = vmul.f32 %v349, %v438
    %v607 = vsel %vm126, %v605, 0
    %609 = vmatprep.subr.mxu0 0.0
    %610 = vmatpush1.msra.mxu0 %v101
    %611 = vmatprep.subr.mxu0 0.0
    %612 = vmatpush1.msra.mxu0 %v102
    %613 = vmatprep.subr.mxu0 0.0
    %614 = vmatpush1.msra.mxu0 %v103
    %615 = vmatprep.subr.mxu0 0.0
    %616 = vmatpush1.msra.mxu0 %v104
    %617 = vmatprep.subr.mxu0 0.0
    %618 = vmatpush1.msra.mxu0 %v105
    %619 = vmatprep.subr.mxu0 0.0
    %620 = vmatpush1.msra.mxu0 %v106
    %621 = vmatprep.subr.mxu0 0.0
    %622 = vmatpush1.msra.mxu0 %v107
    %623 = vmatprep.subr.mxu0 0.0
    %624 = vmatpush1.msra.mxu0 %v108
    %625 = vmatprep.subr.mxu0 0.0
    %626 = vmatpush1.msra.mxu0 0.0
    %627 = vmatprep.subr.mxu0 0.0
    %628 = vmatpush1.msra.mxu0 0.0
    %629 = vmatprep.subr.mxu0 0.0
    %630 = vmatpush1.msra.mxu0 0.0
    %631 = vmatprep.subr.mxu0 0.0
    %632 = vmatpush1.msra.mxu0 0.0
    %633 = vmatprep.subr.mxu0 0.0
    %634 = vmatpush1.msra.mxu0 0.0
    %635 = vmatprep.subr.mxu0 0.0
    %636 = vmatpush1.msra.mxu0 0.0
    %637 = vmatprep.subr.mxu0 0.0
    %638 = vmatpush1.msra.mxu0 0.0
    %639 = vmatprep.subr.mxu0 0.0
    %640 = vmatpush1.msra.mxu0 0.0
    %641 = vmatprep.subr.mxu0 0.0
    %642 = vmatpush1.msra.mxu0 0.0
    %643 = vmatprep.subr.mxu0 0.0
    %644 = vmatpush1.msra.mxu0 0.0
    %645 = vmatprep.subr.mxu0 0.0
    %646 = vmatpush1.msra.mxu0 0.0
    %647 = vmatprep.subr.mxu0 0.0
    %648 = vmatpush1.msra.mxu0 0.0
    %649 = vmatprep.subr.mxu0 0.0
    %650 = vmatpush1.msra.mxu0 0.0
    %651 = vmatprep.subr.mxu0 0.0
    %652 = vmatpush1.msra.mxu0 0.0
    %653 = vmatprep.subr.mxu0 0.0
    %654 = vmatpush1.msra.mxu0 0.0
    %655 = vmatprep.subr.mxu0 0.0
    %656 = vmatpush1.msra.mxu0 0.0
    %657 = vmatprep.subr.mxu0 0.0
    %658 = vmatpush1.msra.mxu0 0.0
    %659 = vmatprep.subr.mxu0 0.0
    %660 = vmatpush1.msra.mxu0 0.0
    %661 = vmatprep.subr.mxu0 0.0
    %662 = vmatpush1.msra.mxu0 0.0
    %663 = vmatprep.subr.mxu0 0.0
    %664 = vmatpush1.msra.mxu0 0.0
    %665 = vmatprep.subr.mxu0 0.0
    %666 = vmatpush1.msra.mxu0 0.0
    %667 = vmatprep.subr.mxu0 0.0
    %668 = vmatpush1.msra.mxu0 0.0
    %669 = vmatprep.subr.mxu0 0.0
    %670 = vmatpush1.msra.mxu0 0.0
    %671 = vmatprep.subr.mxu0 0.0
    %672 = vmatpush1.msra.mxu0 0.0
    %673 = vmatprep.mubr.f32.mxu0 0.0
    %674 = vmatmul.mubr.f32.gmra.mrb[0].mxu0 %v607
    %v675 = vpop.f32.mrb[0].mxu0
    %v676 = vadd.f32 0.0, %v675
    %v677 = vpop.f32.mrb[0].mxu0
    %678 = vdwg.mxu0
    %v679 = vmax.f32 %v602, %v676
    %v680 = vsub.f32 %v602, %v679
    %v681 = vmul.f32 %v680, 1.442695
    %v682 = vpow.pop %v681
    %v683 = vsub.f32 %v676, %v679
    %v684 = vmul.f32 %v683, 1.442695
    %v685 = vpow.pop %v684
    %v686 = vadd.f32 %v682, %v685
    %v687 = vrcp.pop %v686
    %v688 = vmul.f32 %v682, %v687
    %v689 = vmul.f32 %v688, %v523
    %v690 = vmul.f32 %v685, %v687
    %v691 = vmul.f32 %v690, %v528
    %v692 = vadd.f32 %v689, %v691
    %v693 = vmul.f32 %v350, %v433
    %v695 = vsel %vm126, %v693, 0
    %697 = vmatprep.subr.mxu0 0.0
    %698 = vmatpush1.msra.mxu0 %v101
    %699 = vmatprep.subr.mxu0 0.0
    %700 = vmatpush1.msra.mxu0 %v102
    %701 = vmatprep.subr.mxu0 0.0
    %702 = vmatpush1.msra.mxu0 %v103
    %703 = vmatprep.subr.mxu0 0.0
    %704 = vmatpush1.msra.mxu0 %v104
    %705 = vmatprep.subr.mxu0 0.0
    %706 = vmatpush1.msra.mxu0 %v105
    %707 = vmatprep.subr.mxu0 0.0
    %708 = vmatpush1.msra.mxu0 %v106
    %709 = vmatprep.subr.mxu0 0.0
    %710 = vmatpush1.msra.mxu0 %v107
    %711 = vmatprep.subr.mxu0 0.0
    %712 = vmatpush1.msra.mxu0 %v108
    %713 = vmatprep.subr.mxu0 0.0
    %714 = vmatpush1.msra.mxu0 0.0
    %715 = vmatprep.subr.mxu0 0.0
    %716 = vmatpush1.msra.mxu0 0.0
    %717 = vmatprep.subr.mxu0 0.0
    %718 = vmatpush1.msra.mxu0 0.0
    %719 = vmatprep.subr.mxu0 0.0
    %720 = vmatpush1.msra.mxu0 0.0
    %721 = vmatprep.subr.mxu0 0.0
    %722 = vmatpush1.msra.mxu0 0.0
    %723 = vmatprep.subr.mxu0 0.0
    %724 = vmatpush1.msra.mxu0 0.0
    %725 = vmatprep.subr.mxu0 0.0
    %726 = vmatpush1.msra.mxu0 0.0
    %727 = vmatprep.subr.mxu0 0.0
    %728 = vmatpush1.msra.mxu0 0.0
    %729 = vmatprep.subr.mxu0 0.0
    %730 = vmatpush1.msra.mxu0 0.0
    %731 = vmatprep.subr.mxu0 0.0
    %732 = vmatpush1.msra.mxu0 0.0
    %733 = vmatprep.subr.mxu0 0.0
    %734 = vmatpush1.msra.mxu0 0.0
    %735 = vmatprep.subr.mxu0 0.0
    %736 = vmatpush1.msra.mxu0 0.0
    %737 = vmatprep.subr.mxu0 0.0
    %738 = vmatpush1.msra.mxu0 0.0
    %739 = vmatprep.subr.mxu0 0.0
    %740 = vmatpush1.msra.mxu0 0.0
    %741 = vmatprep.subr.mxu0 0.0
    %742 = vmatpush1.msra.mxu0 0.0
    %743 = vmatprep.subr.mxu0 0.0
    %744 = vmatpush1.msra.mxu0 0.0
    %745 = vmatprep.subr.mxu0 0.0
    %746 = vmatpush1.msra.mxu0 0.0
    %747 = vmatprep.subr.mxu0 0.0
    %748 = vmatpush1.msra.mxu0 0.0
    %749 = vmatprep.subr.mxu0 0.0
    %750 = vmatpush1.msra.mxu0 0.0
    %751 = vmatprep.subr.mxu0 0.0
    %752 = vmatpush1.msra.mxu0 0.0
    %753 = vmatprep.subr.mxu0 0.0
    %754 = vmatpush1.msra.mxu0 0.0
    %755 = vmatprep.subr.mxu0 0.0
    %756 = vmatpush1.msra.mxu0 0.0
    %757 = vmatprep.subr.mxu0 0.0
    %758 = vmatpush1.msra.mxu0 0.0
    %759 = vmatprep.subr.mxu0 0.0
    %760 = vmatpush1.msra.mxu0 0.0
    %761 = vmatprep.mubr.f32.mxu0 0.0
    %762 = vmatmul.mubr.f32.gmra.mrb[0].mxu0 %v695
    %v763 = vpop.f32.mrb[0].mxu0
    %v764 = vadd.f32 0.0, %v763
    %v765 = vpop.f32.mrb[0].mxu0
    %766 = vdwg.mxu0
    %v767 = vmul.f32 %v350, %v438
    %v769 = vsel %vm126, %v767, 0
    %771 = vmatprep.subr.mxu0 0.0
    %772 = vmatpush1.msra.mxu0 %v101
    %773 = vmatprep.subr.mxu0 0.0
    %774 = vmatpush1.msra.mxu0 %v102
    %775 = vmatprep.subr.mxu0 0.0
    %776 = vmatpush1.msra.mxu0 %v103
    %777 = vmatprep.subr.mxu0 0.0
    %778 = vmatpush1.msra.mxu0 %v104
    %779 = vmatprep.subr.mxu0 0.0
    %780 = vmatpush1.msra.mxu0 %v105
    %781 = vmatprep.subr.mxu0 0.0
    %782 = vmatpush1.msra.mxu0 %v106
    %783 = vmatprep.subr.mxu0 0.0
    %784 = vmatpush1.msra.mxu0 %v107
    %785 = vmatprep.subr.mxu0 0.0
    %786 = vmatpush1.msra.mxu0 %v108
    %787 = vmatprep.subr.mxu0 0.0
    %788 = vmatpush1.msra.mxu0 0.0
    %789 = vmatprep.subr.mxu0 0.0
    %790 = vmatpush1.msra.mxu0 0.0
    %791 = vmatprep.subr.mxu0 0.0
    %792 = vmatpush1.msra.mxu0 0.0
    %793 = vmatprep.subr.mxu0 0.0
    %794 = vmatpush1.msra.mxu0 0.0
    %795 = vmatprep.subr.mxu0 0.0
    %796 = vmatpush1.msra.mxu0 0.0
    %797 = vmatprep.subr.mxu0 0.0
    %798 = vmatpush1.msra.mxu0 0.0
    %799 = vmatprep.subr.mxu0 0.0
    %800 = vmatpush1.msra.mxu0 0.0
    %801 = vmatprep.subr.mxu0 0.0
    %802 = vmatpush1.msra.mxu0 0.0
    %803 = vmatprep.subr.mxu0 0.0
    %804 = vmatpush1.msra.mxu0 0.0
    %805 = vmatprep.subr.mxu0 0.0
    %806 = vmatpush1.msra.mxu0 0.0
    %807 = vmatprep.subr.mxu0 0.0
    %808 = vmatpush1.msra.mxu0 0.0
    %809 = vmatprep.subr.mxu0 0.0
    %810 = vmatpush1.msra.mxu0 0.0
    %811 = vmatprep.subr.mxu0 0.0
    %812 = vmatpush1.msra.mxu0 0.0
    %813 = vmatprep.subr.mxu0 0.0
    %814 = vmatpush1.msra.mxu0 0.0
    %815 = vmatprep.subr.mxu0 0.0
    %816 = vmatpush1.msra.mxu0 0.0
    %817 = vmatprep.subr.mxu0 0.0
    %818 = vmatpush1.msra.mxu0 0.0
    %819 = vmatprep.subr.mxu0 0.0
    %820 = vmatpush1.msra.mxu0 0.0
    %821 = vmatprep.subr.mxu0 0.0
    %822 = vmatpush1.msra.mxu0 0.0
    %823 = vmatprep.subr.mxu0 0.0
    %824 = vmatpush1.msra.mxu0 0.0
    %825 = vmatprep.subr.mxu0 0.0
    %826 = vmatpush1.msra.mxu0 0.0
    %827 = vmatprep.subr.mxu0 0.0
    %828 = vmatpush1.msra.mxu0 0.0
    %829 = vmatprep.subr.mxu0 0.0
    %830 = vmatpush1.msra.mxu0 0.0
    %831 = vmatprep.subr.mxu0 0.0
    %832 = vmatpush1.msra.mxu0 0.0
    %833 = vmatprep.subr.mxu0 0.0
    %834 = vmatpush1.msra.mxu0 0.0
    %835 = vmatprep.mubr.f32.mxu0 0.0
    %836 = vmatmul.mubr.f32.gmra.mrb[0].mxu0 %v769
    %v837 = vpop.f32.mrb[0].mxu0
    %v838 = vadd.f32 0.0, %v837
    %v839 = vpop.f32.mrb[0].mxu0
    %840 = vdwg.mxu0
    %v841 = vmax.f32 %v764, %v838
    %v842 = vsub.f32 %v764, %v841
    %v843 = vmul.f32 %v842, 1.442695
    %v844 = vpow.pop %v843
    %v845 = vsub.f32 %v838, %v841
    %v846 = vmul.f32 %v845, 1.442695
    %v847 = vpow.pop %v846
    %v848 = vadd.f32 %v844, %v847
    %v849 = vrcp.pop %v848
    %v850 = vmul.f32 %v844, %v849
    %v851 = vmul.f32 %v850, %v523
    %v852 = vmul.f32 %v847, %v849
    %v853 = vmul.f32 %v852, %v528
    %v854 = vadd.f32 %v851, %v853
    %v855 = vld [vmem:[%s11] sm:$0xff]
    %v856 = vld [vmem:[%s11 + $0x8] sm:$0xff]
    %v857 = vld [vmem:[%s11 + $0x10] sm:$0xff]
    %v858 = vld [vmem:[%s11 + $0x18] sm:$0xff]
    %v859 = vld [vmem:[%s11 + $0x20] sm:$0xff]
    %v860 = vld [vmem:[%s11 + $0x28] sm:$0xff]
    %v861 = vld [vmem:[%s11 + $0x30] sm:$0xff]
    %v862 = vld [vmem:[%s11 + $0x38] sm:$0xff]
    %v863 = vld [vmem:[%s12] sm:$0x1]
    %v865 = vlaneseq
    %v866 = vshrl.u32 %v865, 7
    %v867 = vsub.s32 0, %v866
    %v868 = vrot.slane %v863, %v867
    %v871 = vsel %vm126, %v692, 0
    %v874 = vsel %vm126, %v854, 0
    %876 = vmatprep.subr.mxu0 0.0
    %877 = vmatpush1.msra.mxu0 %v855
    %878 = vmatprep.subr.mxu0 0.0
    %879 = vmatpush1.msra.mxu0 %v856
    %880 = vmatprep.subr.mxu0 0.0
    %881 = vmatpush1.msra.mxu0 %v857
    %882 = vmatprep.subr.mxu0 0.0
    %883 = vmatpush1.msra.mxu0 %v858
    %884 = vmatprep.subr.mxu0 0.0
    %885 = vmatpush1.msra.mxu0 %v859
    %886 = vmatprep.subr.mxu0 0.0
    %887 = vmatpush1.msra.mxu0 %v860
    %888 = vmatprep.subr.mxu0 0.0
    %889 = vmatpush1.msra.mxu0 %v861
    %890 = vmatprep.subr.mxu0 0.0
    %891 = vmatpush1.msra.mxu0 %v862
    %892 = vmatprep.subr.mxu0 0.0
    %893 = vmatpush1.msra.mxu0 0.0
    %894 = vmatprep.subr.mxu0 0.0
    %895 = vmatpush1.msra.mxu0 0.0
    %896 = vmatprep.subr.mxu0 0.0
    %897 = vmatpush1.msra.mxu0 0.0
    %898 = vmatprep.subr.mxu0 0.0
    %899 = vmatpush1.msra.mxu0 0.0
    %900 = vmatprep.subr.mxu0 0.0
    %901 = vmatpush1.msra.mxu0 0.0
    %902 = vmatprep.subr.mxu0 0.0
    %903 = vmatpush1.msra.mxu0 0.0
    %904 = vmatprep.subr.mxu0 0.0
    %905 = vmatpush1.msra.mxu0 0.0
    %906 = vmatprep.subr.mxu0 0.0
    %907 = vmatpush1.msra.mxu0 0.0
    %908 = vmatprep.subr.mxu0 0.0
    %909 = vmatpush1.msra.mxu0 0.0
    %910 = vmatprep.subr.mxu0 0.0
    %911 = vmatpush1.msra.mxu0 0.0
    %912 = vmatprep.subr.mxu0 0.0
    %913 = vmatpush1.msra.mxu0 0.0
    %914 = vmatprep.subr.mxu0 0.0
    %915 = vmatpush1.msra.mxu0 0.0
    %916 = vmatprep.subr.mxu0 0.0
    %917 = vmatpush1.msra.mxu0 0.0
    %918 = vmatprep.subr.mxu0 0.0
    %919 = vmatpush1.msra.mxu0 0.0
    %920 = vmatprep.subr.mxu0 0.0
    %921 = vmatpush1.msra.mxu0 0.0
    %922 = vmatprep.subr.mxu0 0.0
    %923 = vmatpush1.msra.mxu0 0.0
    %924 = vmatprep.subr.mxu0 0.0
    %925 = vmatpush1.msra.mxu0 0.0
    %926 = vmatprep.subr.mxu0 0.0
    %927 = vmatpush1.msra.mxu0 0.0
    %928 = vmatprep.subr.mxu0 0.0
    %929 = vmatpush1.msra.mxu0 0.0
    %930 = vmatprep.subr.mxu0 0.0
    %931 = vmatpush1.msra.mxu0 0.0
    %932 = vmatprep.subr.mxu0 0.0
    %933 = vmatpush1.msra.mxu0 0.0
    %934 = vmatprep.subr.mxu0 0.0
    %935 = vmatpush1.msra.mxu0 0.0
    %936 = vmatprep.subr.mxu0 0.0
    %937 = vmatpush1.msra.mxu0 0.0
    %938 = vmatprep.subr.mxu0 0.0
    %939 = vmatpush1.msra.mxu0 0.0
    %940 = vmatprep.mubr.f32.mxu0 0.0
    %941 = vmatmul.mubr.f32.gmra.mrb[0].mxu0 %v871
    %v942 = vpop.f32.mrb[0].mxu0
    %v943 = vadd.f32 %v868, %v942
    %v944 = vpop.f32.mrb[0].mxu0
    %945 = vmatprep.mubr.f32.mxu0 0.0
    %946 = vmatmul.mubr.f32.gmra.mrb[0].mxu0 %v874
    %v947 = vpop.f32.mrb[0].mxu0
    %v948 = vadd.f32 %v868, %v947
    %v949 = vpop.f32.mrb[0].mxu0
    %950 = vdwg.mxu0
    %v951 = vadd.f32 %v200, %v943
    %v952 = vadd.f32 %v205, %v948
    %v953 = vld [vmem:[%s13] sm:$0xff]
    %v954 = vld [vmem:[%s13 + $0x8] sm:$0xff]
    %v955 = vld [vmem:[%s13 + $0x10] sm:$0xff]
    %v956 = vld [vmem:[%s13 + $0x18] sm:$0xff]
    %v957 = vld [vmem:[%s13 + $0x20] sm:$0xff]
    %v958 = vld [vmem:[%s13 + $0x28] sm:$0xff]
    %v959 = vld [vmem:[%s13 + $0x30] sm:$0xff]
    %v960 = vld [vmem:[%s13 + $0x38] sm:$0xff]
    %v961 = vld [vmem:[%s13 + $0x40] sm:$0xff]
    %v962 = vld [vmem:[%s13 + $0x48] sm:$0xff]
    %v963 = vld [vmem:[%s13 + $0x50] sm:$0xff]
    %v964 = vld [vmem:[%s13 + $0x58] sm:$0xff]
    %v965 = vld [vmem:[%s13 + $0x60] sm:$0xff]
    %v966 = vld [vmem:[%s13 + $0x68] sm:$0xff]
    %v967 = vld [vmem:[%s13 + $0x70] sm:$0xff]
    %v968 = vld [vmem:[%s13 + $0x78] sm:$0xff]
    %v969 = vld [vmem:[%s14] sm:$0x3]
    %v971 = vlaneseq
    %v972 = vshrl.u32 %v971, 7
    %v973 = vsub.s32 0, %v972
    %v974 = vrot.slane %v969, %v973
    %v975 = vlaneseq
    %v976 = vshrl.u32 %v975, 7
    %v977 = vsub.s32 1, %v976
    %v978 = vrot.slane %v969, %v977
    %981 = vmatprep.subr.mxu0 %v954
    %982 = vmatpush1.msra.mxu0 %v953
    %983 = vmatprep.subr.mxu0 %v956
    %984 = vmatpush1.msra.mxu0 %v955
    %985 = vmatprep.subr.mxu0 %v958
    %986 = vmatpush1.msra.mxu0 %v957
    %987 = vmatprep.subr.mxu0 %v960
    %988 = vmatpush1.msra.mxu0 %v959
    %989 = vmatprep.subr.mxu0 %v962
    %990 = vmatpush1.msra.mxu0 %v961
    %991 = vmatprep.subr.mxu0 %v964
    %992 = vmatpush1.msra.mxu0 %v963
    %993 = vmatprep.subr.mxu0 %v966
    %994 = vmatpush1.msra.mxu0 %v965
    %995 = vmatprep.subr.mxu0 %v968
    %996 = vmatpush1.msra.mxu0 %v967
    %997 = vmatprep.subr.mxu0 0.0
    %998 = vmatpush1.msra.mxu0 0.0
    %999 = vmatprep.subr.mxu0 0.0
    %1000 = vmatpush1.msra.mxu0 0.0
    %1001 = vmatprep.subr.mxu0 0.0
    %1002 = vmatpush1.msra.mxu0 0.0
    %1003 = vmatprep.subr.mxu0 0.0
    %1004 = vmatpush1.msra.mxu0 0.0
    %1005 = vmatprep.subr.mxu0 0.0
    %1006 = vmatpush1.msra.mxu0 0.0
    %1007 = vmatprep.subr.mxu0 0.0
    %1008 = vmatpush1.msra.mxu0 0.0
    %1009 = vmatprep.subr.mxu0 0.0
    %1010 = vmatpush1.msra.mxu0 0.0
    %1011 = vmatprep.subr.mxu0 0.0
    %1012 = vmatpush1.msra.mxu0 0.0
    %1013 = vmatprep.subr.mxu0 0.0
    %1014 = vmatpush1.msra.mxu0 0.0
    %1015 = vmatprep.subr.mxu0 0.0
    %1016 = vmatpush1.msra.mxu0 0.0
    %1017 = vmatprep.subr.mxu0 0.0
    %1018 = vmatpush1.msra.mxu0 0.0
    %1019 = vmatprep.subr.mxu0 0.0
    %1020 = vmatpush1.msra.mxu0 0.0
    %1021 = vmatprep.subr.mxu0 0.0
    %1022 = vmatpush1.msra.mxu0 0.0
    %1023 = vmatprep.subr.mxu0 0.0
    %1024 = vmatpush1.msra.mxu0 0.0
    %1025 = vmatprep.subr.mxu0 0.0
    %1026 = vmatpush1.msra.mxu0 0.0
    %1027 = vmatprep.subr.mxu0 0.0
    %1028 = vmatpush1.msra.mxu0 0.0
    %1029 = vmatprep.subr.mxu0 0.0
    %1030 = vmatpush1.msra.mxu0 0.0
    %1031 = vmatprep.subr.mxu0 0.0
    %1032 = vmatpush1.msra.mxu0 0.0
    %1033 = vmatprep.subr.mxu0 0.0
    %1034 = vmatpush1.msra.mxu0 0.0
    %1035 = vmatprep.subr.mxu0 0.0
    %1036 = vmatpush1.msra.mxu0 0.0
    %1037 = vmatprep.subr.mxu0 0.0
    %1038 = vmatpush1.msra.mxu0 0.0
    %1039 = vmatprep.subr.mxu0 0.0
    %1040 = vmatpush1.msra.mxu0 0.0
    %1041 = vmatprep.subr.mxu0 0.0
    %1042 = vmatpush1.msra.mxu0 0.0
    %1043 = vmatprep.subr.mxu0 0.0
    %1044 = vmatpush1.msra.mxu0 0.0
    %1045 = vmatprep.mubr.f32.mxu0 0.0
    %1046 = vmatmul.mubr.f32.gmra.mrb[0].mxu0 %v269
    %v1047 = vpop.f32.mrb[0].mxu0
    %v1048 = vadd.f32 %v974, %v1047
    %v1049 = vpop.f32.mrb[0].mxu0
    %v1050 = vadd.f32 %v978, %v1049
    %1051 = vmatprep.mubr.f32.mxu0 0.0
    %1052 = vmatmul.mubr.f32.gmra.mrb[0].mxu0 %v272
    %v1053 = vpop.f32.mrb[0].mxu0
    %v1054 = vadd.f32 %v974, %v1053
    %v1055 = vpop.f32.mrb[0].mxu0
    %v1056 = vadd.f32 %v978, %v1055
    %1057 = vdwg.mxu0
    %v1058 = vmul.f32 %v1048, 0.5
    %v1059 = vmul.f32 %v1050, 0.5
    %v1060 = vmul.f32 %v1054, 0.5
    %v1061 = vmul.f32 %v1056, 0.5
    %v1062 = vmul.f32 %v1048, 0.70710677
    %v1063 = vmul.f32 %v1050, 0.70710677
    %v1064 = vmul.f32 %v1054, 0.70710677
    %v1065 = vmul.f32 %v1056, 0.70710677
    %v1066 = verf.f32.pop %v1062
    %v1067 = verf.f32.pop %v1063
    %v1068 = verf.f32.pop %v1064
    %v1069 = verf.f32.pop %v1065
    %v1070 = vadd.f32 %v1066, 1.0
    %v1071 = vadd.f32 %v1067, 1.0
    %v1072 = vadd.f32 %v1068, 1.0
    %v1073 = vadd.f32 %v1069, 1.0
    %v1074 = vmul.f32 %v1058, %v1070
    %v1075 = vmul.f32 %v1059, %v1071
    %v1076 = vmul.f32 %v1060, %v1072
    %v1077 = vmul.f32 %v1061, %v1073
    %v1078 = vld [vmem:[%s15] sm:$0xff]
    %v1079 = vld [vmem:[%s15 + $0x8] sm:$0xff]
    %v1080 = vld [vmem:[%s15 + $0x10] sm:$0xff]
    %v1081 = vld [vmem:[%s15 + $0x18] sm:$0xff]
    %v1082 = vld [vmem:[%s15 + $0x20] sm:$0xff]
    %v1083 = vld [vmem:[%s15 + $0x28] sm:$0xff]
    %v1084 = vld [vmem:[%s15 + $0x30] sm:$0xff]
    %v1085 = vld [vmem:[%s15 + $0x38] sm:$0xff]
    %v1086 = vld [vmem:[%s15 + $0x40] sm:$0xff]
    %v1087 = vld [vmem:[%s15 + $0x48] sm:$0xff]
    %v1088 = vld [vmem:[%s15 + $0x50] sm:$0xff]
    %v1089 = vld [vmem:[%s15 + $0x58] sm:$0xff]
    %v1090 = vld [vmem:[%s15 + $0x60] sm:$0xff]
    %v1091 = vld [vmem:[%s15 + $0x68] sm:$0xff]
    %v1092 = vld [vmem:[%s15 + $0x70] sm:$0xff]
    %v1093 = vld [vmem:[%s15 + $0x78] sm:$0xff]
    %v1094 = vld [vmem:[%s15 + $0x80] sm:$0xff]
    %v1095 = vld [vmem:[%s15 + $0x88] sm:$0xff]
    %v1096 = vld [vmem:[%s15 + $0x90] sm:$0xff]
    %v1097 = vld [vmem:[%s15 + $0x98] sm:$0xff]
    %v1098 = vld [vmem:[%s15 + $0xa0] sm:$0xff]
    %v1099 = vld [vmem:[%s15 + $0xa8] sm:$0xff]
    %v1100 = vld [vmem:[%s15 + $0xb0] sm:$0xff]
    %v1101 = vld [vmem:[%s15 + $0xb8] sm:$0xff]
    %v1102 = vld [vmem:[%s15 + $0xc0] sm:$0xff]
    %v1103 = vld [vmem:[%s15 + $0xc8] sm:$0xff]
    %v1104 = vld [vmem:[%s15 + $0xd0] sm:$0xff]
    %v1105 = vld [vmem:[%s15 + $0xd8] sm:$0xff]
    %v1106 = vld [vmem:[%s15 + $0xe0] sm:$0xff]
    %v1107 = vld [vmem:[%s15 + $0xe8] sm:$0xff]
    %v1108 = vld [vmem:[%s15 + $0xf0] sm:$0xff]
    %v1109 = vld [vmem:[%s15 + $0xf8] sm:$0xff]
    %v1110 = vld [vmem:[#allocation7] sm:$0x1]
    %v1112 = vlaneseq
    %v1113 = vshrl.u32 %v1112, 7
    %v1114 = vsub.s32 0, %v1113
    %v1115 = vrot.slane %v1110, %v1114
    %1117 = vmatprep.subr.mxu0 0.0
    %1118 = vmatpush1.msra.mxu0 %v1078
    %1119 = vmatprep.subr.mxu0 0.0
    %1120 = vmatpush1.msra.mxu0 %v1079
    %1121 = vmatprep.subr.mxu0 0.0
    %1122 = vmatpush1.msra.mxu0 %v1080
    %1123 = vmatprep.subr.mxu0 0.0
    %1124 = vmatpush1.msra.mxu0 %v1081
    %1125 = vmatprep.subr.mxu0 0.0
    %1126 = vmatpush1.msra.mxu0 %v1082
    %1127 = vmatprep.subr.mxu0 0.0
    %1128 = vmatpush1.msra.mxu0 %v1083
    %1129 = vmatprep.subr.mxu0 0.0
    %1130 = vmatpush1.msra.mxu0 %v1084
    %1131 = vmatprep.subr.mxu0 0.0
    %1132 = vmatpush1.msra.mxu0 %v1085
    %1133 = vmatprep.subr.mxu0 0.0
    %1134 = vmatpush1.msra.mxu0 %v1086
    %1135 = vmatprep.subr.mxu0 0.0
    %1136 = vmatpush1.msra.mxu0 %v1087
    %1137 = vmatprep.subr.mxu0 0.0
    %1138 = vmatpush1.msra.mxu0 %v1088
    %1139 = vmatprep.subr.mxu0 0.0
    %1140 = vmatpush1.msra.mxu0 %v1089
    %1141 = vmatprep.subr.mxu0 0.0
    %1142 = vmatpush1.msra.mxu0 %v1090
    %1143 = vmatprep.subr.mxu0 0.0
    %1144 = vmatpush1.msra.mxu0 %v1091
    %1145 = vmatprep.subr.mxu0 0.0
    %1146 = vmatpush1.msra.mxu0 %v1092
    %1147 = vmatprep.subr.mxu0 0.0
    %1148 = vmatpush1.msra.mxu0 %v1093
    %1149 = vmatprep.subr.mxu0 0.0
    %1150 = vmatpush1.msra.mxu0 %v1094
    %1151 = vmatprep.subr.mxu0 0.0
    %1152 = vmatpush1.msra.mxu0 %v1095
    %1153 = vmatprep.subr.mxu0 0.0
    %1154 = vmatpush1.msra.mxu0 %v1096
    %1155 = vmatprep.subr.mxu0 0.0
    %1156 = vmatpush1.msra.mxu0 %v1097
    %1157 = vmatprep.subr.mxu0 0.0
    %1158 = vmatpush1.msra.mxu0 %v1098
    %1159 = vmatprep.subr.mxu0 0.0
    %1160 = vmatpush1.msra.mxu0 %v1099
    %1161 = vmatprep.subr.mxu0 0.0
    %1162 = vmatpush1.msra.mxu0 %v1100
    %1163 = vmatprep.subr.mxu0 0.0
    %1164 = vmatpush1.msra.mxu0 %v1101
    %1165 = vmatprep.subr.mxu0 0.0
    %1166 = vmatpush1.msra.mxu0 %v1102
    %1167 = vmatprep.subr.mxu0 0.0
    %1168 = vmatpush1.msra.mxu0 %v1103
    %1169 = vmatprep.subr.mxu0 0.0
    %1170 = vmatpush1.msra.mxu0 %v1104
    %1171 = vmatprep.subr.mxu0 0.0
    %1172 = vmatpush1.msra.mxu0 %v1105
    %1173 = vmatprep.subr.mxu0 0.0
    %1174 = vmatpush1.msra.mxu0 %v1106
    %1175 = vmatprep.subr.mxu0 0.0
    %1176 = vmatpush1.msra.mxu0 %v1107
    %1177 = vmatprep.subr.mxu0 0.0
    %1178 = vmatpush1.msra.mxu0 %v1108
    %1179 = vmatprep.subr.mxu0 0.0
    %1180 = vmatpush1.msra.mxu0 %v1109
    %1181 = vmatprep.mubr.f32.mxu0 %v1075
    %1182 = vmatmul.mubr.f32.gmra.mrb[0].mxu0 %v1074
    %v1183 = vpop.f32.mrb[0].mxu0
    %v1184 = vadd.f32 %v1115, %v1183
    %v1185 = vpop.f32.mrb[0].mxu0
    %1186 = vmatprep.mubr.f32.mxu0 %v1077
    %1187 = vmatmul.mubr.f32.gmra.mrb[0].mxu0 %v1076
    %v1188 = vpop.f32.mrb[0].mxu0
    %v1189 = vadd.f32 %v1115, %v1188
    %v1190 = vpop.f32.mrb[0].mxu0
    %1191 = vdwg.mxu0
    %v1192 = vadd.f32 %v951, %v1184
    %v1193 = vadd.f32 %v952, %v1189
    %v1195 = vsel %vm126, %v1192, 0
    %v1198 = vsel %vm126, %v1193, 0
    %1200 = vmatprep.subr.mxu0 %v954
    %1201 = vmatpush1.msra.mxu0 %v953
    %1202 = vmatprep.subr.mxu0 %v956
    %1203 = vmatpush1.msra.mxu0 %v955
    %1204 = vmatprep.subr.mxu0 %v958
    %1205 = vmatpush1.msra.mxu0 %v957
    %1206 = vmatprep.subr.mxu0 %v960
    %1207 = vmatpush1.msra.mxu0 %v959
    %1208 = vmatprep.subr.mxu0 %v962
    %1209 = vmatpush1.msra.mxu0 %v961
    %1210 = vmatprep.subr.mxu0 %v964
    %1211 = vmatpush1.msra.mxu0 %v963
    %1212 = vmatprep.subr.mxu0 %v966
    %1213 = vmatpush1.msra.mxu0 %v965
    %1214 = vmatprep.subr.mxu0 %v968
    %1215 = vmatpush1.msra.mxu0 %v967
    %1216 = vmatprep.subr.mxu0 0.0
    %1217 = vmatpush1.msra.mxu0 0.0
    %1218 = vmatprep.subr.mxu0 0.0
    %1219 = vmatpush1.msra.mxu0 0.0
    %1220 = vmatprep.subr.mxu0 0.0
    %1221 = vmatpush1.msra.mxu0 0.0
    %1222 = vmatprep.subr.mxu0 0.0
    %1223 = vmatpush1.msra.mxu0 0.0
    %1224 = vmatprep.subr.mxu0 0.0
    %1225 = vmatpush1.msra.mxu0 0.0
    %1226 = vmatprep.subr.mxu0 0.0
    %1227 = vmatpush1.msra.mxu0 0.0
    %1228 = vmatprep.subr.mxu0 0.0
    %1229 = vmatpush1.msra.mxu0 0.0
    %1230 = vmatprep.subr.mxu0 0.0
    %1231 = vmatpush1.msra.mxu0 0.0
    %1232 = vmatprep.subr.mxu0 0.0
    %1233 = vmatpush1.msra.mxu0 0.0
    %1234 = vmatprep.subr.mxu0 0.0
    %1235 = vmatpush1.msra.mxu0 0.0
    %1236 = vmatprep.subr.mxu0 0.0
    %1237 = vmatpush1.msra.mxu0 0.0
    %1238 = vmatprep.subr.mxu0 0.0
    %1239 = vmatpush1.msra.mxu0 0.0
    %1240 = vmatprep.subr.mxu0 0.0
    %1241 = vmatpush1.msra.mxu0 0.0
    %1242 = vmatprep.subr.mxu0 0.0
    %1243 = vmatpush1.msra.mxu0 0.0
    %1244 = vmatprep.subr.mxu0 0.0
    %1245 = vmatpush1.msra.mxu0 0.0
    %1246 = vmatprep.subr.mxu0 0.0
    %1247 = vmatpush1.msra.mxu0 0.0
    %1248 = vmatprep.subr.mxu0 0.0
    %1249 = vmatpush1.msra.mxu0 0.0
    %1250 = vmatprep.subr.mxu0 0.0
    %1251 = vmatpush1.msra.mxu0 0.0
    %1252 = vmatprep.subr.mxu0 0.0
    %1253 = vmatpush1.msra.mxu0 0.0
    %1254 = vmatprep.subr.mxu0 0.0
    %1255 = vmatpush1.msra.mxu0 0.0
    %1256 = vmatprep.subr.mxu0 0.0
    %1257 = vmatpush1.msra.mxu0 0.0
    %1258 = vmatprep.subr.mxu0 0.0
    %1259 = vmatpush1.msra.mxu0 0.0
    %1260 = vmatprep.subr.mxu0 0.0
    %1261 = vmatpush1.msra.mxu0 0.0
    %1262 = vmatprep.subr.mxu0 0.0
    %1263 = vmatpush1.msra.mxu0 0.0
    %1264 = vmatprep.mubr.f32.mxu0 0.0
    %1265 = vmatmul.mubr.f32.gmra.mrb[0].mxu0 %v1195
    %v1266 = vpop.f32.mrb[0].mxu0
    %v1267 = vadd.f32 %v974, %v1266
    %v1268 = vpop.f32.mrb[0].mxu0
    %v1269 = vadd.f32 %v978, %v1268
    %1270 = vmatprep.mubr.f32.mxu0 0.0
    %1271 = vmatmul.mubr.f32.gmra.mrb[0].mxu0 %v1198
    %v1272 = vpop.f32.mrb[0].mxu0
    %v1273 = vadd.f32 %v974, %v1272
    %v1274 = vpop.f32.mrb[0].mxu0
    %v1275 = vadd.f32 %v978, %v1274
    %1276 = vdwg.mxu0
    %v1277 = vmul.f32 %v1267, 0.5
    %v1278 = vmul.f32 %v1269, 0.5
    %v1279 = vmul.f32 %v1273, 0.5
    %v1280 = vmul.f32 %v1275, 0.5
    %v1281 = vmul.f32 %v1267, 0.70710677
    %v1282 = vmul.f32 %v1269, 0.70710677
    %v1283 = vmul.f32 %v1273, 0.70710677
    %v1284 = vmul.f32 %v1275, 0.70710677
    %v1285 = verf.f32.pop %v1281
    %v1286 = verf.f32.pop %v1282
    %v1287 = verf.f32.pop %v1283
    %v1288 = verf.f32.pop %v1284
    %v1289 = vadd.f32 %v1285, 1.0
    %v1290 = vadd.f32 %v1286, 1.0
    %v1291 = vadd.f32 %v1287, 1.0
    %v1292 = vadd.f32 %v1288, 1.0
    %v1293 = vmul.f32 %v1277, %v1289
    %v1294 = vmul.f32 %v1278, %v1290
    %v1295 = vmul.f32 %v1279, %v1291
    %v1296 = vmul.f32 %v1280, %v1292
    %1297 = vmatprep.subr.mxu0 0.0
    %1298 = vmatpush1.msra.mxu0 %v1078
    %1299 = vmatprep.subr.mxu0 0.0
    %1300 = vmatpush1.msra.mxu0 %v1079
    %1301 = vmatprep.subr.mxu0 0.0
    %1302 = vmatpush1.msra.mxu0 %v1080
    %1303 = vmatprep.subr.mxu0 0.0
    %1304 = vmatpush1.msra.mxu0 %v1081
    %1305 = vmatprep.subr.mxu0 0.0
    %1306 = vmatpush1.msra.mxu0 %v1082
    %1307 = vmatprep.subr.mxu0 0.0
    %1308 = vmatpush1.msra.mxu0 %v1083
    %1309 = vmatprep.subr.mxu0 0.0
    %1310 = vmatpush1.msra.mxu0 %v1084
    %1311 = vmatprep.subr.mxu0 0.0
    %1312 = vmatpush1.msra.mxu0 %v1085
    %1313 = vmatprep.subr.mxu0 0.0
    %1314 = vmatpush1.msra.mxu0 %v1086
    %1315 = vmatprep.subr.mxu0 0.0
    %1316 = vmatpush1.msra.mxu0 %v1087
    %1317 = vmatprep.subr.mxu0 0.0
    %1318 = vmatpush1.msra.mxu0 %v1088
    %1319 = vmatprep.subr.mxu0 0.0
    %1320 = vmatpush1.msra.mxu0 %v1089
    %1321 = vmatprep.subr.mxu0 0.0
    %1322 = vmatpush1.msra.mxu0 %v1090
    %1323 = vmatprep.subr.mxu0 0.0
    %1324 = vmatpush1.msra.mxu0 %v1091
    %1325 = vmatprep.subr.mxu0 0.0
    %1326 = vmatpush1.msra.mxu0 %v1092
    %1327 = vmatprep.subr.mxu0 0.0
    %1328 = vmatpush1.msra.mxu0 %v1093
    %1329 = vmatprep.subr.mxu0 0.0
    %1330 = vmatpush1.msra.mxu0 %v1094
    %1331 = vmatprep.subr.mxu0 0.0
    %1332 = vmatpush1.msra.mxu0 %v1095
    %1333 = vmatprep.subr.mxu0 0.0
    %1334 = vmatpush1.msra.mxu0 %v1096
    %1335 = vmatprep.subr.mxu0 0.0
    %1336 = vmatpush1.msra.mxu0 %v1097
    %1337 = vmatprep.subr.mxu0 0.0
    %1338 = vmatpush1.msra.mxu0 %v1098
    %1339 = vmatprep.subr.mxu0 0.0
    %1340 = vmatpush1.msra.mxu0 %v1099
    %1341 = vmatprep.subr.mxu0 0.0
    %1342 = vmatpush1.msra.mxu0 %v1100
    %1343 = vmatprep.subr.mxu0 0.0
    %1344 = vmatpush1.msra.mxu0 %v1101
    %1345 = vmatprep.subr.mxu0 0.0
    %1346 = vmatpush1.msra.mxu0 %v1102
    %1347 = vmatprep.subr.mxu0 0.0
    %1348 = vmatpush1.msra.mxu0 %v1103
    %1349 = vmatprep.subr.mxu0 0.0
    %1350 = vmatpush1.msra.mxu0 %v1104
    %1351 = vmatprep.subr.mxu0 0.0
    %1352 = vmatpush1.msra.mxu0 %v1105
    %1353 = vmatprep.subr.mxu0 0.0
    %1354 = vmatpush1.msra.mxu0 %v1106
    %1355 = vmatprep.subr.mxu0 0.0
    %1356 = vmatpush1.msra.mxu0 %v1107
    %1357 = vmatprep.subr.mxu0 0.0
    %1358 = vmatpush1.msra.mxu0 %v1108
    %1359 = vmatprep.subr.mxu0 0.0
    %1360 = vmatpush1.msra.mxu0 %v1109
    %1361 = vmatprep.mubr.f32.mxu0 %v1294
    %1362 = vmatmul.mubr.f32.gmra.mrb[0].mxu0 %v1293
    %v1363 = vpop.f32.mrb[0].mxu0
    %v1364 = vadd.f32 %v1115, %v1363
    %v1365 = vpop.f32.mrb[0].mxu0
    %1366 = vmatprep.mubr.f32.mxu0 %v1296
    %1367 = vmatmul.mubr.f32.gmra.mrb[0].mxu0 %v1295
    %v1368 = vpop.f32.mrb[0].mxu0
    %v1369 = vadd.f32 %v1115, %v1368
    %v1370 = vpop.f32.mrb[0].mxu0
    %1371 = vdwg.mxu0
    %v1372 = vadd.f32 %v951, %v1364
    %v1373 = vadd.f32 %v952, %v1369
    %s1374 = scalar_lea.vmem %s3, 1
    %v1375 = vld [vmem:[%s1374] sm:$0x1]
    %s1376 = scalar_lea.vmem %s4, 1
    %v1377 = vld [vmem:[%s1376] sm:$0x1]
    %v1378 = vsel %vm126, %v1372, 0.0
    %1379 = vadd.xlane.f32.xlu0 %v1378
    %v1380 = vpop.xlane.xlu0 %1379
    %v1381 = vsel %vm126, %v1373, 0.0
    %1382 = vadd.xlane.f32.xlu0 %v1381
    %v1383 = vpop.xlane.xlu0 %1382
    %v1384 = vmul.f32 %v1380, %v216
    %v1385 = vmul.f32 %v1383, %v216
    %v1386 = vsub.f32 %v1372, %v1384
    %v1387 = vsub.f32 %v1373, %v1385
    %v1388 = vmul.f32 %v1386, %v1386
    %v1389 = vmul.f32 %v1387, %v1387
    %v1390 = vsel %vm126, %v1388, 0.0
    %1391 = vadd.xlane.f32.xlu0 %v1390
    %v1392 = vpop.xlane.xlu0 %1391
    %v1393 = vsel %vm126, %v1389, 0.0
    %1394 = vadd.xlane.f32.xlu0 %v1393
    %v1395 = vpop.xlane.xlu0 %1394
    %v1396 = vmul.f32 %v1392, %v216
    %v1397 = vmul.f32 %v1395, %v216
    %v1398 = vadd.f32 %v1396, 1e-05
    %v1399 = vadd.f32 %v1397, 1e-05
    %v1400 = vrsqrt.pop %v1398
    %v1401 = vrsqrt.pop %v1399
    %v1402 = vmul.f32 %v1386, %v1400
    %v1403 = vmul.f32 %v1387, %v1401
    %v1405 = vlaneseq
    %v1406 = vshrl.u32 %v1405, 7
    %v1407 = vsub.s32 0, %v1406
    %v1408 = vrot.slane %v1375, %v1407
    %v1410 = vmul.f32 %v1402, %v1408
    %v1411 = vmul.f32 %v1403, %v1408
    %v1413 = vlaneseq
    %v1414 = vshrl.u32 %v1413, 7
    %v1415 = vsub.s32 0, %v1414
    %v1416 = vrot.slane %v1377, %v1415
    %v1418 = vadd.f32 %v1410, %v1416
    %v1419 = vadd.f32 %v1411, %v1416
    %s1420 = scalar_lea.vmem %s5, 64
    %v1421 = vld [vmem:[%s1420] sm:$0xff]
    %v1422 = vld [vmem:[%s1420 + $0x8] sm:$0xff]
    %v1423 = vld [vmem:[%s1420 + $0x10] sm:$0xff]
    %v1424 = vld [vmem:[%s1420 + $0x18] sm:$0xff]
    %v1425 = vld [vmem:[%s1420 + $0x20] sm:$0xff]
    %v1426 = vld [vmem:[%s1420 + $0x28] sm:$0xff]
    %v1427 = vld [vmem:[%s1420 + $0x30] sm:$0xff]
    %v1428 = vld [vmem:[%s1420 + $0x38] sm:$0xff]
    %s1429 = scalar_lea.vmem %s6, 1
    %v1430 = vld [vmem:[%s1429] sm:$0x1]
    %v1432 = vlaneseq
    %v1433 = vshrl.u32 %v1432, 7
    %v1434 = vsub.s32 0, %v1433
    %v1435 = vrot.slane %v1430, %v1434
    %v1438 = vsel %vm126, %v1418, 0
    %v1441 = vsel %vm126, %v1419, 0
    %1443 = vmatprep.subr.mxu0 0.0
    %1444 = vmatpush1.msra.mxu0 %v1421
    %1445 = vmatprep.subr.mxu0 0.0
    %1446 = vmatpush1.msra.mxu0 %v1422
    %1447 = vmatprep.subr.mxu0 0.0
    %1448 = vmatpush1.msra.mxu0 %v1423
    %1449 = vmatprep.subr.mxu0 0.0
    %1450 = vmatpush1.msra.mxu0 %v1424
    %1451 = vmatprep.subr.mxu0 0.0
    %1452 = vmatpush1.msra.mxu0 %v1425
    %1453 = vmatprep.subr.mxu0 0.0
    %1454 = vmatpush1.msra.mxu0 %v1426
    %1455 = vmatprep.subr.mxu0 0.0
    %1456 = vmatpush1.msra.mxu0 %v1427
    %1457 = vmatprep.subr.mxu0 0.0
    %1458 = vmatpush1.msra.mxu0 %v1428
    %1459 = vmatprep.subr.mxu0 0.0
    %1460 = vmatpush1.msra.mxu0 0.0
    %1461 = vmatprep.subr.mxu0 0.0
    %1462 = vmatpush1.msra.mxu0 0.0
    %1463 = vmatprep.subr.mxu0 0.0
    %1464 = vmatpush1.msra.mxu0 0.0
    %1465 = vmatprep.subr.mxu0 0.0
    %1466 = vmatpush1.msra.mxu0 0.0
    %1467 = vmatprep.subr.mxu0 0.0
    %1468 = vmatpush1.msra.mxu0 0.0
    %1469 = vmatprep.subr.mxu0 0.0
    %1470 = vmatpush1.msra.mxu0 0.0
    %1471 = vmatprep.subr.mxu0 0.0
    %1472 = vmatpush1.msra.mxu0 0.0
    %1473 = vmatprep.subr.mxu0 0.0
    %1474 = vmatpush1.msra.mxu0 0.0
    %1475 = vmatprep.subr.mxu0 0.0
    %1476 = vmatpush1.msra.mxu0 0.0
    %1477 = vmatprep.subr.mxu0 0.0
    %1478 = vmatpush1.msra.mxu0 0.0
    %1479 = vmatprep.subr.mxu0 0.0
    %1480 = vmatpush1.msra.mxu0 0.0
    %1481 = vmatprep.subr.mxu0 0.0
    %1482 = vmatpush1.msra.mxu0 0.0
    %1483 = vmatprep.subr.mxu0 0.0
    %1484 = vmatpush1.msra.mxu0 0.0
    %1485 = vmatprep.subr.mxu0 0.0
    %1486 = vmatpush1.msra.mxu0 0.0
    %1487 = vmatprep.subr.mxu0 0.0
    %1488 = vmatpush1.msra.mxu0 0.0
    %1489 = vmatprep.subr.mxu0 0.0
    %1490 = vmatpush1.msra.mxu0 0.0
    %1491 = vmatprep.subr.mxu0 0.0
    %1492 = vmatpush1.msra.mxu0 0.0
    %1493 = vmatprep.subr.mxu0 0.0
    %1494 = vmatpush1.msra.mxu0 0.0
    %1495 = vmatprep.subr.mxu0 0.0
    %1496 = vmatpush1.msra.mxu0 0.0
    %1497 = vmatprep.subr.mxu0 0.0
    %1498 = vmatpush1.msra.mxu0 0.0
    %1499 = vmatprep.subr.mxu0 0.0
    %1500 = vmatpush1.msra.mxu0 0.0
    %1501 = vmatprep.subr.mxu0 0.0
    %1502 = vmatpush1.msra.mxu0 0.0
    %1503 = vmatprep.subr.mxu0 0.0
    %1504 = vmatpush1.msra.mxu0 0.0
    %1505 = vmatprep.subr.mxu0 0.0
    %1506 = vmatpush1.msra.mxu0 0.0
    %1507 = vmatprep.mubr.f32.mxu0 0.0
    %1508 = vmatmul.mubr.f32.gmra.mrb[0].mxu0 %v1438
    %v1509 = vpop.f32.mrb[0].mxu0
    %v1510 = vadd.f32 %v1435, %v1509
    %v1511 = vpop.f32.mrb[0].mxu0
    %1512 = vmatprep.mubr.f32.mxu0 0.0
    %1513 = vmatmul.mubr.f32.gmra.mrb[0].mxu0 %v1441
    %v1514 = vpop.f32.mrb[0].mxu0
    %v1515 = vadd.f32 %v1435, %v1514
    %v1516 = vpop.f32.mrb[0].mxu0
    %1517 = vdwg.mxu0
    %v1518 = vmul.f32 %v1510, 0.25
    %v1519 = vmul.f32 %v1515, 0.25
    %s1520 = scalar_lea.vmem %s7, 64
    %v1521 = vld [vmem:[%s1520] sm:$0xff]
    %v1522 = vld [vmem:[%s1520 + $0x8] sm:$0xff]
    %v1523 = vld [vmem:[%s1520 + $0x10] sm:$0xff]
    %v1524 = vld [vmem:[%s1520 + $0x18] sm:$0xff]
    %v1525 = vld [vmem:[%s1520 + $0x20] sm:$0xff]
    %v1526 = vld [vmem:[%s1520 + $0x28] sm:$0xff]
    %v1527 = vld [vmem:[%s1520 + $0x30] sm:$0xff]
    %v1528 = vld [vmem:[%s1520 + $0x38] sm:$0xff]
    %s1529 = scalar_lea.vmem [#allocation2], 1
    %v1530 = vld [vmem:[%s1529] sm:$0x1]
    %v1532 = vlaneseq
    %v1533 = vshrl.u32 %v1532, 7
    %v1534 = vsub.s32 0, %v1533
    %v1535 = vrot.slane %v1530, %v1534
    %1537 = vmatprep.subr.mxu0 0.0
    %1538 = vmatpush1.msra.mxu0 %v1521
    %1539 = vmatprep.subr.mxu0 0.0
    %1540 = vmatpush1.msra.mxu0 %v1522
    %1541 = vmatprep.subr.mxu0 0.0
    %1542 = vmatpush1.msra.mxu0 %v1523
    %1543 = vmatprep.subr.mxu0 0.0
    %1544 = vmatpush1.msra.mxu0 %v1524
    %1545 = vmatprep.subr.mxu0 0.0
    %1546 = vmatpush1.msra.mxu0 %v1525
    %1547 = vmatprep.subr.mxu0 0.0
    %1548 = vmatpush1.msra.mxu0 %v1526
    %1549 = vmatprep.subr.mxu0 0.0
    %1550 = vmatpush1.msra.mxu0 %v1527
    %1551 = vmatprep.subr.mxu0 0.0
    %1552 = vmatpush1.msra.mxu0 %v1528
    %1553 = vmatprep.subr.mxu0 0.0
    %1554 = vmatpush1.msra.mxu0 0.0
    %1555 = vmatprep.subr.mxu0 0.0
    %1556 = vmatpush1.msra.mxu0 0.0
    %1557 = vmatprep.subr.mxu0 0.0
    %1558 = vmatpush1.msra.mxu0 0.0
    %1559 = vmatprep.subr.mxu0 0.0
    %1560 = vmatpush1.msra.mxu0 0.0
    %1561 = vmatprep.subr.mxu0 0.0
    %1562 = vmatpush1.msra.mxu0 0.0
    %1563 = vmatprep.subr.mxu0 0.0
    %1564 = vmatpush1.msra.mxu0 0.0
    %1565 = vmatprep.subr.mxu0 0.0
    %1566 = vmatpush1.msra.mxu0 0.0
    %1567 = vmatprep.subr.mxu0 0.0
    %1568 = vmatpush1.msra.mxu0 0.0
    %1569 = vmatprep.subr.mxu0 0.0
    %1570 = vmatpush1.msra.mxu0 0.0
    %1571 = vmatprep.subr.mxu0 0.0
    %1572 = vmatpush1.msra.mxu0 0.0
    %1573 = vmatprep.subr.mxu0 0.0
    %1574 = vmatpush1.msra.mxu0 0.0
    %1575 = vmatprep.subr.mxu0 0.0
    %1576 = vmatpush1.msra.mxu0 0.0
    %1577 = vmatprep.subr.mxu0 0.0
    %1578 = vmatpush1.msra.mxu0 0.0
    %1579 = vmatprep.subr.mxu0 0.0
    %1580 = vmatpush1.msra.mxu0 0.0
    %1581 = vmatprep.subr.mxu0 0.0
    %1582 = vmatpush1.msra.mxu0 0.0
    %1583 = vmatprep.subr.mxu0 0.0
    %1584 = vmatpush1.msra.mxu0 0.0
    %1585 = vmatprep.subr.mxu0 0.0
    %1586 = vmatpush1.msra.mxu0 0.0
    %1587 = vmatprep.subr.mxu0 0.0
    %1588 = vmatpush1.msra.mxu0 0.0
    %1589 = vmatprep.subr.mxu0 0.0
    %1590 = vmatpush1.msra.mxu0 0.0
    %1591 = vmatprep.subr.mxu0 0.0
    %1592 = vmatpush1.msra.mxu0 0.0
    %1593 = vmatprep.subr.mxu0 0.0
    %1594 = vmatpush1.msra.mxu0 0.0
    %1595 = vmatprep.subr.mxu0 0.0
    %1596 = vmatpush1.msra.mxu0 0.0
    %1597 = vmatprep.subr.mxu0 0.0
    %1598 = vmatpush1.msra.mxu0 0.0
    %1599 = vmatprep.subr.mxu0 0.0
    %1600 = vmatpush1.msra.mxu0 0.0
    %1601 = vmatprep.mubr.f32.mxu0 0.0
    %1602 = vmatmul.mubr.f32.gmra.mrb[0].mxu0 %v1438
    %v1603 = vpop.f32.mrb[0].mxu0
    %v1604 = vadd.f32 %v1535, %v1603
    %v1605 = vpop.f32.mrb[0].mxu0
    %1606 = vmatprep.mubr.f32.mxu0 0.0
    %1607 = vmatmul.mubr.f32.gmra.mrb[0].mxu0 %v1441
    %v1608 = vpop.f32.mrb[0].mxu0
    %v1609 = vadd.f32 %v1535, %v1608
    %v1610 = vpop.f32.mrb[0].mxu0
    %1611 = vdwg.mxu0
    %s1612 = scalar_lea.vmem %s9, 64
    %v1613 = vld [vmem:[%s1612] sm:$0xff]
    %v1614 = vld [vmem:[%s1612 + $0x8] sm:$0xff]
    %v1615 = vld [vmem:[%s1612 + $0x10] sm:$0xff]
    %v1616 = vld [vmem:[%s1612 + $0x18] sm:$0xff]
    %v1617 = vld [vmem:[%s1612 + $0x20] sm:$0xff]
    %v1618 = vld [vmem:[%s1612 + $0x28] sm:$0xff]
    %v1619 = vld [vmem:[%s1612 + $0x30] sm:$0xff]
    %v1620 = vld [vmem:[%s1612 + $0x38] sm:$0xff]
    %s1621 = scalar_lea.vmem [#allocation5], 1
    %v1622 = vld [vmem:[%s1621] sm:$0x1]
    %v1624 = vlaneseq
    %v1625 = vshrl.u32 %v1624, 7
    %v1626 = vsub.s32 0, %v1625
    %v1627 = vrot.slane %v1622, %v1626
    %1629 = vmatprep.subr.mxu0 0.0
    %1630 = vmatpush1.msra.mxu0 %v1613
    %1631 = vmatprep.subr.mxu0 0.0
    %1632 = vmatpush1.msra.mxu0 %v1614
    %1633 = vmatprep.subr.mxu0 0.0
    %1634 = vmatpush1.msra.mxu0 %v1615
    %1635 = vmatprep.subr.mxu0 0.0
    %1636 = vmatpush1.msra.mxu0 %v1616
    %1637 = vmatprep.subr.mxu0 0.0
    %1638 = vmatpush1.msra.mxu0 %v1617
    %1639 = vmatprep.subr.mxu0 0.0
    %1640 = vmatpush1.msra.mxu0 %v1618
    %1641 = vmatprep.subr.mxu0 0.0
    %1642 = vmatpush1.msra.mxu0 %v1619
    %1643 = vmatprep.subr.mxu0 0.0
    %1644 = vmatpush1.msra.mxu0 %v1620
    %1645 = vmatprep.subr.mxu0 0.0
    %1646 = vmatpush1.msra.mxu0 0.0
    %1647 = vmatprep.subr.mxu0 0.0
    %1648 = vmatpush1.msra.mxu0 0.0
    %1649 = vmatprep.subr.mxu0 0.0
    %1650 = vmatpush1.msra.mxu0 0.0
    %1651 = vmatprep.subr.mxu0 0.0
    %1652 = vmatpush1.msra.mxu0 0.0
    %1653 = vmatprep.subr.mxu0 0.0
    %1654 = vmatpush1.msra.mxu0 0.0
    %1655 = vmatprep.subr.mxu0 0.0
    %1656 = vmatpush1.msra.mxu0 0.0
    %1657 = vmatprep.subr.mxu0 0.0
    %1658 = vmatpush1.msra.mxu0 0.0
    %1659 = vmatprep.subr.mxu0 0.0
    %1660 = vmatpush1.msra.mxu0 0.0
    %1661 = vmatprep.subr.mxu0 0.0
    %1662 = vmatpush1.msra.mxu0 0.0
    %1663 = vmatprep.subr.mxu0 0.0
    %1664 = vmatpush1.msra.mxu0 0.0
    %1665 = vmatprep.subr.mxu0 0.0
    %1666 = vmatpush1.msra.mxu0 0.0
    %1667 = vmatprep.subr.mxu0 0.0
    %1668 = vmatpush1.msra.mxu0 0.0
    %1669 = vmatprep.subr.mxu0 0.0
    %1670 = vmatpush1.msra.mxu0 0.0
    %1671 = vmatprep.subr.mxu0 0.0
    %1672 = vmatpush1.msra.mxu0 0.0
    %1673 = vmatprep.subr.mxu0 0.0
    %1674 = vmatpush1.msra.mxu0 0.0
    %1675 = vmatprep.subr.mxu0 0.0
    %1676 = vmatpush1.msra.mxu0 0.0
    %1677 = vmatprep.subr.mxu0 0.0
    %1678 = vmatpush1.msra.mxu0 0.0
    %1679 = vmatprep.subr.mxu0 0.0
    %1680 = vmatpush1.msra.mxu0 0.0
    %1681 = vmatprep.subr.mxu0 0.0
    %1682 = vmatpush1.msra.mxu0 0.0
    %1683 = vmatprep.subr.mxu0 0.0
    %1684 = vmatpush1.msra.mxu0 0.0
    %1685 = vmatprep.subr.mxu0 0.0
    %1686 = vmatpush1.msra.mxu0 0.0
    %1687 = vmatprep.subr.mxu0 0.0
    %1688 = vmatpush1.msra.mxu0 0.0
    %1689 = vmatprep.subr.mxu0 0.0
    %1690 = vmatpush1.msra.mxu0 0.0
    %1691 = vmatprep.subr.mxu0 0.0
    %1692 = vmatpush1.msra.mxu0 0.0
    %1693 = vmatprep.mubr.f32.mxu0 0.0
    %1694 = vmatmul.mubr.f32.gmra.mrb[0].mxu0 %v1438
    %v1695 = vpop.f32.mrb[0].mxu0
    %v1696 = vadd.f32 %v1627, %v1695
    %v1697 = vpop.f32.mrb[0].mxu0
    %1698 = vmatprep.mubr.f32.mxu0 0.0
    %1699 = vmatmul.mubr.f32.gmra.mrb[0].mxu0 %v1441
    %v1700 = vpop.f32.mrb[0].mxu0
    %v1701 = vadd.f32 %v1627, %v1700
    %v1702 = vpop.f32.mrb[0].mxu0
    %1703 = vdwg.mxu0
    %v1704 = vmul.f32 %v1518, %v1604
    %v1706 = vsel %vm126, %v1704, 0
    %1708 = vmatprep.subr.mxu0 0.0
    %1709 = vmatpush1.msra.mxu0 %v101
    %1710 = vmatprep.subr.mxu0 0.0
    %1711 = vmatpush1.msra.mxu0 %v102
    %1712 = vmatprep.subr.mxu0 0.0
    %1713 = vmatpush1.msra.mxu0 %v103
    %1714 = vmatprep.subr.mxu0 0.0
    %1715 = vmatpush1.msra.mxu0 %v104
    %1716 = vmatprep.subr.mxu0 0.0
    %1717 = vmatpush1.msra.mxu0 %v105
    %1718 = vmatprep.subr.mxu0 0.0
    %1719 = vmatpush1.msra.mxu0 %v106
    %1720 = vmatprep.subr.mxu0 0.0
    %1721 = vmatpush1.msra.mxu0 %v107
    %1722 = vmatprep.subr.mxu0 0.0
    %1723 = vmatpush1.msra.mxu0 %v108
    %1724 = vmatprep.subr.mxu0 0.0
    %1725 = vmatpush1.msra.mxu0 0.0
    %1726 = vmatprep.subr.mxu0 0.0
    %1727 = vmatpush1.msra.mxu0 0.0
    %1728 = vmatprep.subr.mxu0 0.0
    %1729 = vmatpush1.msra.mxu0 0.0
    %1730 = vmatprep.subr.mxu0 0.0
    %1731 = vmatpush1.msra.mxu0 0.0
    %1732 = vmatprep.subr.mxu0 0.0
    %1733 = vmatpush1.msra.mxu0 0.0
    %1734 = vmatprep.subr.mxu0 0.0
    %1735 = vmatpush1.msra.mxu0 0.0
    %1736 = vmatprep.subr.mxu0 0.0
    %1737 = vmatpush1.msra.mxu0 0.0
    %1738 = vmatprep.subr.mxu0 0.0
    %1739 = vmatpush1.msra.mxu0 0.0
    %1740 = vmatprep.subr.mxu0 0.0
    %1741 = vmatpush1.msra.mxu0 0.0
    %1742 = vmatprep.subr.mxu0 0.0
    %1743 = vmatpush1.msra.mxu0 0.0
    %1744 = vmatprep.subr.mxu0 0.0
    %1745 = vmatpush1.msra.mxu0 0.0
    %1746 = vmatprep.subr.mxu0 0.0
    %1747 = vmatpush1.msra.mxu0 0.0
    %1748 = vmatprep.subr.mxu0 0.0
    %1749 = vmatpush1.msra.mxu0 0.0
    %1750 = vmatprep.subr.mxu0 0.0
    %1751 = vmatpush1.msra.mxu0 0.0
    %1752 = vmatprep.subr.mxu0 0.0
    %1753 = vmatpush1.msra.mxu0 0.0
    %1754 = vmatprep.subr.mxu0 0.0
    %1755 = vmatpush1.msra.mxu0 0.0
    %1756 = vmatprep.subr.mxu0 0.0
    %1757 = vmatpush1.msra.mxu0 0.0
    %1758 = vmatprep.subr.mxu0 0.0
    %1759 = vmatpush1.msra.mxu0 0.0
    %1760 = vmatprep.subr.mxu0 0.0
    %1761 = vmatpush1.msra.mxu0 0.0
    %1762 = vmatprep.subr.mxu0 0.0
    %1763 = vmatpush1.msra.mxu0 0.0
    %1764 = vmatprep.subr.mxu0 0.0
    %1765 = vmatpush1.msra.mxu0 0.0
    %1766 = vmatprep.subr.mxu0 0.0
    %1767 = vmatpush1.msra.mxu0 0.0
    %1768 = vmatprep.subr.mxu0 0.0
    %1769 = vmatpush1.msra.mxu0 0.0
    %1770 = vmatprep.subr.mxu0 0.0
    %1771 = vmatpush1.msra.mxu0 0.0
    %1772 = vmatprep.mubr.f32.mxu0 0.0
    %1773 = vmatmul.mubr.f32.gmra.mrb[0].mxu0 %v1706
    %v1774 = vpop.f32.mrb[0].mxu0
    %v1775 = vadd.f32 0.0, %v1774
    %v1776 = vpop.f32.mrb[0].mxu0
    %1777 = vdwg.mxu0
    %v1778 = vmul.f32 %v1518, %v1609
    %v1780 = vsel %vm126, %v1778, 0
    %1782 = vmatprep.subr.mxu0 0.0
    %1783 = vmatpush1.msra.mxu0 %v101
    %1784 = vmatprep.subr.mxu0 0.0
    %1785 = vmatpush1.msra.mxu0 %v102
    %1786 = vmatprep.subr.mxu0 0.0
    %1787 = vmatpush1.msra.mxu0 %v103
    %1788 = vmatprep.subr.mxu0 0.0
    %1789 = vmatpush1.msra.mxu0 %v104
    %1790 = vmatprep.subr.mxu0 0.0
    %1791 = vmatpush1.msra.mxu0 %v105
    %1792 = vmatprep.subr.mxu0 0.0
    %1793 = vmatpush1.msra.mxu0 %v106
    %1794 = vmatprep.subr.mxu0 0.0
    %1795 = vmatpush1.msra.mxu0 %v107
    %1796 = vmatprep.subr.mxu0 0.0
    %1797 = vmatpush1.msra.mxu0 %v108
    %1798 = vmatprep.subr.mxu0 0.0
    %1799 = vmatpush1.msra.mxu0 0.0
    %1800 = vmatprep.subr.mxu0 0.0
    %1801 = vmatpush1.msra.mxu0 0.0
    %1802 = vmatprep.subr.mxu0 0.0
    %1803 = vmatpush1.msra.mxu0 0.0
    %1804 = vmatprep.subr.mxu0 0.0
    %1805 = vmatpush1.msra.mxu0 0.0
    %1806 = vmatprep.subr.mxu0 0.0
    %1807 = vmatpush1.msra.mxu0 0.0
    %1808 = vmatprep.subr.mxu0 0.0
    %1809 = vmatpush1.msra.mxu0 0.0
    %1810 = vmatprep.subr.mxu0 0.0
    %1811 = vmatpush1.msra.mxu0 0.0
    %1812 = vmatprep.subr.mxu0 0.0
    %1813 = vmatpush1.msra.mxu0 0.0
    %1814 = vmatprep.subr.mxu0 0.0
    %1815 = vmatpush1.msra.mxu0 0.0
    %1816 = vmatprep.subr.mxu0 0.0
    %1817 = vmatpush1.msra.mxu0 0.0
    %1818 = vmatprep.subr.mxu0 0.0
    %1819 = vmatpush1.msra.mxu0 0.0
    %1820 = vmatprep.subr.mxu0 0.0
    %1821 = vmatpush1.msra.mxu0 0.0
    %1822 = vmatprep.subr.mxu0 0.0
    %1823 = vmatpush1.msra.mxu0 0.0
    %1824 = vmatprep.subr.mxu0 0.0
    %1825 = vmatpush1.msra.mxu0 0.0
    %1826 = vmatprep.subr.mxu0 0.0
    %1827 = vmatpush1.msra.mxu0 0.0
    %1828 = vmatprep.subr.mxu0 0.0
    %1829 = vmatpush1.msra.mxu0 0.0
    %1830 = vmatprep.subr.mxu0 0.0
    %1831 = vmatpush1.msra.mxu0 0.0
    %1832 = vmatprep.subr.mxu0 0.0
    %1833 = vmatpush1.msra.mxu0 0.0
    %1834 = vmatprep.subr.mxu0 0.0
    %1835 = vmatpush1.msra.mxu0 0.0
    %1836 = vmatprep.subr.mxu0 0.0
    %1837 = vmatpush1.msra.mxu0 0.0
    %1838 = vmatprep.subr.mxu0 0.0
    %1839 = vmatpush1.msra.mxu0 0.0
    %1840 = vmatprep.subr.mxu0 0.0
    %1841 = vmatpush1.msra.mxu0 0.0
    %1842 = vmatprep.subr.mxu0 0.0
    %1843 = vmatpush1.msra.mxu0 0.0
    %1844 = vmatprep.subr.mxu0 0.0
    %1845 = vmatpush1.msra.mxu0 0.0
    %1846 = vmatprep.mubr.f32.mxu0 0.0
    %1847 = vmatmul.mubr.f32.gmra.mrb[0].mxu0 %v1780
    %v1848 = vpop.f32.mrb[0].mxu0
    %v1849 = vadd.f32 0.0, %v1848
    %v1850 = vpop.f32.mrb[0].mxu0
    %1851 = vdwg.mxu0
    %v1852 = vmax.f32 %v1775, %v1849
    %v1853 = vsub.f32 %v1775, %v1852
    %v1854 = vmul.f32 %v1853, 1.442695
    %v1855 = vpow.pop %v1854
    %v1856 = vsub.f32 %v1849, %v1852
    %v1857 = vmul.f32 %v1856, 1.442695
    %v1858 = vpow.pop %v1857
    %v1859 = vadd.f32 %v1855, %v1858
    %v1860 = vrcp.pop %v1859
    %v1861 = vmul.f32 %v1855, %v1860
    %v1862 = vmul.f32 %v1861, %v1696
    %v1863 = vmul.f32 %v1858, %v1860
    %v1864 = vmul.f32 %v1863, %v1701
    %v1865 = vadd.f32 %v1862, %v1864
    %v1866 = vmul.f32 %v1519, %v1604
    %v1868 = vsel %vm126, %v1866, 0
    %1870 = vmatprep.subr.mxu0 0.0
    %1871 = vmatpush1.msra.mxu0 %v101
    %1872 = vmatprep.subr.mxu0 0.0
    %1873 = vmatpush1.msra.mxu0 %v102
    %1874 = vmatprep.subr.mxu0 0.0
    %1875 = vmatpush1.msra.mxu0 %v103
    %1876 = vmatprep.subr.mxu0 0.0
    %1877 = vmatpush1.msra.mxu0 %v104
    %1878 = vmatprep.subr.mxu0 0.0
    %1879 = vmatpush1.msra.mxu0 %v105
    %1880 = vmatprep.subr.mxu0 0.0
    %1881 = vmatpush1.msra.mxu0 %v106
    %1882 = vmatprep.subr.mxu0 0.0
    %1883 = vmatpush1.msra.mxu0 %v107
    %1884 = vmatprep.subr.mxu0 0.0
    %1885 = vmatpush1.msra.mxu0 %v108
    %1886 = vmatprep.subr.mxu0 0.0
    %1887 = vmatpush1.msra.mxu0 0.0
    %1888 = vmatprep.subr.mxu0 0.0
    %1889 = vmatpush1.msra.mxu0 0.0
    %1890 = vmatprep.subr.mxu0 0.0
    %1891 = vmatpush1.msra.mxu0 0.0
    %1892 = vmatprep.subr.mxu0 0.0
    %1893 = vmatpush1.msra.mxu0 0.0
    %1894 = vmatprep.subr.mxu0 0.0
    %1895 = vmatpush1.msra.mxu0 0.0
    %1896 = vmatprep.subr.mxu0 0.0
    %1897 = vmatpush1.msra.mxu0 0.0
    %1898 = vmatprep.subr.mxu0 0.0
    %1899 = vmatpush1.msra.mxu0 0.0
    %1900 = vmatprep.subr.mxu0 0.0
    %1901 = vmatpush1.msra.mxu0 0.0
    %1902 = vmatprep.subr.mxu0 0.0
    %1903 = vmatpush1.msra.mxu0 0.0
    %1904 = vmatprep.subr.mxu0 0.0
    %1905 = vmatpush1.msra.mxu0 0.0
    %1906 = vmatprep.subr.mxu0 0.0
    %1907 = vmatpush1.msra.mxu0 0.0
    %1908 = vmatprep.subr.mxu0 0.0
    %1909 = vmatpush1.msra.mxu0 0.0
    %1910 = vmatprep.subr.mxu0 0.0
    %1911 = vmatpush1.msra.mxu0 0.0
    %1912 = vmatprep.subr.mxu0 0.0
    %1913 = vmatpush1.msra.mxu0 0.0
    %1914 = vmatprep.subr.mxu0 0.0
    %1915 = vmatpush1.msra.mxu0 0.0
    %1916 = vmatprep.subr.mxu0 0.0
    %1917 = vmatpush1.msra.mxu0 0.0
    %1918 = vmatprep.subr.mxu0 0.0
    %1919 = vmatpush1.msra.mxu0 0.0
    %1920 = vmatprep.subr.mxu0 0.0
    %1921 = vmatpush1.msra.mxu0 0.0
    %1922 = vmatprep.subr.mxu0 0.0
    %1923 = vmatpush1.msra.mxu0 0.0
    %1924 = vmatprep.subr.mxu0 0.0
    %1925 = vmatpush1.msra.mxu0 0.0
    %1926 = vmatprep.subr.mxu0 0.0
    %1927 = vmatpush1.msra.mxu0 0.0
    %1928 = vmatprep.subr.mxu0 0.0
    %1929 = vmatpush1.msra.mxu0 0.0
    %1930 = vmatprep.subr.mxu0 0.0
    %1931 = vmatpush1.msra.mxu0 0.0
    %1932 = vmatprep.subr.mxu0 0.0
    %1933 = vmatpush1.msra.mxu0 0.0
    %1934 = vmatprep.mubr.f32.mxu0 0.0
    %1935 = vmatmul.mubr.f32.gmra.mrb[0].mxu0 %v1868
    %v1936 = vpop.f32.mrb[0].mxu0
    %v1937 = vadd.f32 0.0, %v1936
    %v1938 = vpop.f32.mrb[0].mxu0
    %1939 = vdwg.mxu0
    %v1940 = vmul.f32 %v1519, %v1609
    %v1942 = vsel %vm126, %v1940, 0
    %1944 = vmatprep.subr.mxu0 0.0
    %1945 = vmatpush1.msra.mxu0 %v101
    %1946 = vmatprep.subr.mxu0 0.0
    %1947 = vmatpush1.msra.mxu0 %v102
    %1948 = vmatprep.subr.mxu0 0.0
    %1949 = vmatpush1.msra.mxu0 %v103
    %1950 = vmatprep.subr.mxu0 0.0
    %1951 = vmatpush1.msra.mxu0 %v104
    %1952 = vmatprep.subr.mxu0 0.0
    %1953 = vmatpush1.msra.mxu0 %v105
    %1954 = vmatprep.subr.mxu0 0.0
    %1955 = vmatpush1.msra.mxu0 %v106
    %1956 = vmatprep.subr.mxu0 0.0
    %1957 = vmatpush1.msra.mxu0 %v107
    %1958 = vmatprep.subr.mxu0 0.0
    %1959 = vmatpush1.msra.mxu0 %v108
    %1960 = vmatprep.subr.mxu0 0.0
    %1961 = vmatpush1.msra.mxu0 0.0
    %1962 = vmatprep.subr.mxu0 0.0
    %1963 = vmatpush1.msra.mxu0 0.0
    %1964 = vmatprep.subr.mxu0 0.0
    %1965 = vmatpush1.msra.mxu0 0.0
    %1966 = vmatprep.subr.mxu0 0.0
    %1967 = vmatpush1.msra.mxu0 0.0
    %1968 = vmatprep.subr.mxu0 0.0
    %1969 = vmatpush1.msra.mxu0 0.0
    %1970 = vmatprep.subr.mxu0 0.0
    %1971 = vmatpush1.msra.mxu0 0.0
    %1972 = vmatprep.subr.mxu0 0.0
    %1973 = vmatpush1.msra.mxu0 0.0
    %1974 = vmatprep.subr.mxu0 0.0
    %1975 = vmatpush1.msra.mxu0 0.0
    %1976 = vmatprep.subr.mxu0 0.0
    %1977 = vmatpush1.msra.mxu0 0.0
    %1978 = vmatprep.subr.mxu0 0.0
    %1979 = vmatpush1.msra.mxu0 0.0
    %1980 = vmatprep.subr.mxu0 0.0
    %1981 = vmatpush1.msra.mxu0 0.0
    %1982 = vmatprep.subr.mxu0 0.0
    %1983 = vmatpush1.msra.mxu0 0.0
    %1984 = vmatprep.subr.mxu0 0.0
    %1985 = vmatpush1.msra.mxu0 0.0
    %1986 = vmatprep.subr.mxu0 0.0
    %1987 = vmatpush1.msra.mxu0 0.0
    %1988 = vmatprep.subr.mxu0 0.0
    %1989 = vmatpush1.msra.mxu0 0.0
    %1990 = vmatprep.subr.mxu0 0.0
    %1991 = vmatpush1.msra.mxu0 0.0
    %1992 = vmatprep.subr.mxu0 0.0
    %1993 = vmatpush1.msra.mxu0 0.0
    %1994 = vmatprep.subr.mxu0 0.0
    %1995 = vmatpush1.msra.mxu0 0.0
    %1996 = vmatprep.subr.mxu0 0.0
    %1997 = vmatpush1.msra.mxu0 0.0
    %1998 = vmatprep.subr.mxu0 0.0
    %1999 = vmatpush1.msra.mxu0 0.0
    %2000 = vmatprep.subr.mxu0 0.0
    %2001 = vmatpush1.msra.mxu0 0.0
    %2002 = vmatprep.subr.mxu0 0.0
    %2003 = vmatpush1.msra.mxu0 0.0
    %2004 = vmatprep.subr.mxu0 0.0
    %2005 = vmatpush1.msra.mxu0 0.0
    %2006 = vmatprep.subr.mxu0 0.0
    %2007 = vmatpush1.msra.mxu0 0.0
    %2008 = vmatprep.mubr.f32.mxu0 0.0
    %2009 = vmatmul.mubr.f32.gmra.mrb[0].mxu0 %v1942
    %v2010 = vpop.f32.mrb[0].mxu0
    %v2011 = vadd.f32 0.0, %v2010
    %v2012 = vpop.f32.mrb[0].mxu0
    %2013 = vdwg.mxu0
    %v2014 = vmax.f32 %v1937, %v2011
    %v2015 = vsub.f32 %v1937, %v2014
    %v2016 = vmul.f32 %v2015, 1.442695
    %v2017 = vpow.pop %v2016
    %v2018 = vsub.f32 %v2011, %v2014
    %v2019 = vmul.f32 %v2018, 1.442695
    %v2020 = vpow.pop %v2019
    %v2021 = vadd.f32 %v2017, %v2020
    %v2022 = vrcp.pop %v2021
    %v2023 = vmul.f32 %v2017, %v2022
    %v2024 = vmul.f32 %v2023, %v1696
    %v2025 = vmul.f32 %v2020, %v2022
    %v2026 = vmul.f32 %v2025, %v1701
    %v2027 = vadd.f32 %v2024, %v2026
    %s2028 = scalar_lea.vmem %s11, 64
    %v2029 = vld [vmem:[%s2028] sm:$0xff]
    %v2030 = vld [vmem:[%s2028 + $0x8] sm:$0xff]
    %v2031 = vld [vmem:[%s2028 + $0x10] sm:$0xff]
    %v2032 = vld [vmem:[%s2028 + $0x18] sm:$0xff]
    %v2033 = vld [vmem:[%s2028 + $0x20] sm:$0xff]
    %v2034 = vld [vmem:[%s2028 + $0x28] sm:$0xff]
    %v2035 = vld [vmem:[%s2028 + $0x30] sm:$0xff]
    %v2036 = vld [vmem:[%s2028 + $0x38] sm:$0xff]
    %s2037 = scalar_lea.vmem %s12, 1
    %v2038 = vld [vmem:[%s2037] sm:$0x1]
    %v2040 = vlaneseq
    %v2041 = vshrl.u32 %v2040, 7
    %v2042 = vsub.s32 0, %v2041
    %v2043 = vrot.slane %v2038, %v2042
    %v2046 = vsel %vm126, %v1865, 0
    %v2049 = vsel %vm126, %v2027, 0
    %2051 = vmatprep.subr.mxu0 0.0
    %2052 = vmatpush1.msra.mxu0 %v2029
    %2053 = vmatprep.subr.mxu0 0.0
    %2054 = vmatpush1.msra.mxu0 %v2030
    %2055 = vmatprep.subr.mxu0 0.0
    %2056 = vmatpush1.msra.mxu0 %v2031
    %2057 = vmatprep.subr.mxu0 0.0
    %2058 = vmatpush1.msra.mxu0 %v2032
    %2059 = vmatprep.subr.mxu0 0.0
    %2060 = vmatpush1.msra.mxu0 %v2033
    %2061 = vmatprep.subr.mxu0 0.0
    %2062 = vmatpush1.msra.mxu0 %v2034
    %2063 = vmatprep.subr.mxu0 0.0
    %2064 = vmatpush1.msra.mxu0 %v2035
    %2065 = vmatprep.subr.mxu0 0.0
    %2066 = vmatpush1.msra.mxu0 %v2036
    %2067 = vmatprep.subr.mxu0 0.0
    %2068 = vmatpush1.msra.mxu0 0.0
    %2069 = vmatprep.subr.mxu0 0.0
    %2070 = vmatpush1.msra.mxu0 0.0
    %2071 = vmatprep.subr.mxu0 0.0
    %2072 = vmatpush1.msra.mxu0 0.0
    %2073 = vmatprep.subr.mxu0 0.0
    %2074 = vmatpush1.msra.mxu0 0.0
    %2075 = vmatprep.subr.mxu0 0.0
    %2076 = vmatpush1.msra.mxu0 0.0
    %2077 = vmatprep.subr.mxu0 0.0
    %2078 = vmatpush1.msra.mxu0 0.0
    %2079 = vmatprep.subr.mxu0 0.0
    %2080 = vmatpush1.msra.mxu0 0.0
    %2081 = vmatprep.subr.mxu0 0.0
    %2082 = vmatpush1.msra.mxu0 0.0
    %2083 = vmatprep.subr.mxu0 0.0
    %2084 = vmatpush1.msra.mxu0 0.0
    %2085 = vmatprep.subr.mxu0 0.0
    %2086 = vmatpush1.msra.mxu0 0.0
    %2087 = vmatprep.subr.mxu0 0.0
    %2088 = vmatpush1.msra.mxu0 0.0
    %2089 = vmatprep.subr.mxu0 0.0
    %2090 = vmatpush1.msra.mxu0 0.0
    %2091 = vmatprep.subr.mxu0 0.0
    %2092 = vmatpush1.msra.mxu0 0.0
    %2093 = vmatprep.subr.mxu0 0.0
    %2094 = vmatpush1.msra.mxu0 0.0
    %2095 = vmatprep.subr.mxu0 0.0
    %2096 = vmatpush1.msra.mxu0 0.0
    %2097 = vmatprep.subr.mxu0 0.0
    %2098 = vmatpush1.msra.mxu0 0.0
    %2099 = vmatprep.subr.mxu0 0.0
    %2100 = vmatpush1.msra.mxu0 0.0
    %2101 = vmatprep.subr.mxu0 0.0
    %2102 = vmatpush1.msra.mxu0 0.0
    %2103 = vmatprep.subr.mxu0 0.0
    %2104 = vmatpush1.msra.mxu0 0.0
    %2105 = vmatprep.subr.mxu0 0.0
    %2106 = vmatpush1.msra.mxu0 0.0
    %2107 = vmatprep.subr.mxu0 0.0
    %2108 = vmatpush1.msra.mxu0 0.0
    %2109 = vmatprep.subr.mxu0 0.0
    %2110 = vmatpush1.msra.mxu0 0.0
    %2111 = vmatprep.subr.mxu0 0.0
    %2112 = vmatpush1.msra.mxu0 0.0
    %2113 = vmatprep.subr.mxu0 0.0
    %2114 = vmatpush1.msra.mxu0 0.0
    %2115 = vmatprep.mubr.f32.mxu0 0.0
    %2116 = vmatmul.mubr.f32.gmra.mrb[0].mxu0 %v2046
    %v2117 = vpop.f32.mrb[0].mxu0
    %v2118 = vadd.f32 %v2043, %v2117
    %v2119 = vpop.f32.mrb[0].mxu0
    %2120 = vmatprep.mubr.f32.mxu0 0.0
    %2121 = vmatmul.mubr.f32.gmra.mrb[0].mxu0 %v2049
    %v2122 = vpop.f32.mrb[0].mxu0
    %v2123 = vadd.f32 %v2043, %v2122
    %v2124 = vpop.f32.mrb[0].mxu0
    %2125 = vdwg.mxu0
    %v2126 = vadd.f32 %v1372, %v2118
    %v2127 = vadd.f32 %v1373, %v2123
    %s2128 = scalar_lea.vmem %s13, 128
    %v2129 = vld [vmem:[%s2128] sm:$0xff]
    %v2130 = vld [vmem:[%s2128 + $0x8] sm:$0xff]
    %v2131 = vld [vmem:[%s2128 + $0x10] sm:$0xff]
    %v2132 = vld [vmem:[%s2128 + $0x18] sm:$0xff]
    %v2133 = vld [vmem:[%s2128 + $0x20] sm:$0xff]
    %v2134 = vld [vmem:[%s2128 + $0x28] sm:$0xff]
    %v2135 = vld [vmem:[%s2128 + $0x30] sm:$0xff]
    %v2136 = vld [vmem:[%s2128 + $0x38] sm:$0xff]
    %v2137 = vld [vmem:[%s2128 + $0x40] sm:$0xff]
    %v2138 = vld [vmem:[%s2128 + $0x48] sm:$0xff]
    %v2139 = vld [vmem:[%s2128 + $0x50] sm:$0xff]
    %v2140 = vld [vmem:[%s2128 + $0x58] sm:$0xff]
    %v2141 = vld [vmem:[%s2128 + $0x60] sm:$0xff]
    %v2142 = vld [vmem:[%s2128 + $0x68] sm:$0xff]
    %v2143 = vld [vmem:[%s2128 + $0x70] sm:$0xff]
    %v2144 = vld [vmem:[%s2128 + $0x78] sm:$0xff]
    %s2145 = scalar_lea.vmem %s14, 2
    %v2146 = vld [vmem:[%s2145] sm:$0x3]
    %v2148 = vlaneseq
    %v2149 = vshrl.u32 %v2148, 7
    %v2150 = vsub.s32 0, %v2149
    %v2151 = vrot.slane %v2146, %v2150
    %v2152 = vlaneseq
    %v2153 = vshrl.u32 %v2152, 7
    %v2154 = vsub.s32 1, %v2153
    %v2155 = vrot.slane %v2146, %v2154
    %2158 = vmatprep.subr.mxu0 %v2130
    %2159 = vmatpush1.msra.mxu0 %v2129
    %2160 = vmatprep.subr.mxu0 %v2132
    %2161 = vmatpush1.msra.mxu0 %v2131
    %2162 = vmatprep.subr.mxu0 %v2134
    %2163 = vmatpush1.msra.mxu0 %v2133
    %2164 = vmatprep.subr.mxu0 %v2136
    %2165 = vmatpush1.msra.mxu0 %v2135
    %2166 = vmatprep.subr.mxu0 %v2138
    %2167 = vmatpush1.msra.mxu0 %v2137
    %2168 = vmatprep.subr.mxu0 %v2140
    %2169 = vmatpush1.msra.mxu0 %v2139
    %2170 = vmatprep.subr.mxu0 %v2142
    %2171 = vmatpush1.msra.mxu0 %v2141
    %2172 = vmatprep.subr.mxu0 %v2144
    %2173 = vmatpush1.msra.mxu0 %v2143
    %2174 = vmatprep.subr.mxu0 0.0
    %2175 = vmatpush1.msra.mxu0 0.0
    %2176 = vmatprep.subr.mxu0 0.0
    %2177 = vmatpush1.msra.mxu0 0.0
    %2178 = vmatprep.subr.mxu0 0.0
    %2179 = vmatpush1.msra.mxu0 0.0
    %2180 = vmatprep.subr.mxu0 0.0
    %2181 = vmatpush1.msra.mxu0 0.0
    %2182 = vmatprep.subr.mxu0 0.0
    %2183 = vmatpush1.msra.mxu0 0.0
    %2184 = vmatprep.subr.mxu0 0.0
    %2185 = vmatpush1.msra.mxu0 0.0
    %2186 = vmatprep.subr.mxu0 0.0
    %2187 = vmatpush1.msra.mxu0 0.0
    %2188 = vmatprep.subr.mxu0 0.0
    %2189 = vmatpush1.msra.mxu0 0.0
    %2190 = vmatprep.subr.mxu0 0.0
    %2191 = vmatpush1.msra.mxu0 0.0
    %2192 = vmatprep.subr.mxu0 0.0
    %2193 = vmatpush1.msra.mxu0 0.0
    %2194 = vmatprep.subr.mxu0 0.0
    %2195 = vmatpush1.msra.mxu0 0.0
    %2196 = vmatprep.subr.mxu0 0.0
    %2197 = vmatpush1.msra.mxu0 0.0
    %2198 = vmatprep.subr.mxu0 0.0
    %2199 = vmatpush1.msra.mxu0 0.0
    %2200 = vmatprep.subr.mxu0 0.0
    %2201 = vmatpush1.msra.mxu0 0.0
    %2202 = vmatprep.subr.mxu0 0.0
    %2203 = vmatpush1.msra.mxu0 0.0
    %2204 = vmatprep.subr.mxu0 0.0
    %2205 = vmatpush1.msra.mxu0 0.0
    %2206 = vmatprep.subr.mxu0 0.0
    %2207 = vmatpush1.msra.mxu0 0.0
    %2208 = vmatprep.subr.mxu0 0.0
    %2209 = vmatpush1.msra.mxu0 0.0
    %2210 = vmatprep.subr.mxu0 0.0
    %2211 = vmatpush1.msra.mxu0 0.0
    %2212 = vmatprep.subr.mxu0 0.0
    %2213 = vmatpush1.msra.mxu0 0.0
    %2214 = vmatprep.subr.mxu0 0.0
    %2215 = vmatpush1.msra.mxu0 0.0
    %2216 = vmatprep.subr.mxu0 0.0
    %2217 = vmatpush1.msra.mxu0 0.0
    %2218 = vmatprep.subr.mxu0 0.0
    %2219 = vmatpush1.msra.mxu0 0.0
    %2220 = vmatprep.subr.mxu0 0.0
    %2221 = vmatpush1.msra.mxu0 0.0
    %2222 = vmatprep.mubr.f32.mxu0 0.0
    %2223 = vmatmul.mubr.f32.gmra.mrb[0].mxu0 %v1438
    %v2224 = vpop.f32.mrb[0].mxu0
    %v2225 = vadd.f32 %v2151, %v2224
    %v2226 = vpop.f32.mrb[0].mxu0
    %v2227 = vadd.f32 %v2155, %v2226
    %2228 = vmatprep.mubr.f32.mxu0 0.0
    %2229 = vmatmul.mubr.f32.gmra.mrb[0].mxu0 %v1441
    %v2230 = vpop.f32.mrb[0].mxu0
    %v2231 = vadd.f32 %v2151, %v2230
    %v2232 = vpop.f32.mrb[0].mxu0
    %v2233 = vadd.f32 %v2155, %v2232
    %2234 = vdwg.mxu0
    %v2235 = vmul.f32 %v2225, 0.5
    %v2236 = vmul.f32 %v2227, 0.5
    %v2237 = vmul.f32 %v2231, 0.5
    %v2238 = vmul.f32 %v2233, 0.5
    %v2239 = vmul.f32 %v2225, 0.70710677
    %v2240 = vmul.f32 %v2227, 0.70710677
    %v2241 = vmul.f32 %v2231, 0.70710677
    %v2242 = vmul.f32 %v2233, 0.70710677
    %v2243 = verf.f32.pop %v2239
    %v2244 = verf.f32.pop %v2240
    %v2245 = verf.f32.pop %v2241
    %v2246 = verf.f32.pop %v2242
    %v2247 = vadd.f32 %v2243, 1.0
    %v2248 = vadd.f32 %v2244, 1.0
    %v2249 = vadd.f32 %v2245, 1.0
    %v2250 = vadd.f32 %v2246, 1.0
    %v2251 = vmul.f32 %v2235, %v2247
    %v2252 = vmul.f32 %v2236, %v2248
    %v2253 = vmul.f32 %v2237, %v2249
    %v2254 = vmul.f32 %v2238, %v2250
    %s2255 = scalar_lea.vmem %s15, 256
    %v2256 = vld [vmem:[%s2255] sm:$0xff]
    %v2257 = vld [vmem:[%s2255 + $0x8] sm:$0xff]
    %v2258 = vld [vmem:[%s2255 + $0x10] sm:$0xff]
    %v2259 = vld [vmem:[%s2255 + $0x18] sm:$0xff]
    %v2260 = vld [vmem:[%s2255 + $0x20] sm:$0xff]
    %v2261 = vld [vmem:[%s2255 + $0x28] sm:$0xff]
    %v2262 = vld [vmem:[%s2255 + $0x30] sm:$0xff]
    %v2263 = vld [vmem:[%s2255 + $0x38] sm:$0xff]
    %v2264 = vld [vmem:[%s2255 + $0x40] sm:$0xff]
    %v2265 = vld [vmem:[%s2255 + $0x48] sm:$0xff]
    %v2266 = vld [vmem:[%s2255 + $0x50] sm:$0xff]
    %v2267 = vld [vmem:[%s2255 + $0x58] sm:$0xff]
    %v2268 = vld [vmem:[%s2255 + $0x60] sm:$0xff]
    %v2269 = vld [vmem:[%s2255 + $0x68] sm:$0xff]
    %v2270 = vld [vmem:[%s2255 + $0x70] sm:$0xff]
    %v2271 = vld [vmem:[%s2255 + $0x78] sm:$0xff]
    %v2272 = vld [vmem:[%s2255 + $0x80] sm:$0xff]
    %v2273 = vld [vmem:[%s2255 + $0x88] sm:$0xff]
    %v2274 = vld [vmem:[%s2255 + $0x90] sm:$0xff]
    %v2275 = vld [vmem:[%s2255 + $0x98] sm:$0xff]
    %v2276 = vld [vmem:[%s2255 + $0xa0] sm:$0xff]
    %v2277 = vld [vmem:[%s2255 + $0xa8] sm:$0xff]
    %v2278 = vld [vmem:[%s2255 + $0xb0] sm:$0xff]
    %v2279 = vld [vmem:[%s2255 + $0xb8] sm:$0xff]
    %v2280 = vld [vmem:[%s2255 + $0xc0] sm:$0xff]
    %v2281 = vld [vmem:[%s2255 + $0xc8] sm:$0xff]
    %v2282 = vld [vmem:[%s2255 + $0xd0] sm:$0xff]
    %v2283 = vld [vmem:[%s2255 + $0xd8] sm:$0xff]
    %v2284 = vld [vmem:[%s2255 + $0xe0] sm:$0xff]
    %v2285 = vld [vmem:[%s2255 + $0xe8] sm:$0xff]
    %v2286 = vld [vmem:[%s2255 + $0xf0] sm:$0xff]
    %v2287 = vld [vmem:[%s2255 + $0xf8] sm:$0xff]
    %s2288 = scalar_lea.vmem [#allocation7], 1
    %v2289 = vld [vmem:[%s2288] sm:$0x1]
    %v2291 = vlaneseq
    %v2292 = vshrl.u32 %v2291, 7
    %v2293 = vsub.s32 0, %v2292
    %v2294 = vrot.slane %v2289, %v2293
    %2296 = vmatprep.subr.mxu0 0.0
    %2297 = vmatpush1.msra.mxu0 %v2256
    %2298 = vmatprep.subr.mxu0 0.0
    %2299 = vmatpush1.msra.mxu0 %v2257
    %2300 = vmatprep.subr.mxu0 0.0
    %2301 = vmatpush1.msra.mxu0 %v2258
    %2302 = vmatprep.subr.mxu0 0.0
    %2303 = vmatpush1.msra.mxu0 %v2259
    %2304 = vmatprep.subr.mxu0 0.0
    %2305 = vmatpush1.msra.mxu0 %v2260
    %2306 = vmatprep.subr.mxu0 0.0
    %2307 = vmatpush1.msra.mxu0 %v2261
    %2308 = vmatprep.subr.mxu0 0.0
    %2309 = vmatpush1.msra.mxu0 %v2262
    %2310 = vmatprep.subr.mxu0 0.0
    %2311 = vmatpush1.msra.mxu0 %v2263
    %2312 = vmatprep.subr.mxu0 0.0
    %2313 = vmatpush1.msra.mxu0 %v2264
    %2314 = vmatprep.subr.mxu0 0.0
    %2315 = vmatpush1.msra.mxu0 %v2265
    %2316 = vmatprep.subr.mxu0 0.0
    %2317 = vmatpush1.msra.mxu0 %v2266
    %2318 = vmatprep.subr.mxu0 0.0
    %2319 = vmatpush1.msra.mxu0 %v2267
    %2320 = vmatprep.subr.mxu0 0.0
    %2321 = vmatpush1.msra.mxu0 %v2268
    %2322 = vmatprep.subr.mxu0 0.0
    %2323 = vmatpush1.msra.mxu0 %v2269
    %2324 = vmatprep.subr.mxu0 0.0
    %2325 = vmatpush1.msra.mxu0 %v2270
    %2326 = vmatprep.subr.mxu0 0.0
    %2327 = vmatpush1.msra.mxu0 %v2271
    %2328 = vmatprep.subr.mxu0 0.0
    %2329 = vmatpush1.msra.mxu0 %v2272
    %2330 = vmatprep.subr.mxu0 0.0
    %2331 = vmatpush1.msra.mxu0 %v2273
    %2332 = vmatprep.subr.mxu0 0.0
    %2333 = vmatpush1.msra.mxu0 %v2274
    %2334 = vmatprep.subr.mxu0 0.0
    %2335 = vmatpush1.msra.mxu0 %v2275
    %2336 = vmatprep.subr.mxu0 0.0
    %2337 = vmatpush1.msra.mxu0 %v2276
    %2338 = vmatprep.subr.mxu0 0.0
    %2339 = vmatpush1.msra.mxu0 %v2277
    %2340 = vmatprep.subr.mxu0 0.0
    %2341 = vmatpush1.msra.mxu0 %v2278
    %2342 = vmatprep.subr.mxu0 0.0
    %2343 = vmatpush1.msra.mxu0 %v2279
    %2344 = vmatprep.subr.mxu0 0.0
    %2345 = vmatpush1.msra.mxu0 %v2280
    %2346 = vmatprep.subr.mxu0 0.0
    %2347 = vmatpush1.msra.mxu0 %v2281
    %2348 = vmatprep.subr.mxu0 0.0
    %2349 = vmatpush1.msra.mxu0 %v2282
    %2350 = vmatprep.subr.mxu0 0.0
    %2351 = vmatpush1.msra.mxu0 %v2283
    %2352 = vmatprep.subr.mxu0 0.0
    %2353 = vmatpush1.msra.mxu0 %v2284
    %2354 = vmatprep.subr.mxu0 0.0
    %2355 = vmatpush1.msra.mxu0 %v2285
    %2356 = vmatprep.subr.mxu0 0.0
    %2357 = vmatpush1.msra.mxu0 %v2286
    %2358 = vmatprep.subr.mxu0 0.0
    %2359 = vmatpush1.msra.mxu0 %v2287
    %2360 = vmatprep.mubr.f32.mxu0 %v2252
    %2361 = vmatmul.mubr.f32.gmra.mrb[0].mxu0 %v2251
    %v2362 = vpop.f32.mrb[0].mxu0
    %v2363 = vadd.f32 %v2294, %v2362
    %v2364 = vpop.f32.mrb[0].mxu0
    %2365 = vmatprep.mubr.f32.mxu0 %v2254
    %2366 = vmatmul.mubr.f32.gmra.mrb[0].mxu0 %v2253
    %v2367 = vpop.f32.mrb[0].mxu0
    %v2368 = vadd.f32 %v2294, %v2367
    %v2369 = vpop.f32.mrb[0].mxu0
    %2370 = vdwg.mxu0
    %v2371 = vadd.f32 %v2126, %v2363
    %v2372 = vadd.f32 %v2127, %v2368
    %v2374 = vsel %vm126, %v2371, 0
    %v2377 = vsel %vm126, %v2372, 0
    %2379 = vmatprep.subr.mxu0 %v2130
    %2380 = vmatpush1.msra.mxu0 %v2129
    %2381 = vmatprep.subr.mxu0 %v2132
    %2382 = vmatpush1.msra.mxu0 %v2131
    %2383 = vmatprep.subr.mxu0 %v2134
    %2384 = vmatpush1.msra.mxu0 %v2133
    %2385 = vmatprep.subr.mxu0 %v2136
    %2386 = vmatpush1.msra.mxu0 %v2135
    %2387 = vmatprep.subr.mxu0 %v2138
    %2388 = vmatpush1.msra.mxu0 %v2137
    %2389 = vmatprep.subr.mxu0 %v2140
    %2390 = vmatpush1.msra.mxu0 %v2139
    %2391 = vmatprep.subr.mxu0 %v2142
    %2392 = vmatpush1.msra.mxu0 %v2141
    %2393 = vmatprep.subr.mxu0 %v2144
    %2394 = vmatpush1.msra.mxu0 %v2143
    %2395 = vmatprep.subr.mxu0 0.0
    %2396 = vmatpush1.msra.mxu0 0.0
    %2397 = vmatprep.subr.mxu0 0.0
    %2398 = vmatpush1.msra.mxu0 0.0
    %2399 = vmatprep.subr.mxu0 0.0
    %2400 = vmatpush1.msra.mxu0 0.0
    %2401 = vmatprep.subr.mxu0 0.0
    %2402 = vmatpush1.msra.mxu0 0.0
    %2403 = vmatprep.subr.mxu0 0.0
    %2404 = vmatpush1.msra.mxu0 0.0
    %2405 = vmatprep.subr.mxu0 0.0
    %2406 = vmatpush1.msra.mxu0 0.0
    %2407 = vmatprep.subr.mxu0 0.0
    %2408 = vmatpush1.msra.mxu0 0.0
    %2409 = vmatprep.subr.mxu0 0.0
    %2410 = vmatpush1.msra.mxu0 0.0
    %2411 = vmatprep.subr.mxu0 0.0
    %2412 = vmatpush1.msra.mxu0 0.0
    %2413 = vmatprep.subr.mxu0 0.0
    %2414 = vmatpush1.msra.mxu0 0.0
    %2415 = vmatprep.subr.mxu0 0.0
    %2416 = vmatpush1.msra.mxu0 0.0
    %2417 = vmatprep.subr.mxu0 0.0
    %2418 = vmatpush1.msra.mxu0 0.0
    %2419 = vmatprep.subr.mxu0 0.0
    %2420 = vmatpush1.msra.mxu0 0.0
    %2421 = vmatprep.subr.mxu0 0.0
    %2422 = vmatpush1.msra.mxu0 0.0
    %2423 = vmatprep.subr.mxu0 0.0
    %2424 = vmatpush1.msra.mxu0 0.0
    %2425 = vmatprep.subr.mxu0 0.0
    %2426 = vmatpush1.msra.mxu0 0.0
    %2427 = vmatprep.subr.mxu0 0.0
    %2428 = vmatpush1.msra.mxu0 0.0
    %2429 = vmatprep.subr.mxu0 0.0
    %2430 = vmatpush1.msra.mxu0 0.0
    %2431 = vmatprep.subr.mxu0 0.0
    %2432 = vmatpush1.msra.mxu0 0.0
    %2433 = vmatprep.subr.mxu0 0.0
    %2434 = vmatpush1.msra.mxu0 0.0
    %2435 = vmatprep.subr.mxu0 0.0
    %2436 = vmatpush1.msra.mxu0 0.0
    %2437 = vmatprep.subr.mxu0 0.0
    %2438 = vmatpush1.msra.mxu0 0.0
    %2439 = vmatprep.subr.mxu0 0.0
    %2440 = vmatpush1.msra.mxu0 0.0
    %2441 = vmatprep.subr.mxu0 0.0
    %2442 = vmatpush1.msra.mxu0 0.0
    %2443 = vmatprep.mubr.f32.mxu0 0.0
    %2444 = vmatmul.mubr.f32.gmra.mrb[0].mxu0 %v2374
    %v2445 = vpop.f32.mrb[0].mxu0
    %v2446 = vadd.f32 %v2151, %v2445
    %v2447 = vpop.f32.mrb[0].mxu0
    %v2448 = vadd.f32 %v2155, %v2447
    %2449 = vmatprep.mubr.f32.mxu0 0.0
    %2450 = vmatmul.mubr.f32.gmra.mrb[0].mxu0 %v2377
    %v2451 = vpop.f32.mrb[0].mxu0
    %v2452 = vadd.f32 %v2151, %v2451
    %v2453 = vpop.f32.mrb[0].mxu0
    %v2454 = vadd.f32 %v2155, %v2453
    %2455 = vdwg.mxu0
    %v2456 = vmul.f32 %v2446, 0.5
    %v2457 = vmul.f32 %v2448, 0.5
    %v2458 = vmul.f32 %v2452, 0.5
    %v2459 = vmul.f32 %v2454, 0.5
    %v2460 = vmul.f32 %v2446, 0.70710677
    %v2461 = vmul.f32 %v2448, 0.70710677
    %v2462 = vmul.f32 %v2452, 0.70710677
    %v2463 = vmul.f32 %v2454, 0.70710677
    %v2464 = verf.f32.pop %v2460
    %v2465 = verf.f32.pop %v2461
    %v2466 = verf.f32.pop %v2462
    %v2467 = verf.f32.pop %v2463
    %v2468 = vadd.f32 %v2464, 1.0
    %v2469 = vadd.f32 %v2465, 1.0
    %v2470 = vadd.f32 %v2466, 1.0
    %v2471 = vadd.f32 %v2467, 1.0
    %v2472 = vmul.f32 %v2456, %v2468
    %v2473 = vmul.f32 %v2457, %v2469
    %v2474 = vmul.f32 %v2458, %v2470
    %v2475 = vmul.f32 %v2459, %v2471
    %2476 = vmatprep.subr.mxu0 0.0
    %2477 = vmatpush1.msra.mxu0 %v2256
    %2478 = vmatprep.subr.mxu0 0.0
    %2479 = vmatpush1.msra.mxu0 %v2257
    %2480 = vmatprep.subr.mxu0 0.0
    %2481 = vmatpush1.msra.mxu0 %v2258
    %2482 = vmatprep.subr.mxu0 0.0
    %2483 = vmatpush1.msra.mxu0 %v2259
    %2484 = vmatprep.subr.mxu0 0.0
    %2485 = vmatpush1.msra.mxu0 %v2260
    %2486 = vmatprep.subr.mxu0 0.0
    %2487 = vmatpush1.msra.mxu0 %v2261
    %2488 = vmatprep.subr.mxu0 0.0
    %2489 = vmatpush1.msra.mxu0 %v2262
    %2490 = vmatprep.subr.mxu0 0.0
    %2491 = vmatpush1.msra.mxu0 %v2263
    %2492 = vmatprep.subr.mxu0 0.0
    %2493 = vmatpush1.msra.mxu0 %v2264
    %2494 = vmatprep.subr.mxu0 0.0
    %2495 = vmatpush1.msra.mxu0 %v2265
    %2496 = vmatprep.subr.mxu0 0.0
    %2497 = vmatpush1.msra.mxu0 %v2266
    %2498 = vmatprep.subr.mxu0 0.0
    %2499 = vmatpush1.msra.mxu0 %v2267
    %2500 = vmatprep.subr.mxu0 0.0
    %2501 = vmatpush1.msra.mxu0 %v2268
    %2502 = vmatprep.subr.mxu0 0.0
    %2503 = vmatpush1.msra.mxu0 %v2269
    %2504 = vmatprep.subr.mxu0 0.0
    %2505 = vmatpush1.msra.mxu0 %v2270
    %2506 = vmatprep.subr.mxu0 0.0
    %2507 = vmatpush1.msra.mxu0 %v2271
    %2508 = vmatprep.subr.mxu0 0.0
    %2509 = vmatpush1.msra.mxu0 %v2272
    %2510 = vmatprep.subr.mxu0 0.0
    %2511 = vmatpush1.msra.mxu0 %v2273
    %2512 = vmatprep.subr.mxu0 0.0
    %2513 = vmatpush1.msra.mxu0 %v2274
    %2514 = vmatprep.subr.mxu0 0.0
    %2515 = vmatpush1.msra.mxu0 %v2275
    %2516 = vmatprep.subr.mxu0 0.0
    %2517 = vmatpush1.msra.mxu0 %v2276
    %2518 = vmatprep.subr.mxu0 0.0
    %2519 = vmatpush1.msra.mxu0 %v2277
    %2520 = vmatprep.subr.mxu0 0.0
    %2521 = vmatpush1.msra.mxu0 %v2278
    %2522 = vmatprep.subr.mxu0 0.0
    %2523 = vmatpush1.msra.mxu0 %v2279
    %2524 = vmatprep.subr.mxu0 0.0
    %2525 = vmatpush1.msra.mxu0 %v2280
    %2526 = vmatprep.subr.mxu0 0.0
    %2527 = vmatpush1.msra.mxu0 %v2281
    %2528 = vmatprep.subr.mxu0 0.0
    %2529 = vmatpush1.msra.mxu0 %v2282
    %2530 = vmatprep.subr.mxu0 0.0
    %2531 = vmatpush1.msra.mxu0 %v2283
    %2532 = vmatprep.subr.mxu0 0.0
    %2533 = vmatpush1.msra.mxu0 %v2284
    %2534 = vmatprep.subr.mxu0 0.0
    %2535 = vmatpush1.msra.mxu0 %v2285
    %2536 = vmatprep.subr.mxu0 0.0
    %2537 = vmatpush1.msra.mxu0 %v2286
    %2538 = vmatprep.subr.mxu0 0.0
    %2539 = vmatpush1.msra.mxu0 %v2287
    %2540 = vmatprep.mubr.f32.mxu0 %v2473
    %2541 = vmatmul.mubr.f32.gmra.mrb[0].mxu0 %v2472
    %v2542 = vpop.f32.mrb[0].mxu0
    %v2543 = vadd.f32 %v2294, %v2542
    %v2544 = vpop.f32.mrb[0].mxu0
    %2545 = vmatprep.mubr.f32.mxu0 %v2475
    %2546 = vmatmul.mubr.f32.gmra.mrb[0].mxu0 %v2474
    %v2547 = vpop.f32.mrb[0].mxu0
    %v2548 = vadd.f32 %v2294, %v2547
    %v2549 = vpop.f32.mrb[0].mxu0
    %2550 = vdwg.mxu0
    %v2551 = vadd.f32 %v2126, %v2543
    %v2552 = vadd.f32 %v2127, %v2548
    %s2553 = scalar_lea.vmem %s3, 2
    %v2554 = vld [vmem:[%s2553] sm:$0x1]
    %s2555 = scalar_lea.vmem %s4, 2
    %v2556 = vld [vmem:[%s2555] sm:$0x1]
    %v2557 = vsel %vm126, %v2551, 0.0
    %2558 = vadd.xlane.f32.xlu0 %v2557
    %v2559 = vpop.xlane.xlu0 %2558
    %v2560 = vsel %vm126, %v2552, 0.0
    %2561 = vadd.xlane.f32.xlu0 %v2560
    %v2562 = vpop.xlane.xlu0 %2561
    %v2563 = vmul.f32 %v2559, %v216
    %v2564 = vmul.f32 %v2562, %v216
    %v2565 = vsub.f32 %v2551, %v2563
    %v2566 = vsub.f32 %v2552, %v2564
    %v2567 = vmul.f32 %v2565, %v2565
    %v2568 = vmul.f32 %v2566, %v2566
    %v2569 = vsel %vm126, %v2567, 0.0
    %2570 = vadd.xlane.f32.xlu0 %v2569
    %v2571 = vpop.xlane.xlu0 %2570
    %v2572 = vsel %vm126, %v2568, 0.0
    %2573 = vadd.xlane.f32.xlu0 %v2572
    %v2574 = vpop.xlane.xlu0 %2573
    %v2575 = vmul.f32 %v2571, %v216
    %v2576 = vmul.f32 %v2574, %v216
    %v2577 = vadd.f32 %v2575, 1e-05
    %v2578 = vadd.f32 %v2576, 1e-05
    %v2579 = vrsqrt.pop %v2577
    %v2580 = vrsqrt.pop %v2578
    %v2581 = vmul.f32 %v2565, %v2579
    %v2582 = vmul.f32 %v2566, %v2580
    %v2584 = vlaneseq
    %v2585 = vshrl.u32 %v2584, 7
    %v2586 = vsub.s32 0, %v2585
    %v2587 = vrot.slane %v2554, %v2586
    %v2589 = vmul.f32 %v2581, %v2587
    %v2590 = vmul.f32 %v2582, %v2587
    %v2592 = vlaneseq
    %v2593 = vshrl.u32 %v2592, 7
    %v2594 = vsub.s32 0, %v2593
    %v2595 = vrot.slane %v2556, %v2594
    %v2597 = vadd.f32 %v2589, %v2595
    %v2598 = vadd.f32 %v2590, %v2595
    %s2599 = scalar_lea.vmem %s5, 128
    %v2600 = vld [vmem:[%s2599] sm:$0xff]
    %v2601 = vld [vmem:[%s2599 + $0x8] sm:$0xff]
    %v2602 = vld [vmem:[%s2599 + $0x10] sm:$0xff]
    %v2603 = vld [vmem:[%s2599 + $0x18] sm:$0xff]
    %v2604 = vld [vmem:[%s2599 + $0x20] sm:$0xff]
    %v2605 = vld [vmem:[%s2599 + $0x28] sm:$0xff]
    %v2606 = vld [vmem:[%s2599 + $0x30] sm:$0xff]
    %v2607 = vld [vmem:[%s2599 + $0x38] sm:$0xff]
    %s2608 = scalar_lea.vmem %s6, 2
    %v2609 = vld [vmem:[%s2608] sm:$0x1]
    %v2611 = vlaneseq
    %v2612 = vshrl.u32 %v2611, 7
    %v2613 = vsub.s32 0, %v2612
    %v2614 = vrot.slane %v2609, %v2613
    %v2617 = vsel %vm126, %v2597, 0
    %v2620 = vsel %vm126, %v2598, 0
    %2622 = vmatprep.subr.mxu0 0.0
    %2623 = vmatpush1.msra.mxu0 %v2600
    %2624 = vmatprep.subr.mxu0 0.0
    %2625 = vmatpush1.msra.mxu0 %v2601
    %2626 = vmatprep.subr.mxu0 0.0
    %2627 = vmatpush1.msra.mxu0 %v2602
    %2628 = vmatprep.subr.mxu0 0.0
    %2629 = vmatpush1.msra.mxu0 %v2603
    %2630 = vmatprep.subr.mxu0 0.0
    %2631 = vmatpush1.msra.mxu0 %v2604
    %2632 = vmatprep.subr.mxu0 0.0
    %2633 = vmatpush1.msra.mxu0 %v2605
    %2634 = vmatprep.subr.mxu0 0.0
    %2635 = vmatpush1.msra.mxu0 %v2606
    %2636 = vmatprep.subr.mxu0 0.0
    %2637 = vmatpush1.msra.mxu0 %v2607
    %2638 = vmatprep.subr.mxu0 0.0
    %2639 = vmatpush1.msra.mxu0 0.0
    %2640 = vmatprep.subr.mxu0 0.0
    %2641 = vmatpush1.msra.mxu0 0.0
    %2642 = vmatprep.subr.mxu0 0.0
    %2643 = vmatpush1.msra.mxu0 0.0
    %2644 = vmatprep.subr.mxu0 0.0
    %2645 = vmatpush1.msra.mxu0 0.0
    %2646 = vmatprep.subr.mxu0 0.0
    %2647 = vmatpush1.msra.mxu0 0.0
    %2648 = vmatprep.subr.mxu0 0.0
    %2649 = vmatpush1.msra.mxu0 0.0
    %2650 = vmatprep.subr.mxu0 0.0
    %2651 = vmatpush1.msra.mxu0 0.0
    %2652 = vmatprep.subr.mxu0 0.0
    %2653 = vmatpush1.msra.mxu0 0.0
    %2654 = vmatprep.subr.mxu0 0.0
    %2655 = vmatpush1.msra.mxu0 0.0
    %2656 = vmatprep.subr.mxu0 0.0
    %2657 = vmatpush1.msra.mxu0 0.0
    %2658 = vmatprep.subr.mxu0 0.0
    %2659 = vmatpush1.msra.mxu0 0.0
    %2660 = vmatprep.subr.mxu0 0.0
    %2661 = vmatpush1.msra.mxu0 0.0
    %2662 = vmatprep.subr.mxu0 0.0
    %2663 = vmatpush1.msra.mxu0 0.0
    %2664 = vmatprep.subr.mxu0 0.0
    %2665 = vmatpush1.msra.mxu0 0.0
    %2666 = vmatprep.subr.mxu0 0.0
    %2667 = vmatpush1.msra.mxu0 0.0
    %2668 = vmatprep.subr.mxu0 0.0
    %2669 = vmatpush1.msra.mxu0 0.0
    %2670 = vmatprep.subr.mxu0 0.0
    %2671 = vmatpush1.msra.mxu0 0.0
    %2672 = vmatprep.subr.mxu0 0.0
    %2673 = vmatpush1.msra.mxu0 0.0
    %2674 = vmatprep.subr.mxu0 0.0
    %2675 = vmatpush1.msra.mxu0 0.0
    %2676 = vmatprep.subr.mxu0 0.0
    %2677 = vmatpush1.msra.mxu0 0.0
    %2678 = vmatprep.subr.mxu0 0.0
    %2679 = vmatpush1.msra.mxu0 0.0
    %2680 = vmatprep.subr.mxu0 0.0
    %2681 = vmatpush1.msra.mxu0 0.0
    %2682 = vmatprep.subr.mxu0 0.0
    %2683 = vmatpush1.msra.mxu0 0.0
    %2684 = vmatprep.subr.mxu0 0.0
    %2685 = vmatpush1.msra.mxu0 0.0
    %2686 = vmatprep.mubr.f32.mxu0 0.0
    %2687 = vmatmul.mubr.f32.gmra.mrb[0].mxu0 %v2617
    %v2688 = vpop.f32.mrb[0].mxu0
    %v2689 = vadd.f32 %v2614, %v2688
    %v2690 = vpop.f32.mrb[0].mxu0
    %2691 = vmatprep.mubr.f32.mxu0 0.0
    %2692 = vmatmul.mubr.f32.gmra.mrb[0].mxu0 %v2620
    %v2693 = vpop.f32.mrb[0].mxu0
    %v2694 = vadd.f32 %v2614, %v2693
    %v2695 = vpop.f32.mrb[0].mxu0
    %2696 = vdwg.mxu0
    %v2697 = vmul.f32 %v2689, 0.25
    %v2698 = vmul.f32 %v2694, 0.25
    %s2699 = scalar_lea.vmem %s7, 128
    %v2700 = vld [vmem:[%s2699] sm:$0xff]
    %v2701 = vld [vmem:[%s2699 + $0x8] sm:$0xff]
    %v2702 = vld [vmem:[%s2699 + $0x10] sm:$0xff]
    %v2703 = vld [vmem:[%s2699 + $0x18] sm:$0xff]
    %v2704 = vld [vmem:[%s2699 + $0x20] sm:$0xff]
    %v2705 = vld [vmem:[%s2699 + $0x28] sm:$0xff]
    %v2706 = vld [vmem:[%s2699 + $0x30] sm:$0xff]
    %v2707 = vld [vmem:[%s2699 + $0x38] sm:$0xff]
    %s2708 = scalar_lea.vmem [#allocation2], 2
    %v2709 = vld [vmem:[%s2708] sm:$0x1]
    %v2711 = vlaneseq
    %v2712 = vshrl.u32 %v2711, 7
    %v2713 = vsub.s32 0, %v2712
    %v2714 = vrot.slane %v2709, %v2713
    %2716 = vmatprep.subr.mxu0 0.0
    %2717 = vmatpush1.msra.mxu0 %v2700
    %2718 = vmatprep.subr.mxu0 0.0
    %2719 = vmatpush1.msra.mxu0 %v2701
    %2720 = vmatprep.subr.mxu0 0.0
    %2721 = vmatpush1.msra.mxu0 %v2702
    %2722 = vmatprep.subr.mxu0 0.0
    %2723 = vmatpush1.msra.mxu0 %v2703
    %2724 = vmatprep.subr.mxu0 0.0
    %2725 = vmatpush1.msra.mxu0 %v2704
    %2726 = vmatprep.subr.mxu0 0.0
    %2727 = vmatpush1.msra.mxu0 %v2705
    %2728 = vmatprep.subr.mxu0 0.0
    %2729 = vmatpush1.msra.mxu0 %v2706
    %2730 = vmatprep.subr.mxu0 0.0
    %2731 = vmatpush1.msra.mxu0 %v2707
    %2732 = vmatprep.subr.mxu0 0.0
    %2733 = vmatpush1.msra.mxu0 0.0
    %2734 = vmatprep.subr.mxu0 0.0
    %2735 = vmatpush1.msra.mxu0 0.0
    %2736 = vmatprep.subr.mxu0 0.0
    %2737 = vmatpush1.msra.mxu0 0.0
    %2738 = vmatprep.subr.mxu0 0.0
    %2739 = vmatpush1.msra.mxu0 0.0
    %2740 = vmatprep.subr.mxu0 0.0
    %2741 = vmatpush1.msra.mxu0 0.0
    %2742 = vmatprep.subr.mxu0 0.0
    %2743 = vmatpush1.msra.mxu0 0.0
    %2744 = vmatprep.subr.mxu0 0.0
    %2745 = vmatpush1.msra.mxu0 0.0
    %2746 = vmatprep.subr.mxu0 0.0
    %2747 = vmatpush1.msra.mxu0 0.0
    %2748 = vmatprep.subr.mxu0 0.0
    %2749 = vmatpush1.msra.mxu0 0.0
    %2750 = vmatprep.subr.mxu0 0.0
    %2751 = vmatpush1.msra.mxu0 0.0
    %2752 = vmatprep.subr.mxu0 0.0
    %2753 = vmatpush1.msra.mxu0 0.0
    %2754 = vmatprep.subr.mxu0 0.0
    %2755 = vmatpush1.msra.mxu0 0.0
    %2756 = vmatprep.subr.mxu0 0.0
    %2757 = vmatpush1.msra.mxu0 0.0
    %2758 = vmatprep.subr.mxu0 0.0
    %2759 = vmatpush1.msra.mxu0 0.0
    %2760 = vmatprep.subr.mxu0 0.0
    %2761 = vmatpush1.msra.mxu0 0.0
    %2762 = vmatprep.subr.mxu0 0.0
    %2763 = vmatpush1.msra.mxu0 0.0
    %2764 = vmatprep.subr.mxu0 0.0
    %2765 = vmatpush1.msra.mxu0 0.0
    %2766 = vmatprep.subr.mxu0 0.0
    %2767 = vmatpush1.msra.mxu0 0.0
    %2768 = vmatprep.subr.mxu0 0.0
    %2769 = vmatpush1.msra.mxu0 0.0
    %2770 = vmatprep.subr.mxu0 0.0
    %2771 = vmatpush1.msra.mxu0 0.0
    %2772 = vmatprep.subr.mxu0 0.0
    %2773 = vmatpush1.msra.mxu0 0.0
    %2774 = vmatprep.subr.mxu0 0.0
    %2775 = vmatpush1.msra.mxu0 0.0
    %2776 = vmatprep.subr.mxu0 0.0
    %2777 = vmatpush1.msra.mxu0 0.0
    %2778 = vmatprep.subr.mxu0 0.0
    %2779 = vmatpush1.msra.mxu0 0.0
    %2780 = vmatprep.mubr.f32.mxu0 0.0
    %2781 = vmatmul.mubr.f32.gmra.mrb[0].mxu0 %v2617
    %v2782 = vpop.f32.mrb[0].mxu0
    %v2783 = vadd.f32 %v2714, %v2782
    %v2784 = vpop.f32.mrb[0].mxu0
    %2785 = vmatprep.mubr.f32.mxu0 0.0
    %2786 = vmatmul.mubr.f32.gmra.mrb[0].mxu0 %v2620
    %v2787 = vpop.f32.mrb[0].mxu0
    %v2788 = vadd.f32 %v2714, %v2787
    %v2789 = vpop.f32.mrb[0].mxu0
    %2790 = vdwg.mxu0
    %s2791 = scalar_lea.vmem %s9, 128
    %v2792 = vld [vmem:[%s2791] sm:$0xff]
    %v2793 = vld [vmem:[%s2791 + $0x8] sm:$0xff]
    %v2794 = vld [vmem:[%s2791 + $0x10] sm:$0xff]
    %v2795 = vld [vmem:[%s2791 + $0x18] sm:$0xff]
    %v2796 = vld [vmem:[%s2791 + $0x20] sm:$0xff]
    %v2797 = vld [vmem:[%s2791 + $0x28] sm:$0xff]
    %v2798 = vld [vmem:[%s2791 + $0x30] sm:$0xff]
    %v2799 = vld [vmem:[%s2791 + $0x38] sm:$0xff]
    %s2800 = scalar_lea.vmem [#allocation5], 2
    %v2801 = vld [vmem:[%s2800] sm:$0x1]
    %v2803 = vlaneseq
    %v2804 = vshrl.u32 %v2803, 7
    %v2805 = vsub.s32 0, %v2804
    %v2806 = vrot.slane %v2801, %v2805
    %2808 = vmatprep.subr.mxu0 0.0
    %2809 = vmatpush1.msra.mxu0 %v2792
    %2810 = vmatprep.subr.mxu0 0.0
    %2811 = vmatpush1.msra.mxu0 %v2793
    %2812 = vmatprep.subr.mxu0 0.0
    %2813 = vmatpush1.msra.mxu0 %v2794
    %2814 = vmatprep.subr.mxu0 0.0
    %2815 = vmatpush1.msra.mxu0 %v2795
    %2816 = vmatprep.subr.mxu0 0.0
    %2817 = vmatpush1.msra.mxu0 %v2796
    %2818 = vmatprep.subr.mxu0 0.0
    %2819 = vmatpush1.msra.mxu0 %v2797
    %2820 = vmatprep.subr.mxu0 0.0
    %2821 = vmatpush1.msra.mxu0 %v2798
    %2822 = vmatprep.subr.mxu0 0.0
    %2823 = vmatpush1.msra.mxu0 %v2799
    %2824 = vmatprep.subr.mxu0 0.0
    %2825 = vmatpush1.msra.mxu0 0.0
    %2826 = vmatprep.subr.mxu0 0.0
    %2827 = vmatpush1.msra.mxu0 0.0
    %2828 = vmatprep.subr.mxu0 0.0
    %2829 = vmatpush1.msra.mxu0 0.0
    %2830 = vmatprep.subr.mxu0 0.0
    %2831 = vmatpush1.msra.mxu0 0.0
    %2832 = vmatprep.subr.mxu0 0.0
    %2833 = vmatpush1.msra.mxu0 0.0
    %2834 = vmatprep.subr.mxu0 0.0
    %2835 = vmatpush1.msra.mxu0 0.0
    %2836 = vmatprep.subr.mxu0 0.0
    %2837 = vmatpush1.msra.mxu0 0.0
    %2838 = vmatprep.subr.mxu0 0.0
    %2839 = vmatpush1.msra.mxu0 0.0
    %2840 = vmatprep.subr.mxu0 0.0
    %2841 = vmatpush1.msra.mxu0 0.0
    %2842 = vmatprep.subr.mxu0 0.0
    %2843 = vmatpush1.msra.mxu0 0.0
    %2844 = vmatprep.subr.mxu0 0.0
    %2845 = vmatpush1.msra.mxu0 0.0
    %2846 = vmatprep.subr.mxu0 0.0
    %2847 = vmatpush1.msra.mxu0 0.0
    %2848 = vmatprep.subr.mxu0 0.0
    %2849 = vmatpush1.msra.mxu0 0.0
    %2850 = vmatprep.subr.mxu0 0.0
    %2851 = vmatpush1.msra.mxu0 0.0
    %2852 = vmatprep.subr.mxu0 0.0
    %2853 = vmatpush1.msra.mxu0 0.0
    %2854 = vmatprep.subr.mxu0 0.0
    %2855 = vmatpush1.msra.mxu0 0.0
    %2856 = vmatprep.subr.mxu0 0.0
    %2857 = vmatpush1.msra.mxu0 0.0
    %2858 = vmatprep.subr.mxu0 0.0
    %2859 = vmatpush1.msra.mxu0 0.0
    %2860 = vmatprep.subr.mxu0 0.0
    %2861 = vmatpush1.msra.mxu0 0.0
    %2862 = vmatprep.subr.mxu0 0.0
    %2863 = vmatpush1.msra.mxu0 0.0
    %2864 = vmatprep.subr.mxu0 0.0
    %2865 = vmatpush1.msra.mxu0 0.0
    %2866 = vmatprep.subr.mxu0 0.0
    %2867 = vmatpush1.msra.mxu0 0.0
    %2868 = vmatprep.subr.mxu0 0.0
    %2869 = vmatpush1.msra.mxu0 0.0
    %2870 = vmatprep.subr.mxu0 0.0
    %2871 = vmatpush1.msra.mxu0 0.0
    %2872 = vmatprep.mubr.f32.mxu0 0.0
    %2873 = vmatmul.mubr.f32.gmra.mrb[0].mxu0 %v2617
    %v2874 = vpop.f32.mrb[0].mxu0
    %v2875 = vadd.f32 %v2806, %v2874
    %v2876 = vpop.f32.mrb[0].mxu0
    %2877 = vmatprep.mubr.f32.mxu0 0.0
    %2878 = vmatmul.mubr.f32.gmra.mrb[0].mxu0 %v2620
    %v2879 = vpop.f32.mrb[0].mxu0
    %v2880 = vadd.f32 %v2806, %v2879
    %v2881 = vpop.f32.mrb[0].mxu0
    %2882 = vdwg.mxu0
    %v2883 = vmul.f32 %v2697, %v2783
    %v2885 = vsel %vm126, %v2883, 0
    %2887 = vmatprep.subr.mxu0 0.0
    %2888 = vmatpush1.msra.mxu0 %v101
    %2889 = vmatprep.subr.mxu0 0.0
    %2890 = vmatpush1.msra.mxu0 %v102
    %2891 = vmatprep.subr.mxu0 0.0
    %2892 = vmatpush1.msra.mxu0 %v103
    %2893 = vmatprep.subr.mxu0 0.0
    %2894 = vmatpush1.msra.mxu0 %v104
    %2895 = vmatprep.subr.mxu0 0.0
    %2896 = vmatpush1.msra.mxu0 %v105
    %2897 = vmatprep.subr.mxu0 0.0
    %2898 = vmatpush1.msra.mxu0 %v106
    %2899 = vmatprep.subr.mxu0 0.0
    %2900 = vmatpush1.msra.mxu0 %v107
    %2901 = vmatprep.subr.mxu0 0.0
    %2902 = vmatpush1.msra.mxu0 %v108
    %2903 = vmatprep.subr.mxu0 0.0
    %2904 = vmatpush1.msra.mxu0 0.0
    %2905 = vmatprep.subr.mxu0 0.0
    %2906 = vmatpush1.msra.mxu0 0.0
    %2907 = vmatprep.subr.mxu0 0.0
    %2908 = vmatpush1.msra.mxu0 0.0
    %2909 = vmatprep.subr.mxu0 0.0
    %2910 = vmatpush1.msra.mxu0 0.0
    %2911 = vmatprep.subr.mxu0 0.0
    %2912 = vmatpush1.msra.mxu0 0.0
    %2913 = vmatprep.subr.mxu0 0.0
    %2914 = vmatpush1.msra.mxu0 0.0
    %2915 = vmatprep.subr.mxu0 0.0
    %2916 = vmatpush1.msra.mxu0 0.0
    %2917 = vmatprep.subr.mxu0 0.0
    %2918 = vmatpush1.msra.mxu0 0.0
    %2919 = vmatprep.subr.mxu0 0.0
    %2920 = vmatpush1.msra.mxu0 0.0
    %2921 = vmatprep.subr.mxu0 0.0
    %2922 = vmatpush1.msra.mxu0 0.0
    %2923 = vmatprep.subr.mxu0 0.0
    %2924 = vmatpush1.msra.mxu0 0.0
    %2925 = vmatprep.subr.mxu0 0.0
    %2926 = vmatpush1.msra.mxu0 0.0
    %2927 = vmatprep.subr.mxu0 0.0
    %2928 = vmatpush1.msra.mxu0 0.0
    %2929 = vmatprep.subr.mxu0 0.0
    %2930 = vmatpush1.msra.mxu0 0.0
    %2931 = vmatprep.subr.mxu0 0.0
    %2932 = vmatpush1.msra.mxu0 0.0
    %2933 = vmatprep.subr.mxu0 0.0
    %2934 = vmatpush1.msra.mxu0 0.0
    %2935 = vmatprep.subr.mxu0 0.0
    %2936 = vmatpush1.msra.mxu0 0.0
    %2937 = vmatprep.subr.mxu0 0.0
    %2938 = vmatpush1.msra.mxu0 0.0
    %2939 = vmatprep.subr.mxu0 0.0
    %2940 = vmatpush1.msra.mxu0 0.0
    %2941 = vmatprep.subr.mxu0 0.0
    %2942 = vmatpush1.msra.mxu0 0.0
    %2943 = vmatprep.subr.mxu0 0.0
    %2944 = vmatpush1.msra.mxu0 0.0
    %2945 = vmatprep.subr.mxu0 0.0
    %2946 = vmatpush1.msra.mxu0 0.0
    %2947 = vmatprep.subr.mxu0 0.0
    %2948 = vmatpush1.msra.mxu0 0.0
    %2949 = vmatprep.subr.mxu0 0.0
    %2950 = vmatpush1.msra.mxu0 0.0
    %2951 = vmatprep.mubr.f32.mxu0 0.0
    %2952 = vmatmul.mubr.f32.gmra.mrb[0].mxu0 %v2885
    %v2953 = vpop.f32.mrb[0].mxu0
    %v2954 = vadd.f32 0.0, %v2953
    %v2955 = vpop.f32.mrb[0].mxu0
    %2956 = vdwg.mxu0
    %v2957 = vmul.f32 %v2697, %v2788
    %v2959 = vsel %vm126, %v2957, 0
    %2961 = vmatprep.subr.mxu0 0.0
    %2962 = vmatpush1.msra.mxu0 %v101
    %2963 = vmatprep.subr.mxu0 0.0
    %2964 = vmatpush1.msra.mxu0 %v102
    %2965 = vmatprep.subr.mxu0 0.0
    %2966 = vmatpush1.msra.mxu0 %v103
    %2967 = vmatprep.subr.mxu0 0.0
    %2968 = vmatpush1.msra.mxu0 %v104
    %2969 = vmatprep.subr.mxu0 0.0
    %2970 = vmatpush1.msra.mxu0 %v105
    %2971 = vmatprep.subr.mxu0 0.0
    %2972 = vmatpush1.msra.mxu0 %v106
    %2973 = vmatprep.subr.mxu0 0.0
    %2974 = vmatpush1.msra.mxu0 %v107
    %2975 = vmatprep.subr.mxu0 0.0
    %2976 = vmatpush1.msra.mxu0 %v108
    %2977 = vmatprep.subr.mxu0 0.0
    %2978 = vmatpush1.msra.mxu0 0.0
    %2979 = vmatprep.subr.mxu0 0.0
    %2980 = vmatpush1.msra.mxu0 0.0
    %2981 = vmatprep.subr.mxu0 0.0
    %2982 = vmatpush1.msra.mxu0 0.0
    %2983 = vmatprep.subr.mxu0 0.0
    %2984 = vmatpush1.msra.mxu0 0.0
    %2985 = vmatprep.subr.mxu0 0.0
    %2986 = vmatpush1.msra.mxu0 0.0
    %2987 = vmatprep.subr.mxu0 0.0
    %2988 = vmatpush1.msra.mxu0 0.0
    %2989 = vmatprep.subr.mxu0 0.0
    %2990 = vmatpush1.msra.mxu0 0.0
    %2991 = vmatprep.subr.mxu0 0.0
    %2992 = vmatpush1.msra.mxu0 0.0
    %2993 = vmatprep.subr.mxu0 0.0
    %2994 = vmatpush1.msra.mxu0 0.0
    %2995 = vmatprep.subr.mxu0 0.0
    %2996 = vmatpush1.msra.mxu0 0.0
    %2997 = vmatprep.subr.mxu0 0.0
    %2998 = vmatpush1.msra.mxu0 0.0
    %2999 = vmatprep.subr.mxu0 0.0
    %3000 = vmatpush1.msra.mxu0 0.0
    %3001 = vmatprep.subr.mxu0 0.0
    %3002 = vmatpush1.msra.mxu0 0.0
    %3003 = vmatprep.subr.mxu0 0.0
    %3004 = vmatpush1.msra.mxu0 0.0
    %3005 = vmatprep.subr.mxu0 0.0
    %3006 = vmatpush1.msra.mxu0 0.0
    %3007 = vmatprep.subr.mxu0 0.0
    %3008 = vmatpush1.msra.mxu0 0.0
    %3009 = vmatprep.subr.mxu0 0.0
    %3010 = vmatpush1.msra.mxu0 0.0
    %3011 = vmatprep.subr.mxu0 0.0
    %3012 = vmatpush1.msra.mxu0 0.0
    %3013 = vmatprep.subr.mxu0 0.0
    %3014 = vmatpush1.msra.mxu0 0.0
    %3015 = vmatprep.subr.mxu0 0.0
    %3016 = vmatpush1.msra.mxu0 0.0
    %3017 = vmatprep.subr.mxu0 0.0
    %3018 = vmatpush1.msra.mxu0 0.0
    %3019 = vmatprep.subr.mxu0 0.0
    %3020 = vmatpush1.msra.mxu0 0.0
    %3021 = vmatprep.subr.mxu0 0.0
    %3022 = vmatpush1.msra.mxu0 0.0
    %3023 = vmatprep.subr.mxu0 0.0
    %3024 = vmatpush1.msra.mxu0 0.0
    %3025 = vmatprep.mubr.f32.mxu0 0.0
    %3026 = vmatmul.mubr.f32.gmra.mrb[0].mxu0 %v2959
    %v3027 = vpop.f32.mrb[0].mxu0
    %v3028 = vadd.f32 0.0, %v3027
    %v3029 = vpop.f32.mrb[0].mxu0
    %3030 = vdwg.mxu0
    %v3031 = vmax.f32 %v2954, %v3028
    %v3032 = vsub.f32 %v2954, %v3031
    %v3033 = vmul.f32 %v3032, 1.442695
    %v3034 = vpow.pop %v3033
    %v3035 = vsub.f32 %v3028, %v3031
    %v3036 = vmul.f32 %v3035, 1.442695
    %v3037 = vpow.pop %v3036
    %v3038 = vadd.f32 %v3034, %v3037
    %v3039 = vrcp.pop %v3038
    %v3040 = vmul.f32 %v3034, %v3039
    %v3041 = vmul.f32 %v3040, %v2875
    %v3042 = vmul.f32 %v3037, %v3039
    %v3043 = vmul.f32 %v3042, %v2880
    %v3044 = vadd.f32 %v3041, %v3043
    %v3045 = vmul.f32 %v2698, %v2783
    %v3047 = vsel %vm126, %v3045, 0
    %3049 = vmatprep.subr.mxu0 0.0
    %3050 = vmatpush1.msra.mxu0 %v101
    %3051 = vmatprep.subr.mxu0 0.0
    %3052 = vmatpush1.msra.mxu0 %v102
    %3053 = vmatprep.subr.mxu0 0.0
    %3054 = vmatpush1.msra.mxu0 %v103
    %3055 = vmatprep.subr.mxu0 0.0
    %3056 = vmatpush1.msra.mxu0 %v104
    %3057 = vmatprep.subr.mxu0 0.0
    %3058 = vmatpush1.msra.mxu0 %v105
    %3059 = vmatprep.subr.mxu0 0.0
    %3060 = vmatpush1.msra.mxu0 %v106
    %3061 = vmatprep.subr.mxu0 0.0
    %3062 = vmatpush1.msra.mxu0 %v107
    %3063 = vmatprep.subr.mxu0 0.0
    %3064 = vmatpush1.msra.mxu0 %v108
    %3065 = vmatprep.subr.mxu0 0.0
    %3066 = vmatpush1.msra.mxu0 0.0
    %3067 = vmatprep.subr.mxu0 0.0
    %3068 = vmatpush1.msra.mxu0 0.0
    %3069 = vmatprep.subr.mxu0 0.0
    %3070 = vmatpush1.msra.mxu0 0.0
    %3071 = vmatprep.subr.mxu0 0.0
    %3072 = vmatpush1.msra.mxu0 0.0
    %3073 = vmatprep.subr.mxu0 0.0
    %3074 = vmatpush1.msra.mxu0 0.0
    %3075 = vmatprep.subr.mxu0 0.0
    %3076 = vmatpush1.msra.mxu0 0.0
    %3077 = vmatprep.subr.mxu0 0.0
    %3078 = vmatpush1.msra.mxu0 0.0
    %3079 = vmatprep.subr.mxu0 0.0
    %3080 = vmatpush1.msra.mxu0 0.0
    %3081 = vmatprep.subr.mxu0 0.0
    %3082 = vmatpush1.msra.mxu0 0.0
    %3083 = vmatprep.subr.mxu0 0.0
    %3084 = vmatpush1.msra.mxu0 0.0
    %3085 = vmatprep.subr.mxu0 0.0
    %3086 = vmatpush1.msra.mxu0 0.0
    %3087 = vmatprep.subr.mxu0 0.0
    %3088 = vmatpush1.msra.mxu0 0.0
    %3089 = vmatprep.subr.mxu0 0.0
    %3090 = vmatpush1.msra.mxu0 0.0
    %3091 = vmatprep.subr.mxu0 0.0
    %3092 = vmatpush1.msra.mxu0 0.0
    %3093 = vmatprep.subr.mxu0 0.0
    %3094 = vmatpush1.msra.mxu0 0.0
    %3095 = vmatprep.subr.mxu0 0.0
    %3096 = vmatpush1.msra.mxu0 0.0
    %3097 = vmatprep.subr.mxu0 0.0
    %3098 = vmatpush1.msra.mxu0 0.0
    %3099 = vmatprep.subr.mxu0 0.0
    %3100 = vmatpush1.msra.mxu0 0.0
    %3101 = vmatprep.subr.mxu0 0.0
    %3102 = vmatpush1.msra.mxu0 0.0
    %3103 = vmatprep.subr.mxu0 0.0
    %3104 = vmatpush1.msra.mxu0 0.0
    %3105 = vmatprep.subr.mxu0 0.0
    %3106 = vmatpush1.msra.mxu0 0.0
    %3107 = vmatprep.subr.mxu0 0.0
    %3108 = vmatpush1.msra.mxu0 0.0
    %3109 = vmatprep.subr.mxu0 0.0
    %3110 = vmatpush1.msra.mxu0 0.0
    %3111 = vmatprep.subr.mxu0 0.0
    %3112 = vmatpush1.msra.mxu0 0.0
    %3113 = vmatprep.mubr.f32.mxu0 0.0
    %3114 = vmatmul.mubr.f32.gmra.mrb[0].mxu0 %v3047
    %v3115 = vpop.f32.mrb[0].mxu0
    %v3116 = vadd.f32 0.0, %v3115
    %v3117 = vpop.f32.mrb[0].mxu0
    %3118 = vdwg.mxu0
    %v3119 = vmul.f32 %v2698, %v2788
    %v3121 = vsel %vm126, %v3119, 0
    %3123 = vmatprep.subr.mxu0 0.0
    %3124 = vmatpush1.msra.mxu0 %v101
    %3125 = vmatprep.subr.mxu0 0.0
    %3126 = vmatpush1.msra.mxu0 %v102
    %3127 = vmatprep.subr.mxu0 0.0
    %3128 = vmatpush1.msra.mxu0 %v103
    %3129 = vmatprep.subr.mxu0 0.0
    %3130 = vmatpush1.msra.mxu0 %v104
    %3131 = vmatprep.subr.mxu0 0.0
    %3132 = vmatpush1.msra.mxu0 %v105
    %3133 = vmatprep.subr.mxu0 0.0
    %3134 = vmatpush1.msra.mxu0 %v106
    %3135 = vmatprep.subr.mxu0 0.0
    %3136 = vmatpush1.msra.mxu0 %v107
    %3137 = vmatprep.subr.mxu0 0.0
    %3138 = vmatpush1.msra.mxu0 %v108
    %3139 = vmatprep.subr.mxu0 0.0
    %3140 = vmatpush1.msra.mxu0 0.0
    %3141 = vmatprep.subr.mxu0 0.0
    %3142 = vmatpush1.msra.mxu0 0.0
    %3143 = vmatprep.subr.mxu0 0.0
    %3144 = vmatpush1.msra.mxu0 0.0
    %3145 = vmatprep.subr.mxu0 0.0
    %3146 = vmatpush1.msra.mxu0 0.0
    %3147 = vmatprep.subr.mxu0 0.0
    %3148 = vmatpush1.msra.mxu0 0.0
    %3149 = vmatprep.subr.mxu0 0.0
    %3150 = vmatpush1.msra.mxu0 0.0
    %3151 = vmatprep.subr.mxu0 0.0
    %3152 = vmatpush1.msra.mxu0 0.0
    %3153 = vmatprep.subr.mxu0 0.0
    %3154 = vmatpush1.msra.mxu0 0.0
    %3155 = vmatprep.subr.mxu0 0.0
    %3156 = vmatpush1.msra.mxu0 0.0
    %3157 = vmatprep.subr.mxu0 0.0
    %3158 = vmatpush1.msra.mxu0 0.0
    %3159 = vmatprep.subr.mxu0 0.0
    %3160 = vmatpush1.msra.mxu0 0.0
    %3161 = vmatprep.subr.mxu0 0.0
    %3162 = vmatpush1.msra.mxu0 0.0
    %3163 = vmatprep.subr.mxu0 0.0
    %3164 = vmatpush1.msra.mxu0 0.0
    %3165 = vmatprep.subr.mxu0 0.0
    %3166 = vmatpush1.msra.mxu0 0.0
    %3167 = vmatprep.subr.mxu0 0.0
    %3168 = vmatpush1.msra.mxu0 0.0
    %3169 = vmatprep.subr.mxu0 0.0
    %3170 = vmatpush1.msra.mxu0 0.0
    %3171 = vmatprep.subr.mxu0 0.0
    %3172 = vmatpush1.msra.mxu0 0.0
    %3173 = vmatprep.subr.mxu0 0.0
    %3174 = vmatpush1.msra.mxu0 0.0
    %3175 = vmatprep.subr.mxu0 0.0
    %3176 = vmatpush1.msra.mxu0 0.0
    %3177 = vmatprep.subr.mxu0 0.0
    %3178 = vmatpush1.msra.mxu0 0.0
    %3179 = vmatprep.subr.mxu0 0.0
    %3180 = vmatpush1.msra.mxu0 0.0
    %3181 = vmatprep.subr.mxu0 0.0
    %3182 = vmatpush1.msra.mxu0 0.0
    %3183 = vmatprep.subr.mxu0 0.0
    %3184 = vmatpush1.msra.mxu0 0.0
    %3185 = vmatprep.subr.mxu0 0.0
    %3186 = vmatpush1.msra.mxu0 0.0
    %3187 = vmatprep.mubr.f32.mxu0 0.0
    %3188 = vmatmul.mubr.f32.gmra.mrb[0].mxu0 %v3121
    %v3189 = vpop.f32.mrb[0].mxu0
    %v3190 = vadd.f32 0.0, %v3189
    %v3191 = vpop.f32.mrb[0].mxu0
    %3192 = vdwg.mxu0
    %v3193 = vmax.f32 %v3116, %v3190
    %v3194 = vsub.f32 %v3116, %v3193
    %v3195 = vmul.f32 %v3194, 1.442695
    %v3196 = vpow.pop %v3195
    %v3197 = vsub.f32 %v3190, %v3193
    %v3198 = vmul.f32 %v3197, 1.442695
    %v3199 = vpow.pop %v3198
    %v3200 = vadd.f32 %v3196, %v3199
    %v3201 = vrcp.pop %v3200
    %v3202 = vmul.f32 %v3196, %v3201
    %v3203 = vmul.f32 %v3202, %v2875
    %v3204 = vmul.f32 %v3199, %v3201
    %v3205 = vmul.f32 %v3204, %v2880
    %v3206 = vadd.f32 %v3203, %v3205
    %s3207 = scalar_lea.vmem %s11, 128
    %v3208 = vld [vmem:[%s3207] sm:$0xff]
    %v3209 = vld [vmem:[%s3207 + $0x8] sm:$0xff]
    %v3210 = vld [vmem:[%s3207 + $0x10] sm:$0xff]
    %v3211 = vld [vmem:[%s3207 + $0x18] sm:$0xff]
    %v3212 = vld [vmem:[%s3207 + $0x20] sm:$0xff]
    %v3213 = vld [vmem:[%s3207 + $0x28] sm:$0xff]
    %v3214 = vld [vmem:[%s3207 + $0x30] sm:$0xff]
    %v3215 = vld [vmem:[%s3207 + $0x38] sm:$0xff]
    %s3216 = scalar_lea.vmem %s12, 2
    %v3217 = vld [vmem:[%s3216] sm:$0x1]
    %v3219 = vlaneseq
    %v3220 = vshrl.u32 %v3219, 7
    %v3221 = vsub.s32 0, %v3220
    %v3222 = vrot.slane %v3217, %v3221
    %v3225 = vsel %vm126, %v3044, 0
    %v3228 = vsel %vm126, %v3206, 0
    %3230 = vmatprep.subr.mxu0 0.0
    %3231 = vmatpush1.msra.mxu0 %v3208
    %3232 = vmatprep.subr.mxu0 0.0
    %3233 = vmatpush1.msra.mxu0 %v3209
    %3234 = vmatprep.subr.mxu0 0.0
    %3235 = vmatpush1.msra.mxu0 %v3210
    %3236 = vmatprep.subr.mxu0 0.0
    %3237 = vmatpush1.msra.mxu0 %v3211
    %3238 = vmatprep.subr.mxu0 0.0
    %3239 = vmatpush1.msra.mxu0 %v3212
    %3240 = vmatprep.subr.mxu0 0.0
    %3241 = vmatpush1.msra.mxu0 %v3213
    %3242 = vmatprep.subr.mxu0 0.0
    %3243 = vmatpush1.msra.mxu0 %v3214
    %3244 = vmatprep.subr.mxu0 0.0
    %3245 = vmatpush1.msra.mxu0 %v3215
    %3246 = vmatprep.subr.mxu0 0.0
    %3247 = vmatpush1.msra.mxu0 0.0
    %3248 = vmatprep.subr.mxu0 0.0
    %3249 = vmatpush1.msra.mxu0 0.0
    %3250 = vmatprep.subr.mxu0 0.0
    %3251 = vmatpush1.msra.mxu0 0.0
    %3252 = vmatprep.subr.mxu0 0.0
    %3253 = vmatpush1.msra.mxu0 0.0
    %3254 = vmatprep.subr.mxu0 0.0
    %3255 = vmatpush1.msra.mxu0 0.0
    %3256 = vmatprep.subr.mxu0 0.0
    %3257 = vmatpush1.msra.mxu0 0.0
    %3258 = vmatprep.subr.mxu0 0.0
    %3259 = vmatpush1.msra.mxu0 0.0
    %3260 = vmatprep.subr.mxu0 0.0
    %3261 = vmatpush1.msra.mxu0 0.0
    %3262 = vmatprep.subr.mxu0 0.0
    %3263 = vmatpush1.msra.mxu0 0.0
    %3264 = vmatprep.subr.mxu0 0.0
    %3265 = vmatpush1.msra.mxu0 0.0
    %3266 = vmatprep.subr.mxu0 0.0
    %3267 = vmatpush1.msra.mxu0 0.0
    %3268 = vmatprep.subr.mxu0 0.0
    %3269 = vmatpush1.msra.mxu0 0.0
    %3270 = vmatprep.subr.mxu0 0.0
    %3271 = vmatpush1.msra.mxu0 0.0
    %3272 = vmatprep.subr.mxu0 0.0
    %3273 = vmatpush1.msra.mxu0 0.0
    %3274 = vmatprep.subr.mxu0 0.0
    %3275 = vmatpush1.msra.mxu0 0.0
    %3276 = vmatprep.subr.mxu0 0.0
    %3277 = vmatpush1.msra.mxu0 0.0
    %3278 = vmatprep.subr.mxu0 0.0
    %3279 = vmatpush1.msra.mxu0 0.0
    %3280 = vmatprep.subr.mxu0 0.0
    %3281 = vmatpush1.msra.mxu0 0.0
    %3282 = vmatprep.subr.mxu0 0.0
    %3283 = vmatpush1.msra.mxu0 0.0
    %3284 = vmatprep.subr.mxu0 0.0
    %3285 = vmatpush1.msra.mxu0 0.0
    %3286 = vmatprep.subr.mxu0 0.0
    %3287 = vmatpush1.msra.mxu0 0.0
    %3288 = vmatprep.subr.mxu0 0.0
    %3289 = vmatpush1.msra.mxu0 0.0
    %3290 = vmatprep.subr.mxu0 0.0
    %3291 = vmatpush1.msra.mxu0 0.0
    %3292 = vmatprep.subr.mxu0 0.0
    %3293 = vmatpush1.msra.mxu0 0.0
    %3294 = vmatprep.mubr.f32.mxu0 0.0
    %3295 = vmatmul.mubr.f32.gmra.mrb[0].mxu0 %v3225
    %v3296 = vpop.f32.mrb[0].mxu0
    %v3297 = vadd.f32 %v3222, %v3296
    %v3298 = vpop.f32.mrb[0].mxu0
    %3299 = vmatprep.mubr.f32.mxu0 0.0
    %3300 = vmatmul.mubr.f32.gmra.mrb[0].mxu0 %v3228
    %v3301 = vpop.f32.mrb[0].mxu0
    %v3302 = vadd.f32 %v3222, %v3301
    %v3303 = vpop.f32.mrb[0].mxu0
    %3304 = vdwg.mxu0
    %v3305 = vadd.f32 %v2551, %v3297
    %v3306 = vadd.f32 %v2552, %v3302
    %s3307 = scalar_lea.vmem %s13, 256
    %v3308 = vld [vmem:[%s3307] sm:$0xff]
    %v3309 = vld [vmem:[%s3307 + $0x8] sm:$0xff]
    %v3310 = vld [vmem:[%s3307 + $0x10] sm:$0xff]
    %v3311 = vld [vmem:[%s3307 + $0x18] sm:$0xff]
    %v3312 = vld [vmem:[%s3307 + $0x20] sm:$0xff]
    %v3313 = vld [vmem:[%s3307 + $0x28] sm:$0xff]
    %v3314 = vld [vmem:[%s3307 + $0x30] sm:$0xff]
    %v3315 = vld [vmem:[%s3307 + $0x38] sm:$0xff]
    %v3316 = vld [vmem:[%s3307 + $0x40] sm:$0xff]
    %v3317 = vld [vmem:[%s3307 + $0x48] sm:$0xff]
    %v3318 = vld [vmem:[%s3307 + $0x50] sm:$0xff]
    %v3319 = vld [vmem:[%s3307 + $0x58] sm:$0xff]
    %v3320 = vld [vmem:[%s3307 + $0x60] sm:$0xff]
    %v3321 = vld [vmem:[%s3307 + $0x68] sm:$0xff]
    %v3322 = vld [vmem:[%s3307 + $0x70] sm:$0xff]
    %v3323 = vld [vmem:[%s3307 + $0x78] sm:$0xff]
    %s3324 = scalar_lea.vmem %s14, 4
    %v3325 = vld [vmem:[%s3324] sm:$0x3]
    %v3327 = vlaneseq
    %v3328 = vshrl.u32 %v3327, 7
    %v3329 = vsub.s32 0, %v3328
    %v3330 = vrot.slane %v3325, %v3329
    %v3331 = vlaneseq
    %v3332 = vshrl.u32 %v3331, 7
    %v3333 = vsub.s32 1, %v3332
    %v3334 = vrot.slane %v3325, %v3333
    %3337 = vmatprep.subr.mxu0 %v3309
    %3338 = vmatpush1.msra.mxu0 %v3308
    %3339 = vmatprep.subr.mxu0 %v3311
    %3340 = vmatpush1.msra.mxu0 %v3310
    %3341 = vmatprep.subr.mxu0 %v3313
    %3342 = vmatpush1.msra.mxu0 %v3312
    %3343 = vmatprep.subr.mxu0 %v3315
    %3344 = vmatpush1.msra.mxu0 %v3314
    %3345 = vmatprep.subr.mxu0 %v3317
    %3346 = vmatpush1.msra.mxu0 %v3316
    %3347 = vmatprep.subr.mxu0 %v3319
    %3348 = vmatpush1.msra.mxu0 %v3318
    %3349 = vmatprep.subr.mxu0 %v3321
    %3350 = vmatpush1.msra.mxu0 %v3320
    %3351 = vmatprep.subr.mxu0 %v3323
    %3352 = vmatpush1.msra.mxu0 %v3322
    %3353 = vmatprep.subr.mxu0 0.0
    %3354 = vmatpush1.msra.mxu0 0.0
    %3355 = vmatprep.subr.mxu0 0.0
    %3356 = vmatpush1.msra.mxu0 0.0
    %3357 = vmatprep.subr.mxu0 0.0
    %3358 = vmatpush1.msra.mxu0 0.0
    %3359 = vmatprep.subr.mxu0 0.0
    %3360 = vmatpush1.msra.mxu0 0.0
    %3361 = vmatprep.subr.mxu0 0.0
    %3362 = vmatpush1.msra.mxu0 0.0
    %3363 = vmatprep.subr.mxu0 0.0
    %3364 = vmatpush1.msra.mxu0 0.0
    %3365 = vmatprep.subr.mxu0 0.0
    %3366 = vmatpush1.msra.mxu0 0.0
    %3367 = vmatprep.subr.mxu0 0.0
    %3368 = vmatpush1.msra.mxu0 0.0
    %3369 = vmatprep.subr.mxu0 0.0
    %3370 = vmatpush1.msra.mxu0 0.0
    %3371 = vmatprep.subr.mxu0 0.0
    %3372 = vmatpush1.msra.mxu0 0.0
    %3373 = vmatprep.subr.mxu0 0.0
    %3374 = vmatpush1.msra.mxu0 0.0
    %3375 = vmatprep.subr.mxu0 0.0
    %3376 = vmatpush1.msra.mxu0 0.0
    %3377 = vmatprep.subr.mxu0 0.0
    %3378 = vmatpush1.msra.mxu0 0.0
    %3379 = vmatprep.subr.mxu0 0.0
    %3380 = vmatpush1.msra.mxu0 0.0
    %3381 = vmatprep.subr.mxu0 0.0
    %3382 = vmatpush1.msra.mxu0 0.0
    %3383 = vmatprep.subr.mxu0 0.0
    %3384 = vmatpush1.msra.mxu0 0.0
    %3385 = vmatprep.subr.mxu0 0.0
    %3386 = vmatpush1.msra.mxu0 0.0
    %3387 = vmatprep.subr.mxu0 0.0
    %3388 = vmatpush1.msra.mxu0 0.0
    %3389 = vmatprep.subr.mxu0 0.0
    %3390 = vmatpush1.msra.mxu0 0.0
    %3391 = vmatprep.subr.mxu0 0.0
    %3392 = vmatpush1.msra.mxu0 0.0
    %3393 = vmatprep.subr.mxu0 0.0
    %3394 = vmatpush1.msra.mxu0 0.0
    %3395 = vmatprep.subr.mxu0 0.0
    %3396 = vmatpush1.msra.mxu0 0.0
    %3397 = vmatprep.subr.mxu0 0.0
    %3398 = vmatpush1.msra.mxu0 0.0
    %3399 = vmatprep.subr.mxu0 0.0
    %3400 = vmatpush1.msra.mxu0 0.0
    %3401 = vmatprep.mubr.f32.mxu0 0.0
    %3402 = vmatmul.mubr.f32.gmra.mrb[0].mxu0 %v2617
    %v3403 = vpop.f32.mrb[0].mxu0
    %v3404 = vadd.f32 %v3330, %v3403
    %v3405 = vpop.f32.mrb[0].mxu0
    %v3406 = vadd.f32 %v3334, %v3405
    %3407 = vmatprep.mubr.f32.mxu0 0.0
    %3408 = vmatmul.mubr.f32.gmra.mrb[0].mxu0 %v2620
    %v3409 = vpop.f32.mrb[0].mxu0
    %v3410 = vadd.f32 %v3330, %v3409
    %v3411 = vpop.f32.mrb[0].mxu0
    %v3412 = vadd.f32 %v3334, %v3411
    %3413 = vdwg.mxu0
    %v3414 = vmul.f32 %v3404, 0.5
    %v3415 = vmul.f32 %v3406, 0.5
    %v3416 = vmul.f32 %v3410, 0.5
    %v3417 = vmul.f32 %v3412, 0.5
    %v3418 = vmul.f32 %v3404, 0.70710677
    %v3419 = vmul.f32 %v3406, 0.70710677
    %v3420 = vmul.f32 %v3410, 0.70710677
    %v3421 = vmul.f32 %v3412, 0.70710677
    %v3422 = verf.f32.pop %v3418
    %v3423 = verf.f32.pop %v3419
    %v3424 = verf.f32.pop %v3420
    %v3425 = verf.f32.pop %v3421
    %v3426 = vadd.f32 %v3422, 1.0
    %v3427 = vadd.f32 %v3423, 1.0
    %v3428 = vadd.f32 %v3424, 1.0
    %v3429 = vadd.f32 %v3425, 1.0
    %v3430 = vmul.f32 %v3414, %v3426
    %v3431 = vmul.f32 %v3415, %v3427
    %v3432 = vmul.f32 %v3416, %v3428
    %v3433 = vmul.f32 %v3417, %v3429
    %s3434 = scalar_lea.vmem %s15, 512
    %v3435 = vld [vmem:[%s3434] sm:$0xff]
    %v3436 = vld [vmem:[%s3434 + $0x8] sm:$0xff]
    %v3437 = vld [vmem:[%s3434 + $0x10] sm:$0xff]
    %v3438 = vld [vmem:[%s3434 + $0x18] sm:$0xff]
    %v3439 = vld [vmem:[%s3434 + $0x20] sm:$0xff]
    %v3440 = vld [vmem:[%s3434 + $0x28] sm:$0xff]
    %v3441 = vld [vmem:[%s3434 + $0x30] sm:$0xff]
    %v3442 = vld [vmem:[%s3434 + $0x38] sm:$0xff]
    %v3443 = vld [vmem:[%s3434 + $0x40] sm:$0xff]
    %v3444 = vld [vmem:[%s3434 + $0x48] sm:$0xff]
    %v3445 = vld [vmem:[%s3434 + $0x50] sm:$0xff]
    %v3446 = vld [vmem:[%s3434 + $0x58] sm:$0xff]
    %v3447 = vld [vmem:[%s3434 + $0x60] sm:$0xff]
    %v3448 = vld [vmem:[%s3434 + $0x68] sm:$0xff]
    %v3449 = vld [vmem:[%s3434 + $0x70] sm:$0xff]
    %v3450 = vld [vmem:[%s3434 + $0x78] sm:$0xff]
    %v3451 = vld [vmem:[%s3434 + $0x80] sm:$0xff]
    %v3452 = vld [vmem:[%s3434 + $0x88] sm:$0xff]
    %v3453 = vld [vmem:[%s3434 + $0x90] sm:$0xff]
    %v3454 = vld [vmem:[%s3434 + $0x98] sm:$0xff]
    %v3455 = vld [vmem:[%s3434 + $0xa0] sm:$0xff]
    %v3456 = vld [vmem:[%s3434 + $0xa8] sm:$0xff]
    %v3457 = vld [vmem:[%s3434 + $0xb0] sm:$0xff]
    %v3458 = vld [vmem:[%s3434 + $0xb8] sm:$0xff]
    %v3459 = vld [vmem:[%s3434 + $0xc0] sm:$0xff]
    %v3460 = vld [vmem:[%s3434 + $0xc8] sm:$0xff]
    %v3461 = vld [vmem:[%s3434 + $0xd0] sm:$0xff]
    %v3462 = vld [vmem:[%s3434 + $0xd8] sm:$0xff]
    %v3463 = vld [vmem:[%s3434 + $0xe0] sm:$0xff]
    %v3464 = vld [vmem:[%s3434 + $0xe8] sm:$0xff]
    %v3465 = vld [vmem:[%s3434 + $0xf0] sm:$0xff]
    %v3466 = vld [vmem:[%s3434 + $0xf8] sm:$0xff]
    %s3467 = scalar_lea.vmem [#allocation7], 2
    %v3468 = vld [vmem:[%s3467] sm:$0x1]
    %v3470 = vlaneseq
    %v3471 = vshrl.u32 %v3470, 7
    %v3472 = vsub.s32 0, %v3471
    %v3473 = vrot.slane %v3468, %v3472
    %3475 = vmatprep.subr.mxu0 0.0
    %3476 = vmatpush1.msra.mxu0 %v3435
    %3477 = vmatprep.subr.mxu0 0.0
    %3478 = vmatpush1.msra.mxu0 %v3436
    %3479 = vmatprep.subr.mxu0 0.0
    %3480 = vmatpush1.msra.mxu0 %v3437
    %3481 = vmatprep.subr.mxu0 0.0
    %3482 = vmatpush1.msra.mxu0 %v3438
    %3483 = vmatprep.subr.mxu0 0.0
    %3484 = vmatpush1.msra.mxu0 %v3439
    %3485 = vmatprep.subr.mxu0 0.0
    %3486 = vmatpush1.msra.mxu0 %v3440
    %3487 = vmatprep.subr.mxu0 0.0
    %3488 = vmatpush1.msra.mxu0 %v3441
    %3489 = vmatprep.subr.mxu0 0.0
    %3490 = vmatpush1.msra.mxu0 %v3442
    %3491 = vmatprep.subr.mxu0 0.0
    %3492 = vmatpush1.msra.mxu0 %v3443
    %3493 = vmatprep.subr.mxu0 0.0
    %3494 = vmatpush1.msra.mxu0 %v3444
    %3495 = vmatprep.subr.mxu0 0.0
    %3496 = vmatpush1.msra.mxu0 %v3445
    %3497 = vmatprep.subr.mxu0 0.0
    %3498 = vmatpush1.msra.mxu0 %v3446
    %3499 = vmatprep.subr.mxu0 0.0
    %3500 = vmatpush1.msra.mxu0 %v3447
    %3501 = vmatprep.subr.mxu0 0.0
    %3502 = vmatpush1.msra.mxu0 %v3448
    %3503 = vmatprep.subr.mxu0 0.0
    %3504 = vmatpush1.msra.mxu0 %v3449
    %3505 = vmatprep.subr.mxu0 0.0
    %3506 = vmatpush1.msra.mxu0 %v3450
    %3507 = vmatprep.subr.mxu0 0.0
    %3508 = vmatpush1.msra.mxu0 %v3451
    %3509 = vmatprep.subr.mxu0 0.0
    %3510 = vmatpush1.msra.mxu0 %v3452
    %3511 = vmatprep.subr.mxu0 0.0
    %3512 = vmatpush1.msra.mxu0 %v3453
    %3513 = vmatprep.subr.mxu0 0.0
    %3514 = vmatpush1.msra.mxu0 %v3454
    %3515 = vmatprep.subr.mxu0 0.0
    %3516 = vmatpush1.msra.mxu0 %v3455
    %3517 = vmatprep.subr.mxu0 0.0
    %3518 = vmatpush1.msra.mxu0 %v3456
    %3519 = vmatprep.subr.mxu0 0.0
    %3520 = vmatpush1.msra.mxu0 %v3457
    %3521 = vmatprep.subr.mxu0 0.0
    %3522 = vmatpush1.msra.mxu0 %v3458
    %3523 = vmatprep.subr.mxu0 0.0
    %3524 = vmatpush1.msra.mxu0 %v3459
    %3525 = vmatprep.subr.mxu0 0.0
    %3526 = vmatpush1.msra.mxu0 %v3460
    %3527 = vmatprep.subr.mxu0 0.0
    %3528 = vmatpush1.msra.mxu0 %v3461
    %3529 = vmatprep.subr.mxu0 0.0
    %3530 = vmatpush1.msra.mxu0 %v3462
    %3531 = vmatprep.subr.mxu0 0.0
    %3532 = vmatpush1.msra.mxu0 %v3463
    %3533 = vmatprep.subr.mxu0 0.0
    %3534 = vmatpush1.msra.mxu0 %v3464
    %3535 = vmatprep.subr.mxu0 0.0
    %3536 = vmatpush1.msra.mxu0 %v3465
    %3537 = vmatprep.subr.mxu0 0.0
    %3538 = vmatpush1.msra.mxu0 %v3466
    %3539 = vmatprep.mubr.f32.mxu0 %v3431
    %3540 = vmatmul.mubr.f32.gmra.mrb[0].mxu0 %v3430
    %v3541 = vpop.f32.mrb[0].mxu0
    %v3542 = vadd.f32 %v3473, %v3541
    %v3543 = vpop.f32.mrb[0].mxu0
    %3544 = vmatprep.mubr.f32.mxu0 %v3433
    %3545 = vmatmul.mubr.f32.gmra.mrb[0].mxu0 %v3432
    %v3546 = vpop.f32.mrb[0].mxu0
    %v3547 = vadd.f32 %v3473, %v3546
    %v3548 = vpop.f32.mrb[0].mxu0
    %3549 = vdwg.mxu0
    %v3550 = vadd.f32 %v3305, %v3542
    %v3551 = vadd.f32 %v3306, %v3547
    %v3553 = vsel %vm126, %v3550, 0
    %v3556 = vsel %vm126, %v3551, 0
    %3558 = vmatprep.subr.mxu0 %v3309
    %3559 = vmatpush1.msra.mxu0 %v3308
    %3560 = vmatprep.subr.mxu0 %v3311
    %3561 = vmatpush1.msra.mxu0 %v3310
    %3562 = vmatprep.subr.mxu0 %v3313
    %3563 = vmatpush1.msra.mxu0 %v3312
    %3564 = vmatprep.subr.mxu0 %v3315
    %3565 = vmatpush1.msra.mxu0 %v3314
    %3566 = vmatprep.subr.mxu0 %v3317
    %3567 = vmatpush1.msra.mxu0 %v3316
    %3568 = vmatprep.subr.mxu0 %v3319
    %3569 = vmatpush1.msra.mxu0 %v3318
    %3570 = vmatprep.subr.mxu0 %v3321
    %3571 = vmatpush1.msra.mxu0 %v3320
    %3572 = vmatprep.subr.mxu0 %v3323
    %3573 = vmatpush1.msra.mxu0 %v3322
    %3574 = vmatprep.subr.mxu0 0.0
    %3575 = vmatpush1.msra.mxu0 0.0
    %3576 = vmatprep.subr.mxu0 0.0
    %3577 = vmatpush1.msra.mxu0 0.0
    %3578 = vmatprep.subr.mxu0 0.0
    %3579 = vmatpush1.msra.mxu0 0.0
    %3580 = vmatprep.subr.mxu0 0.0
    %3581 = vmatpush1.msra.mxu0 0.0
    %3582 = vmatprep.subr.mxu0 0.0
    %3583 = vmatpush1.msra.mxu0 0.0
    %3584 = vmatprep.subr.mxu0 0.0
    %3585 = vmatpush1.msra.mxu0 0.0
    %3586 = vmatprep.subr.mxu0 0.0
    %3587 = vmatpush1.msra.mxu0 0.0
    %3588 = vmatprep.subr.mxu0 0.0
    %3589 = vmatpush1.msra.mxu0 0.0
    %3590 = vmatprep.subr.mxu0 0.0
    %3591 = vmatpush1.msra.mxu0 0.0
    %3592 = vmatprep.subr.mxu0 0.0
    %3593 = vmatpush1.msra.mxu0 0.0
    %3594 = vmatprep.subr.mxu0 0.0
    %3595 = vmatpush1.msra.mxu0 0.0
    %3596 = vmatprep.subr.mxu0 0.0
    %3597 = vmatpush1.msra.mxu0 0.0
    %3598 = vmatprep.subr.mxu0 0.0
    %3599 = vmatpush1.msra.mxu0 0.0
    %3600 = vmatprep.subr.mxu0 0.0
    %3601 = vmatpush1.msra.mxu0 0.0
    %3602 = vmatprep.subr.mxu0 0.0
    %3603 = vmatpush1.msra.mxu0 0.0
    %3604 = vmatprep.subr.mxu0 0.0
    %3605 = vmatpush1.msra.mxu0 0.0
    %3606 = vmatprep.subr.mxu0 0.0
    %3607 = vmatpush1.msra.mxu0 0.0
    %3608 = vmatprep.subr.mxu0 0.0
    %3609 = vmatpush1.msra.mxu0 0.0
    %3610 = vmatprep.subr.mxu0 0.0
    %3611 = vmatpush1.msra.mxu0 0.0
    %3612 = vmatprep.subr.mxu0 0.0
    %3613 = vmatpush1.msra.mxu0 0.0
    %3614 = vmatprep.subr.mxu0 0.0
    %3615 = vmatpush1.msra.mxu0 0.0
    %3616 = vmatprep.subr.mxu0 0.0
    %3617 = vmatpush1.msra.mxu0 0.0
    %3618 = vmatprep.subr.mxu0 0.0
    %3619 = vmatpush1.msra.mxu0 0.0
    %3620 = vmatprep.subr.mxu0 0.0
    %3621 = vmatpush1.msra.mxu0 0.0
    %3622 = vmatprep.mubr.f32.mxu0 0.0
    %3623 = vmatmul.mubr.f32.gmra.mrb[0].mxu0 %v3553
    %v3624 = vpop.f32.mrb[0].mxu0
    %v3625 = vadd.f32 %v3330, %v3624
    %v3626 = vpop.f32.mrb[0].mxu0
    %v3627 = vadd.f32 %v3334, %v3626
    %3628 = vmatprep.mubr.f32.mxu0 0.0
    %3629 = vmatmul.mubr.f32.gmra.mrb[0].mxu0 %v3556
    %v3630 = vpop.f32.mrb[0].mxu0
    %v3631 = vadd.f32 %v3330, %v3630
    %v3632 = vpop.f32.mrb[0].mxu0
    %v3633 = vadd.f32 %v3334, %v3632
    %3634 = vdwg.mxu0
    %v3635 = vmul.f32 %v3625, 0.5
    %v3636 = vmul.f32 %v3627, 0.5
    %v3637 = vmul.f32 %v3631, 0.5
    %v3638 = vmul.f32 %v3633, 0.5
    %v3639 = vmul.f32 %v3625, 0.70710677
    %v3640 = vmul.f32 %v3627, 0.70710677
    %v3641 = vmul.f32 %v3631, 0.70710677
    %v3642 = vmul.f32 %v3633, 0.70710677
    %v3643 = verf.f32.pop %v3639
    %v3644 = verf.f32.pop %v3640
    %v3645 = verf.f32.pop %v3641
    %v3646 = verf.f32.pop %v3642
    %v3647 = vadd.f32 %v3643, 1.0
    %v3648 = vadd.f32 %v3644, 1.0
    %v3649 = vadd.f32 %v3645, 1.0
    %v3650 = vadd.f32 %v3646, 1.0
    %v3651 = vmul.f32 %v3635, %v3647
    %v3652 = vmul.f32 %v3636, %v3648
    %v3653 = vmul.f32 %v3637, %v3649
    %v3654 = vmul.f32 %v3638, %v3650
    %3655 = vmatprep.subr.mxu0 0.0
    %3656 = vmatpush1.msra.mxu0 %v3435
    %3657 = vmatprep.subr.mxu0 0.0
    %3658 = vmatpush1.msra.mxu0 %v3436
    %3659 = vmatprep.subr.mxu0 0.0
    %3660 = vmatpush1.msra.mxu0 %v3437
    %3661 = vmatprep.subr.mxu0 0.0
    %3662 = vmatpush1.msra.mxu0 %v3438
    %3663 = vmatprep.subr.mxu0 0.0
    %3664 = vmatpush1.msra.mxu0 %v3439
    %3665 = vmatprep.subr.mxu0 0.0
    %3666 = vmatpush1.msra.mxu0 %v3440
    %3667 = vmatprep.subr.mxu0 0.0
    %3668 = vmatpush1.msra.mxu0 %v3441
    %3669 = vmatprep.subr.mxu0 0.0
    %3670 = vmatpush1.msra.mxu0 %v3442
    %3671 = vmatprep.subr.mxu0 0.0
    %3672 = vmatpush1.msra.mxu0 %v3443
    %3673 = vmatprep.subr.mxu0 0.0
    %3674 = vmatpush1.msra.mxu0 %v3444
    %3675 = vmatprep.subr.mxu0 0.0
    %3676 = vmatpush1.msra.mxu0 %v3445
    %3677 = vmatprep.subr.mxu0 0.0
    %3678 = vmatpush1.msra.mxu0 %v3446
    %3679 = vmatprep.subr.mxu0 0.0
    %3680 = vmatpush1.msra.mxu0 %v3447
    %3681 = vmatprep.subr.mxu0 0.0
    %3682 = vmatpush1.msra.mxu0 %v3448
    %3683 = vmatprep.subr.mxu0 0.0
    %3684 = vmatpush1.msra.mxu0 %v3449
    %3685 = vmatprep.subr.mxu0 0.0
    %3686 = vmatpush1.msra.mxu0 %v3450
    %3687 = vmatprep.subr.mxu0 0.0
    %3688 = vmatpush1.msra.mxu0 %v3451
    %3689 = vmatprep.subr.mxu0 0.0
    %3690 = vmatpush1.msra.mxu0 %v3452
    %3691 = vmatprep.subr.mxu0 0.0
    %3692 = vmatpush1.msra.mxu0 %v3453
    %3693 = vmatprep.subr.mxu0 0.0
    %3694 = vmatpush1.msra.mxu0 %v3454
    %3695 = vmatprep.subr.mxu0 0.0
    %3696 = vmatpush1.msra.mxu0 %v3455
    %3697 = vmatprep.subr.mxu0 0.0
    %3698 = vmatpush1.msra.mxu0 %v3456
    %3699 = vmatprep.subr.mxu0 0.0
    %3700 = vmatpush1.msra.mxu0 %v3457
    %3701 = vmatprep.subr.mxu0 0.0
    %3702 = vmatpush1.msra.mxu0 %v3458
    %3703 = vmatprep.subr.mxu0 0.0
    %3704 = vmatpush1.msra.mxu0 %v3459
    %3705 = vmatprep.subr.mxu0 0.0
    %3706 = vmatpush1.msra.mxu0 %v3460
    %3707 = vmatprep.subr.mxu0 0.0
    %3708 = vmatpush1.msra.mxu0 %v3461
    %3709 = vmatprep.subr.mxu0 0.0
    %3710 = vmatpush1.msra.mxu0 %v3462
    %3711 = vmatprep.subr.mxu0 0.0
    %3712 = vmatpush1.msra.mxu0 %v3463
    %3713 = vmatprep.subr.mxu0 0.0
    %3714 = vmatpush1.msra.mxu0 %v3464
    %3715 = vmatprep.subr.mxu0 0.0
    %3716 = vmatpush1.msra.mxu0 %v3465
    %3717 = vmatprep.subr.mxu0 0.0
    %3718 = vmatpush1.msra.mxu0 %v3466
    %3719 = vmatprep.mubr.f32.mxu0 %v3652
    %3720 = vmatmul.mubr.f32.gmra.mrb[0].mxu0 %v3651
    %v3721 = vpop.f32.mrb[0].mxu0
    %v3722 = vadd.f32 %v3473, %v3721
    %v3723 = vpop.f32.mrb[0].mxu0
    %3724 = vmatprep.mubr.f32.mxu0 %v3654
    %3725 = vmatmul.mubr.f32.gmra.mrb[0].mxu0 %v3653
    %v3726 = vpop.f32.mrb[0].mxu0
    %v3727 = vadd.f32 %v3473, %v3726
    %v3728 = vpop.f32.mrb[0].mxu0
    %3729 = vdwg.mxu0
    %v3730 = vadd.f32 %v3305, %v3722
    %v3731 = vadd.f32 %v3306, %v3727
    %s3732 = scalar_lea.vmem %s3, 3
    %v3733 = vld [vmem:[%s3732] sm:$0x1]
    %s3734 = scalar_lea.vmem %s4, 3
    %v3735 = vld [vmem:[%s3734] sm:$0x1]
    %v3736 = vsel %vm126, %v3730, 0.0
    %3737 = vadd.xlane.f32.xlu0 %v3736
    %v3738 = vpop.xlane.xlu0 %3737
    %v3739 = vsel %vm126, %v3731, 0.0
    %3740 = vadd.xlane.f32.xlu0 %v3739
    %v3741 = vpop.xlane.xlu0 %3740
    %v3742 = vmul.f32 %v3738, %v216
    %v3743 = vmul.f32 %v3741, %v216
    %v3744 = vsub.f32 %v3730, %v3742
    %v3745 = vsub.f32 %v3731, %v3743
    %v3746 = vmul.f32 %v3744, %v3744
    %v3747 = vmul.f32 %v3745, %v3745
    %v3748 = vsel %vm126, %v3746, 0.0
    %3749 = vadd.xlane.f32.xlu0 %v3748
    %v3750 = vpop.xlane.xlu0 %3749
    %v3751 = vsel %vm126, %v3747, 0.0
    %3752 = vadd.xlane.f32.xlu0 %v3751
    %v3753 = vpop.xlane.xlu0 %3752
    %v3754 = vmul.f32 %v3750, %v216
    %v3755 = vmul.f32 %v3753, %v216
    %v3756 = vadd.f32 %v3754, 1e-05
    %v3757 = vadd.f32 %v3755, 1e-05
    %v3758 = vrsqrt.pop %v3756
    %v3759 = vrsqrt.pop %v3757
    %v3760 = vmul.f32 %v3744, %v3758
    %v3761 = vmul.f32 %v3745, %v3759
    %v3763 = vlaneseq
    %v3764 = vshrl.u32 %v3763, 7
    %v3765 = vsub.s32 0, %v3764
    %v3766 = vrot.slane %v3733, %v3765
    %v3768 = vmul.f32 %v3760, %v3766
    %v3769 = vmul.f32 %v3761, %v3766
    %v3771 = vlaneseq
    %v3772 = vshrl.u32 %v3771, 7
    %v3773 = vsub.s32 0, %v3772
    %v3774 = vrot.slane %v3735, %v3773
    %v3776 = vadd.f32 %v3768, %v3774
    %v3777 = vadd.f32 %v3769, %v3774
    %s3778 = scalar_lea.vmem %s5, 192
    %v3779 = vld [vmem:[%s3778] sm:$0xff]
    %v3780 = vld [vmem:[%s3778 + $0x8] sm:$0xff]
    %v3781 = vld [vmem:[%s3778 + $0x10] sm:$0xff]
    %v3782 = vld [vmem:[%s3778 + $0x18] sm:$0xff]
    %v3783 = vld [vmem:[%s3778 + $0x20] sm:$0xff]
    %v3784 = vld [vmem:[%s3778 + $0x28] sm:$0xff]
    %v3785 = vld [vmem:[%s3778 + $0x30] sm:$0xff]
    %v3786 = vld [vmem:[%s3778 + $0x38] sm:$0xff]
    %s3787 = scalar_lea.vmem %s6, 3
    %v3788 = vld [vmem:[%s3787] sm:$0x1]
    %v3790 = vlaneseq
    %v3791 = vshrl.u32 %v3790, 7
    %v3792 = vsub.s32 0, %v3791
    %v3793 = vrot.slane %v3788, %v3792
    %v3796 = vsel %vm126, %v3776, 0
    %v3799 = vsel %vm126, %v3777, 0
    %3801 = vmatprep.subr.mxu0 0.0
    %3802 = vmatpush1.msra.mxu0 %v3779
    %3803 = vmatprep.subr.mxu0 0.0
    %3804 = vmatpush1.msra.mxu0 %v3780
    %3805 = vmatprep.subr.mxu0 0.0
    %3806 = vmatpush1.msra.mxu0 %v3781
    %3807 = vmatprep.subr.mxu0 0.0
    %3808 = vmatpush1.msra.mxu0 %v3782
    %3809 = vmatprep.subr.mxu0 0.0
    %3810 = vmatpush1.msra.mxu0 %v3783
    %3811 = vmatprep.subr.mxu0 0.0
    %3812 = vmatpush1.msra.mxu0 %v3784
    %3813 = vmatprep.subr.mxu0 0.0
    %3814 = vmatpush1.msra.mxu0 %v3785
    %3815 = vmatprep.subr.mxu0 0.0
    %3816 = vmatpush1.msra.mxu0 %v3786
    %3817 = vmatprep.subr.mxu0 0.0
    %3818 = vmatpush1.msra.mxu0 0.0
    %3819 = vmatprep.subr.mxu0 0.0
    %3820 = vmatpush1.msra.mxu0 0.0
    %3821 = vmatprep.subr.mxu0 0.0
    %3822 = vmatpush1.msra.mxu0 0.0
    %3823 = vmatprep.subr.mxu0 0.0
    %3824 = vmatpush1.msra.mxu0 0.0
    %3825 = vmatprep.subr.mxu0 0.0
    %3826 = vmatpush1.msra.mxu0 0.0
    %3827 = vmatprep.subr.mxu0 0.0
    %3828 = vmatpush1.msra.mxu0 0.0
    %3829 = vmatprep.subr.mxu0 0.0
    %3830 = vmatpush1.msra.mxu0 0.0
    %3831 = vmatprep.subr.mxu0 0.0
    %3832 = vmatpush1.msra.mxu0 0.0
    %3833 = vmatprep.subr.mxu0 0.0
    %3834 = vmatpush1.msra.mxu0 0.0
    %3835 = vmatprep.subr.mxu0 0.0
    %3836 = vmatpush1.msra.mxu0 0.0
    %3837 = vmatprep.subr.mxu0 0.0
    %3838 = vmatpush1.msra.mxu0 0.0
    %3839 = vmatprep.subr.mxu0 0.0
    %3840 = vmatpush1.msra.mxu0 0.0
    %3841 = vmatprep.subr.mxu0 0.0
    %3842 = vmatpush1.msra.mxu0 0.0
    %3843 = vmatprep.subr.mxu0 0.0
    %3844 = vmatpush1.msra.mxu0 0.0
    %3845 = vmatprep.subr.mxu0 0.0
    %3846 = vmatpush1.msra.mxu0 0.0
    %3847 = vmatprep.subr.mxu0 0.0
    %3848 = vmatpush1.msra.mxu0 0.0
    %3849 = vmatprep.subr.mxu0 0.0
    %3850 = vmatpush1.msra.mxu0 0.0
    %3851 = vmatprep.subr.mxu0 0.0
    %3852 = vmatpush1.msra.mxu0 0.0
    %3853 = vmatprep.subr.mxu0 0.0
    %3854 = vmatpush1.msra.mxu0 0.0
    %3855 = vmatprep.subr.mxu0 0.0
    %3856 = vmatpush1.msra.mxu0 0.0
    %3857 = vmatprep.subr.mxu0 0.0
    %3858 = vmatpush1.msra.mxu0 0.0
    %3859 = vmatprep.subr.mxu0 0.0
    %3860 = vmatpush1.msra.mxu0 0.0
    %3861 = vmatprep.subr.mxu0 0.0
    %3862 = vmatpush1.msra.mxu0 0.0
    %3863 = vmatprep.subr.mxu0 0.0
    %3864 = vmatpush1.msra.mxu0 0.0
    %3865 = vmatprep.mubr.f32.mxu0 0.0
    %3866 = vmatmul.mubr.f32.gmra.mrb[0].mxu0 %v3796
    %v3867 = vpop.f32.mrb[0].mxu0
    %v3868 = vadd.f32 %v3793, %v3867
    %v3869 = vpop.f32.mrb[0].mxu0
    %3870 = vmatprep.mubr.f32.mxu0 0.0
    %3871 = vmatmul.mubr.f32.gmra.mrb[0].mxu0 %v3799
    %v3872 = vpop.f32.mrb[0].mxu0
    %v3873 = vadd.f32 %v3793, %v3872
    %v3874 = vpop.f32.mrb[0].mxu0
    %3875 = vdwg.mxu0
    %v3876 = vmul.f32 %v3868, 0.25
    %v3877 = vmul.f32 %v3873, 0.25
    %s3878 = scalar_lea.vmem %s7, 192
    %v3879 = vld [vmem:[%s3878] sm:$0xff]
    %v3880 = vld [vmem:[%s3878 + $0x8] sm:$0xff]
    %v3881 = vld [vmem:[%s3878 + $0x10] sm:$0xff]
    %v3882 = vld [vmem:[%s3878 + $0x18] sm:$0xff]
    %v3883 = vld [vmem:[%s3878 + $0x20] sm:$0xff]
    %v3884 = vld [vmem:[%s3878 + $0x28] sm:$0xff]
    %v3885 = vld [vmem:[%s3878 + $0x30] sm:$0xff]
    %v3886 = vld [vmem:[%s3878 + $0x38] sm:$0xff]
    %s3887 = scalar_lea.vmem [#allocation2], 3
    %v3888 = vld [vmem:[%s3887] sm:$0x1]
    %v3890 = vlaneseq
    %v3891 = vshrl.u32 %v3890, 7
    %v3892 = vsub.s32 0, %v3891
    %v3893 = vrot.slane %v3888, %v3892
    %3895 = vmatprep.subr.mxu0 0.0
    %3896 = vmatpush1.msra.mxu0 %v3879
    %3897 = vmatprep.subr.mxu0 0.0
    %3898 = vmatpush1.msra.mxu0 %v3880
    %3899 = vmatprep.subr.mxu0 0.0
    %3900 = vmatpush1.msra.mxu0 %v3881
    %3901 = vmatprep.subr.mxu0 0.0
    %3902 = vmatpush1.msra.mxu0 %v3882
    %3903 = vmatprep.subr.mxu0 0.0
    %3904 = vmatpush1.msra.mxu0 %v3883
    %3905 = vmatprep.subr.mxu0 0.0
    %3906 = vmatpush1.msra.mxu0 %v3884
    %3907 = vmatprep.subr.mxu0 0.0
    %3908 = vmatpush1.msra.mxu0 %v3885
    %3909 = vmatprep.subr.mxu0 0.0
    %3910 = vmatpush1.msra.mxu0 %v3886
    %3911 = vmatprep.subr.mxu0 0.0
    %3912 = vmatpush1.msra.mxu0 0.0
    %3913 = vmatprep.subr.mxu0 0.0
    %3914 = vmatpush1.msra.mxu0 0.0
    %3915 = vmatprep.subr.mxu0 0.0
    %3916 = vmatpush1.msra.mxu0 0.0
    %3917 = vmatprep.subr.mxu0 0.0
    %3918 = vmatpush1.msra.mxu0 0.0
    %3919 = vmatprep.subr.mxu0 0.0
    %3920 = vmatpush1.msra.mxu0 0.0
    %3921 = vmatprep.subr.mxu0 0.0
    %3922 = vmatpush1.msra.mxu0 0.0
    %3923 = vmatprep.subr.mxu0 0.0
    %3924 = vmatpush1.msra.mxu0 0.0
    %3925 = vmatprep.subr.mxu0 0.0
    %3926 = vmatpush1.msra.mxu0 0.0
    %3927 = vmatprep.subr.mxu0 0.0
    %3928 = vmatpush1.msra.mxu0 0.0
    %3929 = vmatprep.subr.mxu0 0.0
    %3930 = vmatpush1.msra.mxu0 0.0
    %3931 = vmatprep.subr.mxu0 0.0
    %3932 = vmatpush1.msra.mxu0 0.0
    %3933 = vmatprep.subr.mxu0 0.0
    %3934 = vmatpush1.msra.mxu0 0.0
    %3935 = vmatprep.subr.mxu0 0.0
    %3936 = vmatpush1.msra.mxu0 0.0
    %3937 = vmatprep.subr.mxu0 0.0
    %3938 = vmatpush1.msra.mxu0 0.0
    %3939 = vmatprep.subr.mxu0 0.0
    %3940 = vmatpush1.msra.mxu0 0.0
    %3941 = vmatprep.subr.mxu0 0.0
    %3942 = vmatpush1.msra.mxu0 0.0
    %3943 = vmatprep.subr.mxu0 0.0
    %3944 = vmatpush1.msra.mxu0 0.0
    %3945 = vmatprep.subr.mxu0 0.0
    %3946 = vmatpush1.msra.mxu0 0.0
    %3947 = vmatprep.subr.mxu0 0.0
    %3948 = vmatpush1.msra.mxu0 0.0
    %3949 = vmatprep.subr.mxu0 0.0
    %3950 = vmatpush1.msra.mxu0 0.0
    %3951 = vmatprep.subr.mxu0 0.0
    %3952 = vmatpush1.msra.mxu0 0.0
    %3953 = vmatprep.subr.mxu0 0.0
    %3954 = vmatpush1.msra.mxu0 0.0
    %3955 = vmatprep.subr.mxu0 0.0
    %3956 = vmatpush1.msra.mxu0 0.0
    %3957 = vmatprep.subr.mxu0 0.0
    %3958 = vmatpush1.msra.mxu0 0.0
    %3959 = vmatprep.mubr.f32.mxu0 0.0
    %3960 = vmatmul.mubr.f32.gmra.mrb[0].mxu0 %v3796
    %v3961 = vpop.f32.mrb[0].mxu0
    %v3962 = vadd.f32 %v3893, %v3961
    %v3963 = vpop.f32.mrb[0].mxu0
    %3964 = vmatprep.mubr.f32.mxu0 0.0
    %3965 = vmatmul.mubr.f32.gmra.mrb[0].mxu0 %v3799
    %v3966 = vpop.f32.mrb[0].mxu0
    %v3967 = vadd.f32 %v3893, %v3966
    %v3968 = vpop.f32.mrb[0].mxu0
    %3969 = vdwg.mxu0
    %s3970 = scalar_lea.vmem %s9, 192
    %v3971 = vld [vmem:[%s3970] sm:$0xff]
    %v3972 = vld [vmem:[%s3970 + $0x8] sm:$0xff]
    %v3973 = vld [vmem:[%s3970 + $0x10] sm:$0xff]
    %v3974 = vld [vmem:[%s3970 + $0x18] sm:$0xff]
    %v3975 = vld [vmem:[%s3970 + $0x20] sm:$0xff]
    %v3976 = vld [vmem:[%s3970 + $0x28] sm:$0xff]
    %v3977 = vld [vmem:[%s3970 + $0x30] sm:$0xff]
    %v3978 = vld [vmem:[%s3970 + $0x38] sm:$0xff]
    %s3979 = scalar_lea.vmem [#allocation5], 3
    %v3980 = vld [vmem:[%s3979] sm:$0x1]
    %v3982 = vlaneseq
    %v3983 = vshrl.u32 %v3982, 7
    %v3984 = vsub.s32 0, %v3983
    %v3985 = vrot.slane %v3980, %v3984
    %3987 = vmatprep.subr.mxu0 0.0
    %3988 = vmatpush1.msra.mxu0 %v3971
    %3989 = vmatprep.subr.mxu0 0.0
    %3990 = vmatpush1.msra.mxu0 %v3972
    %3991 = vmatprep.subr.mxu0 0.0
    %3992 = vmatpush1.msra.mxu0 %v3973
    %3993 = vmatprep.subr.mxu0 0.0
    %3994 = vmatpush1.msra.mxu0 %v3974
    %3995 = vmatprep.subr.mxu0 0.0
    %3996 = vmatpush1.msra.mxu0 %v3975
    %3997 = vmatprep.subr.mxu0 0.0
    %3998 = vmatpush1.msra.mxu0 %v3976
    %3999 = vmatprep.subr.mxu0 0.0
    %4000 = vmatpush1.msra.mxu0 %v3977
    %4001 = vmatprep.subr.mxu0 0.0
    %4002 = vmatpush1.msra.mxu0 %v3978
    %4003 = vmatprep.subr.mxu0 0.0
    %4004 = vmatpush1.msra.mxu0 0.0
    %4005 = vmatprep.subr.mxu0 0.0
    %4006 = vmatpush1.msra.mxu0 0.0
    %4007 = vmatprep.subr.mxu0 0.0
    %4008 = vmatpush1.msra.mxu0 0.0
    %4009 = vmatprep.subr.mxu0 0.0
    %4010 = vmatpush1.msra.mxu0 0.0
    %4011 = vmatprep.subr.mxu0 0.0
    %4012 = vmatpush1.msra.mxu0 0.0
    %4013 = vmatprep.subr.mxu0 0.0
    %4014 = vmatpush1.msra.mxu0 0.0
    %4015 = vmatprep.subr.mxu0 0.0
    %4016 = vmatpush1.msra.mxu0 0.0
    %4017 = vmatprep.subr.mxu0 0.0
    %4018 = vmatpush1.msra.mxu0 0.0
    %4019 = vmatprep.subr.mxu0 0.0
    %4020 = vmatpush1.msra.mxu0 0.0
    %4021 = vmatprep.subr.mxu0 0.0
    %4022 = vmatpush1.msra.mxu0 0.0
    %4023 = vmatprep.subr.mxu0 0.0
    %4024 = vmatpush1.msra.mxu0 0.0
    %4025 = vmatprep.subr.mxu0 0.0
    %4026 = vmatpush1.msra.mxu0 0.0
    %4027 = vmatprep.subr.mxu0 0.0
    %4028 = vmatpush1.msra.mxu0 0.0
    %4029 = vmatprep.subr.mxu0 0.0
    %4030 = vmatpush1.msra.mxu0 0.0
    %4031 = vmatprep.subr.mxu0 0.0
    %4032 = vmatpush1.msra.mxu0 0.0
    %4033 = vmatprep.subr.mxu0 0.0
    %4034 = vmatpush1.msra.mxu0 0.0
    %4035 = vmatprep.subr.mxu0 0.0
    %4036 = vmatpush1.msra.mxu0 0.0
    %4037 = vmatprep.subr.mxu0 0.0
    %4038 = vmatpush1.msra.mxu0 0.0
    %4039 = vmatprep.subr.mxu0 0.0
    %4040 = vmatpush1.msra.mxu0 0.0
    %4041 = vmatprep.subr.mxu0 0.0
    %4042 = vmatpush1.msra.mxu0 0.0
    %4043 = vmatprep.subr.mxu0 0.0
    %4044 = vmatpush1.msra.mxu0 0.0
    %4045 = vmatprep.subr.mxu0 0.0
    %4046 = vmatpush1.msra.mxu0 0.0
    %4047 = vmatprep.subr.mxu0 0.0
    %4048 = vmatpush1.msra.mxu0 0.0
    %4049 = vmatprep.subr.mxu0 0.0
    %4050 = vmatpush1.msra.mxu0 0.0
    %4051 = vmatprep.mubr.f32.mxu0 0.0
    %4052 = vmatmul.mubr.f32.gmra.mrb[0].mxu0 %v3796
    %v4053 = vpop.f32.mrb[0].mxu0
    %v4054 = vadd.f32 %v3985, %v4053
    %v4055 = vpop.f32.mrb[0].mxu0
    %4056 = vmatprep.mubr.f32.mxu0 0.0
    %4057 = vmatmul.mubr.f32.gmra.mrb[0].mxu0 %v3799
    %v4058 = vpop.f32.mrb[0].mxu0
    %v4059 = vadd.f32 %v3985, %v4058
    %v4060 = vpop.f32.mrb[0].mxu0
    %4061 = vdwg.mxu0
    %v4062 = vmul.f32 %v3876, %v3962
    %v4064 = vsel %vm126, %v4062, 0
    %4066 = vmatprep.subr.mxu0 0.0
    %4067 = vmatpush1.msra.mxu0 %v101
    %4068 = vmatprep.subr.mxu0 0.0
    %4069 = vmatpush1.msra.mxu0 %v102
    %4070 = vmatprep.subr.mxu0 0.0
    %4071 = vmatpush1.msra.mxu0 %v103
    %4072 = vmatprep.subr.mxu0 0.0
    %4073 = vmatpush1.msra.mxu0 %v104
    %4074 = vmatprep.subr.mxu0 0.0
    %4075 = vmatpush1.msra.mxu0 %v105
    %4076 = vmatprep.subr.mxu0 0.0
    %4077 = vmatpush1.msra.mxu0 %v106
    %4078 = vmatprep.subr.mxu0 0.0
    %4079 = vmatpush1.msra.mxu0 %v107
    %4080 = vmatprep.subr.mxu0 0.0
    %4081 = vmatpush1.msra.mxu0 %v108
    %4082 = vmatprep.subr.mxu0 0.0
    %4083 = vmatpush1.msra.mxu0 0.0
    %4084 = vmatprep.subr.mxu0 0.0
    %4085 = vmatpush1.msra.mxu0 0.0
    %4086 = vmatprep.subr.mxu0 0.0
    %4087 = vmatpush1.msra.mxu0 0.0
    %4088 = vmatprep.subr.mxu0 0.0
    %4089 = vmatpush1.msra.mxu0 0.0
    %4090 = vmatprep.subr.mxu0 0.0
    %4091 = vmatpush1.msra.mxu0 0.0
    %4092 = vmatprep.subr.mxu0 0.0
    %4093 = vmatpush1.msra.mxu0 0.0
    %4094 = vmatprep.subr.mxu0 0.0
    %4095 = vmatpush1.msra.mxu0 0.0
    %4096 = vmatprep.subr.mxu0 0.0
    %4097 = vmatpush1.msra.mxu0 0.0
    %4098 = vmatprep.subr.mxu0 0.0
    %4099 = vmatpush1.msra.mxu0 0.0
    %4100 = vmatprep.subr.mxu0 0.0
    %4101 = vmatpush1.msra.mxu0 0.0
    %4102 = vmatprep.subr.mxu0 0.0
    %4103 = vmatpush1.msra.mxu0 0.0
    %4104 = vmatprep.subr.mxu0 0.0
    %4105 = vmatpush1.msra.mxu0 0.0
    %4106 = vmatprep.subr.mxu0 0.0
    %4107 = vmatpush1.msra.mxu0 0.0
    %4108 = vmatprep.subr.mxu0 0.0
    %4109 = vmatpush1.msra.mxu0 0.0
    %4110 = vmatprep.subr.mxu0 0.0
    %4111 = vmatpush1.msra.mxu0 0.0
    %4112 = vmatprep.subr.mxu0 0.0
    %4113 = vmatpush1.msra.mxu0 0.0
    %4114 = vmatprep.subr.mxu0 0.0
    %4115 = vmatpush1.msra.mxu0 0.0
    %4116 = vmatprep.subr.mxu0 0.0
    %4117 = vmatpush1.msra.mxu0 0.0
    %4118 = vmatprep.subr.mxu0 0.0
    %4119 = vmatpush1.msra.mxu0 0.0
    %4120 = vmatprep.subr.mxu0 0.0
    %4121 = vmatpush1.msra.mxu0 0.0
    %4122 = vmatprep.subr.mxu0 0.0
    %4123 = vmatpush1.msra.mxu0 0.0
    %4124 = vmatprep.subr.mxu0 0.0
    %4125 = vmatpush1.msra.mxu0 0.0
    %4126 = vmatprep.subr.mxu0 0.0
    %4127 = vmatpush1.msra.mxu0 0.0
    %4128 = vmatprep.subr.mxu0 0.0
    %4129 = vmatpush1.msra.mxu0 0.0
    %4130 = vmatprep.mubr.f32.mxu0 0.0
    %4131 = vmatmul.mubr.f32.gmra.mrb[0].mxu0 %v4064
    %v4132 = vpop.f32.mrb[0].mxu0
    %v4133 = vadd.f32 0.0, %v4132
    %v4134 = vpop.f32.mrb[0].mxu0
    %4135 = vdwg.mxu0
    %v4136 = vmul.f32 %v3876, %v3967
    %v4138 = vsel %vm126, %v4136, 0
    %4140 = vmatprep.subr.mxu0 0.0
    %4141 = vmatpush1.msra.mxu0 %v101
    %4142 = vmatprep.subr.mxu0 0.0
    %4143 = vmatpush1.msra.mxu0 %v102
    %4144 = vmatprep.subr.mxu0 0.0
    %4145 = vmatpush1.msra.mxu0 %v103
    %4146 = vmatprep.subr.mxu0 0.0
    %4147 = vmatpush1.msra.mxu0 %v104
    %4148 = vmatprep.subr.mxu0 0.0
    %4149 = vmatpush1.msra.mxu0 %v105
    %4150 = vmatprep.subr.mxu0 0.0
    %4151 = vmatpush1.msra.mxu0 %v106
    %4152 = vmatprep.subr.mxu0 0.0
    %4153 = vmatpush1.msra.mxu0 %v107
    %4154 = vmatprep.subr.mxu0 0.0
    %4155 = vmatpush1.msra.mxu0 %v108
    %4156 = vmatprep.subr.mxu0 0.0
    %4157 = vmatpush1.msra.mxu0 0.0
    %4158 = vmatprep.subr.mxu0 0.0
    %4159 = vmatpush1.msra.mxu0 0.0
    %4160 = vmatprep.subr.mxu0 0.0
    %4161 = vmatpush1.msra.mxu0 0.0
    %4162 = vmatprep.subr.mxu0 0.0
    %4163 = vmatpush1.msra.mxu0 0.0
    %4164 = vmatprep.subr.mxu0 0.0
    %4165 = vmatpush1.msra.mxu0 0.0
    %4166 = vmatprep.subr.mxu0 0.0
    %4167 = vmatpush1.msra.mxu0 0.0
    %4168 = vmatprep.subr.mxu0 0.0
    %4169 = vmatpush1.msra.mxu0 0.0
    %4170 = vmatprep.subr.mxu0 0.0
    %4171 = vmatpush1.msra.mxu0 0.0
    %4172 = vmatprep.subr.mxu0 0.0
    %4173 = vmatpush1.msra.mxu0 0.0
    %4174 = vmatprep.subr.mxu0 0.0
    %4175 = vmatpush1.msra.mxu0 0.0
    %4176 = vmatprep.subr.mxu0 0.0
    %4177 = vmatpush1.msra.mxu0 0.0
    %4178 = vmatprep.subr.mxu0 0.0
    %4179 = vmatpush1.msra.mxu0 0.0
    %4180 = vmatprep.subr.mxu0 0.0
    %4181 = vmatpush1.msra.mxu0 0.0
    %4182 = vmatprep.subr.mxu0 0.0
    %4183 = vmatpush1.msra.mxu0 0.0
    %4184 = vmatprep.subr.mxu0 0.0
    %4185 = vmatpush1.msra.mxu0 0.0
    %4186 = vmatprep.subr.mxu0 0.0
    %4187 = vmatpush1.msra.mxu0 0.0
    %4188 = vmatprep.subr.mxu0 0.0
    %4189 = vmatpush1.msra.mxu0 0.0
    %4190 = vmatprep.subr.mxu0 0.0
    %4191 = vmatpush1.msra.mxu0 0.0
    %4192 = vmatprep.subr.mxu0 0.0
    %4193 = vmatpush1.msra.mxu0 0.0
    %4194 = vmatprep.subr.mxu0 0.0
    %4195 = vmatpush1.msra.mxu0 0.0
    %4196 = vmatprep.subr.mxu0 0.0
    %4197 = vmatpush1.msra.mxu0 0.0
    %4198 = vmatprep.subr.mxu0 0.0
    %4199 = vmatpush1.msra.mxu0 0.0
    %4200 = vmatprep.subr.mxu0 0.0
    %4201 = vmatpush1.msra.mxu0 0.0
    %4202 = vmatprep.subr.mxu0 0.0
    %4203 = vmatpush1.msra.mxu0 0.0
    %4204 = vmatprep.mubr.f32.mxu0 0.0
    %4205 = vmatmul.mubr.f32.gmra.mrb[0].mxu0 %v4138
    %v4206 = vpop.f32.mrb[0].mxu0
    %v4207 = vadd.f32 0.0, %v4206
    %v4208 = vpop.f32.mrb[0].mxu0
    %4209 = vdwg.mxu0
    %v4210 = vmax.f32 %v4133, %v4207
    %v4211 = vsub.f32 %v4133, %v4210
    %v4212 = vmul.f32 %v4211, 1.442695
    %v4213 = vpow.pop %v4212
    %v4214 = vsub.f32 %v4207, %v4210
    %v4215 = vmul.f32 %v4214, 1.442695
    %v4216 = vpow.pop %v4215
    %v4217 = vadd.f32 %v4213, %v4216
    %v4218 = vrcp.pop %v4217
    %v4219 = vmul.f32 %v4213, %v4218
    %v4220 = vmul.f32 %v4219, %v4054
    %v4221 = vmul.f32 %v4216, %v4218
    %v4222 = vmul.f32 %v4221, %v4059
    %v4223 = vadd.f32 %v4220, %v4222
    %v4224 = vmul.f32 %v3877, %v3962
    %v4226 = vsel %vm126, %v4224, 0
    %4228 = vmatprep.subr.mxu0 0.0
    %4229 = vmatpush1.msra.mxu0 %v101
    %4230 = vmatprep.subr.mxu0 0.0
    %4231 = vmatpush1.msra.mxu0 %v102
    %4232 = vmatprep.subr.mxu0 0.0
    %4233 = vmatpush1.msra.mxu0 %v103
    %4234 = vmatprep.subr.mxu0 0.0
    %4235 = vmatpush1.msra.mxu0 %v104
    %4236 = vmatprep.subr.mxu0 0.0
    %4237 = vmatpush1.msra.mxu0 %v105
    %4238 = vmatprep.subr.mxu0 0.0
    %4239 = vmatpush1.msra.mxu0 %v106
    %4240 = vmatprep.subr.mxu0 0.0
    %4241 = vmatpush1.msra.mxu0 %v107
    %4242 = vmatprep.subr.mxu0 0.0
    %4243 = vmatpush1.msra.mxu0 %v108
    %4244 = vmatprep.subr.mxu0 0.0
    %4245 = vmatpush1.msra.mxu0 0.0
    %4246 = vmatprep.subr.mxu0 0.0
    %4247 = vmatpush1.msra.mxu0 0.0
    %4248 = vmatprep.subr.mxu0 0.0
    %4249 = vmatpush1.msra.mxu0 0.0
    %4250 = vmatprep.subr.mxu0 0.0
    %4251 = vmatpush1.msra.mxu0 0.0
    %4252 = vmatprep.subr.mxu0 0.0
    %4253 = vmatpush1.msra.mxu0 0.0
    %4254 = vmatprep.subr.mxu0 0.0
    %4255 = vmatpush1.msra.mxu0 0.0
    %4256 = vmatprep.subr.mxu0 0.0
    %4257 = vmatpush1.msra.mxu0 0.0
    %4258 = vmatprep.subr.mxu0 0.0
    %4259 = vmatpush1.msra.mxu0 0.0
    %4260 = vmatprep.subr.mxu0 0.0
    %4261 = vmatpush1.msra.mxu0 0.0
    %4262 = vmatprep.subr.mxu0 0.0
    %4263 = vmatpush1.msra.mxu0 0.0
    %4264 = vmatprep.subr.mxu0 0.0
    %4265 = vmatpush1.msra.mxu0 0.0
    %4266 = vmatprep.subr.mxu0 0.0
    %4267 = vmatpush1.msra.mxu0 0.0
    %4268 = vmatprep.subr.mxu0 0.0
    %4269 = vmatpush1.msra.mxu0 0.0
    %4270 = vmatprep.subr.mxu0 0.0
    %4271 = vmatpush1.msra.mxu0 0.0
    %4272 = vmatprep.subr.mxu0 0.0
    %4273 = vmatpush1.msra.mxu0 0.0
    %4274 = vmatprep.subr.mxu0 0.0
    %4275 = vmatpush1.msra.mxu0 0.0
    %4276 = vmatprep.subr.mxu0 0.0
    %4277 = vmatpush1.msra.mxu0 0.0
    %4278 = vmatprep.subr.mxu0 0.0
    %4279 = vmatpush1.msra.mxu0 0.0
    %4280 = vmatprep.subr.mxu0 0.0
    %4281 = vmatpush1.msra.mxu0 0.0
    %4282 = vmatprep.subr.mxu0 0.0
    %4283 = vmatpush1.msra.mxu0 0.0
    %4284 = vmatprep.subr.mxu0 0.0
    %4285 = vmatpush1.msra.mxu0 0.0
    %4286 = vmatprep.subr.mxu0 0.0
    %4287 = vmatpush1.msra.mxu0 0.0
    %4288 = vmatprep.subr.mxu0 0.0
    %4289 = vmatpush1.msra.mxu0 0.0
    %4290 = vmatprep.subr.mxu0 0.0
    %4291 = vmatpush1.msra.mxu0 0.0
    %4292 = vmatprep.mubr.f32.mxu0 0.0
    %4293 = vmatmul.mubr.f32.gmra.mrb[0].mxu0 %v4226
    %v4294 = vpop.f32.mrb[0].mxu0
    %v4295 = vadd.f32 0.0, %v4294
    %v4296 = vpop.f32.mrb[0].mxu0
    %4297 = vdwg.mxu0
    %v4298 = vmul.f32 %v3877, %v3967
    %v4300 = vsel %vm126, %v4298, 0
    %4302 = vmatprep.subr.mxu0 0.0
    %4303 = vmatpush1.msra.mxu0 %v101
    %4304 = vmatprep.subr.mxu0 0.0
    %4305 = vmatpush1.msra.mxu0 %v102
    %4306 = vmatprep.subr.mxu0 0.0
    %4307 = vmatpush1.msra.mxu0 %v103
    %4308 = vmatprep.subr.mxu0 0.0
    %4309 = vmatpush1.msra.mxu0 %v104
    %4310 = vmatprep.subr.mxu0 0.0
    %4311 = vmatpush1.msra.mxu0 %v105
    %4312 = vmatprep.subr.mxu0 0.0
    %4313 = vmatpush1.msra.mxu0 %v106
    %4314 = vmatprep.subr.mxu0 0.0
    %4315 = vmatpush1.msra.mxu0 %v107
    %4316 = vmatprep.subr.mxu0 0.0
    %4317 = vmatpush1.msra.mxu0 %v108
    %4318 = vmatprep.subr.mxu0 0.0
    %4319 = vmatpush1.msra.mxu0 0.0
    %4320 = vmatprep.subr.mxu0 0.0
    %4321 = vmatpush1.msra.mxu0 0.0
    %4322 = vmatprep.subr.mxu0 0.0
    %4323 = vmatpush1.msra.mxu0 0.0
    %4324 = vmatprep.subr.mxu0 0.0
    %4325 = vmatpush1.msra.mxu0 0.0
    %4326 = vmatprep.subr.mxu0 0.0
    %4327 = vmatpush1.msra.mxu0 0.0
    %4328 = vmatprep.subr.mxu0 0.0
    %4329 = vmatpush1.msra.mxu0 0.0
    %4330 = vmatprep.subr.mxu0 0.0
    %4331 = vmatpush1.msra.mxu0 0.0
    %4332 = vmatprep.subr.mxu0 0.0
    %4333 = vmatpush1.msra.mxu0 0.0
    %4334 = vmatprep.subr.mxu0 0.0
    %4335 = vmatpush1.msra.mxu0 0.0
    %4336 = vmatprep.subr.mxu0 0.0
    %4337 = vmatpush1.msra.mxu0 0.0
    %4338 = vmatprep.subr.mxu0 0.0
    %4339 = vmatpush1.msra.mxu0 0.0
    %4340 = vmatprep.subr.mxu0 0.0
    %4341 = vmatpush1.msra.mxu0 0.0
    %4342 = vmatprep.subr.mxu0 0.0
    %4343 = vmatpush1.msra.mxu0 0.0
    %4344 = vmatprep.subr.mxu0 0.0
    %4345 = vmatpush1.msra.mxu0 0.0
    %4346 = vmatprep.subr.mxu0 0.0
    %4347 = vmatpush1.msra.mxu0 0.0
    %4348 = vmatprep.subr.mxu0 0.0
    %4349 = vmatpush1.msra.mxu0 0.0
    %4350 = vmatprep.subr.mxu0 0.0
    %4351 = vmatpush1.msra.mxu0 0.0
    %4352 = vmatprep.subr.mxu0 0.0
    %4353 = vmatpush1.msra.mxu0 0.0
    %4354 = vmatprep.subr.mxu0 0.0
    %4355 = vmatpush1.msra.mxu0 0.0
    %4356 = vmatprep.subr.mxu0 0.0
    %4357 = vmatpush1.msra.mxu0 0.0
    %4358 = vmatprep.subr.mxu0 0.0
    %4359 = vmatpush1.msra.mxu0 0.0
    %4360 = vmatprep.subr.mxu0 0.0
    %4361 = vmatpush1.msra.mxu0 0.0
    %4362 = vmatprep.subr.mxu0 0.0
    %4363 = vmatpush1.msra.mxu0 0.0
    %4364 = vmatprep.subr.mxu0 0.0
    %4365 = vmatpush1.msra.mxu0 0.0
    %4366 = vmatprep.mubr.f32.mxu0 0.0
    %4367 = vmatmul.mubr.f32.gmra.mrb[0].mxu0 %v4300
    %v4368 = vpop.f32.mrb[0].mxu0
    %v4369 = vadd.f32 0.0, %v4368
    %v4370 = vpop.f32.mrb[0].mxu0
    %4371 = vdwg.mxu0
    %v4372 = vmax.f32 %v4295, %v4369
    %v4373 = vsub.f32 %v4295, %v4372
    %v4374 = vmul.f32 %v4373, 1.442695
    %v4375 = vpow.pop %v4374
    %v4376 = vsub.f32 %v4369, %v4372
    %v4377 = vmul.f32 %v4376, 1.442695
    %v4378 = vpow.pop %v4377
    %v4379 = vadd.f32 %v4375, %v4378
    %v4380 = vrcp.pop %v4379
    %v4381 = vmul.f32 %v4375, %v4380
    %v4382 = vmul.f32 %v4381, %v4054
    %v4383 = vmul.f32 %v4378, %v4380
    %v4384 = vmul.f32 %v4383, %v4059
    %v4385 = vadd.f32 %v4382, %v4384
    %s4386 = scalar_lea.vmem %s11, 192
    %v4387 = vld [vmem:[%s4386] sm:$0xff]
    %v4388 = vld [vmem:[%s4386 + $0x8] sm:$0xff]
    %v4389 = vld [vmem:[%s4386 + $0x10] sm:$0xff]
    %v4390 = vld [vmem:[%s4386 + $0x18] sm:$0xff]
    %v4391 = vld [vmem:[%s4386 + $0x20] sm:$0xff]
    %v4392 = vld [vmem:[%s4386 + $0x28] sm:$0xff]
    %v4393 = vld [vmem:[%s4386 + $0x30] sm:$0xff]
    %v4394 = vld [vmem:[%s4386 + $0x38] sm:$0xff]
    %s4395 = scalar_lea.vmem %s12, 3
    %v4396 = vld [vmem:[%s4395] sm:$0x1]
    %v4398 = vlaneseq
    %v4399 = vshrl.u32 %v4398, 7
    %v4400 = vsub.s32 0, %v4399
    %v4401 = vrot.slane %v4396, %v4400
    %v4404 = vsel %vm126, %v4223, 0
    %v4407 = vsel %vm126, %v4385, 0
    %4409 = vmatprep.subr.mxu0 0.0
    %4410 = vmatpush1.msra.mxu0 %v4387
    %4411 = vmatprep.subr.mxu0 0.0
    %4412 = vmatpush1.msra.mxu0 %v4388
    %4413 = vmatprep.subr.mxu0 0.0
    %4414 = vmatpush1.msra.mxu0 %v4389
    %4415 = vmatprep.subr.mxu0 0.0
    %4416 = vmatpush1.msra.mxu0 %v4390
    %4417 = vmatprep.subr.mxu0 0.0
    %4418 = vmatpush1.msra.mxu0 %v4391
    %4419 = vmatprep.subr.mxu0 0.0
    %4420 = vmatpush1.msra.mxu0 %v4392
    %4421 = vmatprep.subr.mxu0 0.0
    %4422 = vmatpush1.msra.mxu0 %v4393
    %4423 = vmatprep.subr.mxu0 0.0
    %4424 = vmatpush1.msra.mxu0 %v4394
    %4425 = vmatprep.subr.mxu0 0.0
    %4426 = vmatpush1.msra.mxu0 0.0
    %4427 = vmatprep.subr.mxu0 0.0
    %4428 = vmatpush1.msra.mxu0 0.0
    %4429 = vmatprep.subr.mxu0 0.0
    %4430 = vmatpush1.msra.mxu0 0.0
    %4431 = vmatprep.subr.mxu0 0.0
    %4432 = vmatpush1.msra.mxu0 0.0
    %4433 = vmatprep.subr.mxu0 0.0
    %4434 = vmatpush1.msra.mxu0 0.0
    %4435 = vmatprep.subr.mxu0 0.0
    %4436 = vmatpush1.msra.mxu0 0.0
    %4437 = vmatprep.subr.mxu0 0.0
    %4438 = vmatpush1.msra.mxu0 0.0
    %4439 = vmatprep.subr.mxu0 0.0
    %4440 = vmatpush1.msra.mxu0 0.0
    %4441 = vmatprep.subr.mxu0 0.0
    %4442 = vmatpush1.msra.mxu0 0.0
    %4443 = vmatprep.subr.mxu0 0.0
    %4444 = vmatpush1.msra.mxu0 0.0
    %4445 = vmatprep.subr.mxu0 0.0
    %4446 = vmatpush1.msra.mxu0 0.0
    %4447 = vmatprep.subr.mxu0 0.0
    %4448 = vmatpush1.msra.mxu0 0.0
    %4449 = vmatprep.subr.mxu0 0.0
    %4450 = vmatpush1.msra.mxu0 0.0
    %4451 = vmatprep.subr.mxu0 0.0
    %4452 = vmatpush1.msra.mxu0 0.0
    %4453 = vmatprep.subr.mxu0 0.0
    %4454 = vmatpush1.msra.mxu0 0.0
    %4455 = vmatprep.subr.mxu0 0.0
    %4456 = vmatpush1.msra.mxu0 0.0
    %4457 = vmatprep.subr.mxu0 0.0
    %4458 = vmatpush1.msra.mxu0 0.0
    %4459 = vmatprep.subr.mxu0 0.0
    %4460 = vmatpush1.msra.mxu0 0.0
    %4461 = vmatprep.subr.mxu0 0.0
    %4462 = vmatpush1.msra.mxu0 0.0
    %4463 = vmatprep.subr.mxu0 0.0
    %4464 = vmatpush1.msra.mxu0 0.0
    %4465 = vmatprep.subr.mxu0 0.0
    %4466 = vmatpush1.msra.mxu0 0.0
    %4467 = vmatprep.subr.mxu0 0.0
    %4468 = vmatpush1.msra.mxu0 0.0
    %4469 = vmatprep.subr.mxu0 0.0
    %4470 = vmatpush1.msra.mxu0 0.0
    %4471 = vmatprep.subr.mxu0 0.0
    %4472 = vmatpush1.msra.mxu0 0.0
    %4473 = vmatprep.mubr.f32.mxu0 0.0
    %4474 = vmatmul.mubr.f32.gmra.mrb[0].mxu0 %v4404
    %v4475 = vpop.f32.mrb[0].mxu0
    %v4476 = vadd.f32 %v4401, %v4475
    %v4477 = vpop.f32.mrb[0].mxu0
    %4478 = vmatprep.mubr.f32.mxu0 0.0
    %4479 = vmatmul.mubr.f32.gmra.mrb[0].mxu0 %v4407
    %v4480 = vpop.f32.mrb[0].mxu0
    %v4481 = vadd.f32 %v4401, %v4480
    %v4482 = vpop.f32.mrb[0].mxu0
    %4483 = vdwg.mxu0
    %v4484 = vadd.f32 %v3730, %v4476
    %v4485 = vadd.f32 %v3731, %v4481
    %s4486 = scalar_lea.vmem %s13, 384
    %v4487 = vld [vmem:[%s4486] sm:$0xff]
    %v4488 = vld [vmem:[%s4486 + $0x8] sm:$0xff]
    %v4489 = vld [vmem:[%s4486 + $0x10] sm:$0xff]
    %v4490 = vld [vmem:[%s4486 + $0x18] sm:$0xff]
    %v4491 = vld [vmem:[%s4486 + $0x20] sm:$0xff]
    %v4492 = vld [vmem:[%s4486 + $0x28] sm:$0xff]
    %v4493 = vld [vmem:[%s4486 + $0x30] sm:$0xff]
    %v4494 = vld [vmem:[%s4486 + $0x38] sm:$0xff]
    %v4495 = vld [vmem:[%s4486 + $0x40] sm:$0xff]
    %v4496 = vld [vmem:[%s4486 + $0x48] sm:$0xff]
    %v4497 = vld [vmem:[%s4486 + $0x50] sm:$0xff]
    %v4498 = vld [vmem:[%s4486 + $0x58] sm:$0xff]
    %v4499 = vld [vmem:[%s4486 + $0x60] sm:$0xff]
    %v4500 = vld [vmem:[%s4486 + $0x68] sm:$0xff]
    %v4501 = vld [vmem:[%s4486 + $0x70] sm:$0xff]
    %v4502 = vld [vmem:[%s4486 + $0x78] sm:$0xff]
    %s4503 = scalar_lea.vmem %s14, 6
    %v4504 = vld [vmem:[%s4503] sm:$0x3]
    %v4506 = vlaneseq
    %v4507 = vshrl.u32 %v4506, 7
    %v4508 = vsub.s32 0, %v4507
    %v4509 = vrot.slane %v4504, %v4508
    %v4510 = vlaneseq
    %v4511 = vshrl.u32 %v4510, 7
    %v4512 = vsub.s32 1, %v4511
    %v4513 = vrot.slane %v4504, %v4512
    %4516 = vmatprep.subr.mxu0 %v4488
    %4517 = vmatpush1.msra.mxu0 %v4487
    %4518 = vmatprep.subr.mxu0 %v4490
    %4519 = vmatpush1.msra.mxu0 %v4489
    %4520 = vmatprep.subr.mxu0 %v4492
    %4521 = vmatpush1.msra.mxu0 %v4491
    %4522 = vmatprep.subr.mxu0 %v4494
    %4523 = vmatpush1.msra.mxu0 %v4493
    %4524 = vmatprep.subr.mxu0 %v4496
    %4525 = vmatpush1.msra.mxu0 %v4495
    %4526 = vmatprep.subr.mxu0 %v4498
    %4527 = vmatpush1.msra.mxu0 %v4497
    %4528 = vmatprep.subr.mxu0 %v4500
    %4529 = vmatpush1.msra.mxu0 %v4499
    %4530 = vmatprep.subr.mxu0 %v4502
    %4531 = vmatpush1.msra.mxu0 %v4501
    %4532 = vmatprep.subr.mxu0 0.0
    %4533 = vmatpush1.msra.mxu0 0.0
    %4534 = vmatprep.subr.mxu0 0.0
    %4535 = vmatpush1.msra.mxu0 0.0
    %4536 = vmatprep.subr.mxu0 0.0
    %4537 = vmatpush1.msra.mxu0 0.0
    %4538 = vmatprep.subr.mxu0 0.0
    %4539 = vmatpush1.msra.mxu0 0.0
    %4540 = vmatprep.subr.mxu0 0.0
    %4541 = vmatpush1.msra.mxu0 0.0
    %4542 = vmatprep.subr.mxu0 0.0
    %4543 = vmatpush1.msra.mxu0 0.0
    %4544 = vmatprep.subr.mxu0 0.0
    %4545 = vmatpush1.msra.mxu0 0.0
    %4546 = vmatprep.subr.mxu0 0.0
    %4547 = vmatpush1.msra.mxu0 0.0
    %4548 = vmatprep.subr.mxu0 0.0
    %4549 = vmatpush1.msra.mxu0 0.0
    %4550 = vmatprep.subr.mxu0 0.0
    %4551 = vmatpush1.msra.mxu0 0.0
    %4552 = vmatprep.subr.mxu0 0.0
    %4553 = vmatpush1.msra.mxu0 0.0
    %4554 = vmatprep.subr.mxu0 0.0
    %4555 = vmatpush1.msra.mxu0 0.0
    %4556 = vmatprep.subr.mxu0 0.0
    %4557 = vmatpush1.msra.mxu0 0.0
    %4558 = vmatprep.subr.mxu0 0.0
    %4559 = vmatpush1.msra.mxu0 0.0
    %4560 = vmatprep.subr.mxu0 0.0
    %4561 = vmatpush1.msra.mxu0 0.0
    %4562 = vmatprep.subr.mxu0 0.0
    %4563 = vmatpush1.msra.mxu0 0.0
    %4564 = vmatprep.subr.mxu0 0.0
    %4565 = vmatpush1.msra.mxu0 0.0
    %4566 = vmatprep.subr.mxu0 0.0
    %4567 = vmatpush1.msra.mxu0 0.0
    %4568 = vmatprep.subr.mxu0 0.0
    %4569 = vmatpush1.msra.mxu0 0.0
    %4570 = vmatprep.subr.mxu0 0.0
    %4571 = vmatpush1.msra.mxu0 0.0
    %4572 = vmatprep.subr.mxu0 0.0
    %4573 = vmatpush1.msra.mxu0 0.0
    %4574 = vmatprep.subr.mxu0 0.0
    %4575 = vmatpush1.msra.mxu0 0.0
    %4576 = vmatprep.subr.mxu0 0.0
    %4577 = vmatpush1.msra.mxu0 0.0
    %4578 = vmatprep.subr.mxu0 0.0
    %4579 = vmatpush1.msra.mxu0 0.0
    %4580 = vmatprep.mubr.f32.mxu0 0.0
    %4581 = vmatmul.mubr.f32.gmra.mrb[0].mxu0 %v3796
    %v4582 = vpop.f32.mrb[0].mxu0
    %v4583 = vadd.f32 %v4509, %v4582
    %v4584 = vpop.f32.mrb[0].mxu0
    %v4585 = vadd.f32 %v4513, %v4584
    %4586 = vmatprep.mubr.f32.mxu0 0.0
    %4587 = vmatmul.mubr.f32.gmra.mrb[0].mxu0 %v3799
    %v4588 = vpop.f32.mrb[0].mxu0
    %v4589 = vadd.f32 %v4509, %v4588
    %v4590 = vpop.f32.mrb[0].mxu0
    %v4591 = vadd.f32 %v4513, %v4590
    %4592 = vdwg.mxu0
    %v4593 = vmul.f32 %v4583, 0.5
    %v4594 = vmul.f32 %v4585, 0.5
    %v4595 = vmul.f32 %v4589, 0.5
    %v4596 = vmul.f32 %v4591, 0.5
    %v4597 = vmul.f32 %v4583, 0.70710677
    %v4598 = vmul.f32 %v4585, 0.70710677
    %v4599 = vmul.f32 %v4589, 0.70710677
    %v4600 = vmul.f32 %v4591, 0.70710677
    %v4601 = verf.f32.pop %v4597
    %v4602 = verf.f32.pop %v4598
    %v4603 = verf.f32.pop %v4599
    %v4604 = verf.f32.pop %v4600
    %v4605 = vadd.f32 %v4601, 1.0
    %v4606 = vadd.f32 %v4602, 1.0
    %v4607 = vadd.f32 %v4603, 1.0
    %v4608 = vadd.f32 %v4604, 1.0
    %v4609 = vmul.f32 %v4593, %v4605
    %v4610 = vmul.f32 %v4594, %v4606
    %v4611 = vmul.f32 %v4595, %v4607
    %v4612 = vmul.f32 %v4596, %v4608
    %s4613 = scalar_lea.vmem %s15, 768
    %v4614 = vld [vmem:[%s4613] sm:$0xff]
    %v4615 = vld [vmem:[%s4613 + $0x8] sm:$0xff]
    %v4616 = vld [vmem:[%s4613 + $0x10] sm:$0xff]
    %v4617 = vld [vmem:[%s4613 + $0x18] sm:$0xff]
    %v4618 = vld [vmem:[%s4613 + $0x20] sm:$0xff]
    %v4619 = vld [vmem:[%s4613 + $0x28] sm:$0xff]
    %v4620 = vld [vmem:[%s4613 + $0x30] sm:$0xff]
    %v4621 = vld [vmem:[%s4613 + $0x38] sm:$0xff]
    %v4622 = vld [vmem:[%s4613 + $0x40] sm:$0xff]
    %v4623 = vld [vmem:[%s4613 + $0x48] sm:$0xff]
    %v4624 = vld [vmem:[%s4613 + $0x50] sm:$0xff]
    %v4625 = vld [vmem:[%s4613 + $0x58] sm:$0xff]
    %v4626 = vld [vmem:[%s4613 + $0x60] sm:$0xff]
    %v4627 = vld [vmem:[%s4613 + $0x68] sm:$0xff]
    %v4628 = vld [vmem:[%s4613 + $0x70] sm:$0xff]
    %v4629 = vld [vmem:[%s4613 + $0x78] sm:$0xff]
    %v4630 = vld [vmem:[%s4613 + $0x80] sm:$0xff]
    %v4631 = vld [vmem:[%s4613 + $0x88] sm:$0xff]
    %v4632 = vld [vmem:[%s4613 + $0x90] sm:$0xff]
    %v4633 = vld [vmem:[%s4613 + $0x98] sm:$0xff]
    %v4634 = vld [vmem:[%s4613 + $0xa0] sm:$0xff]
    %v4635 = vld [vmem:[%s4613 + $0xa8] sm:$0xff]
    %v4636 = vld [vmem:[%s4613 + $0xb0] sm:$0xff]
    %v4637 = vld [vmem:[%s4613 + $0xb8] sm:$0xff]
    %v4638 = vld [vmem:[%s4613 + $0xc0] sm:$0xff]
    %v4639 = vld [vmem:[%s4613 + $0xc8] sm:$0xff]
    %v4640 = vld [vmem:[%s4613 + $0xd0] sm:$0xff]
    %v4641 = vld [vmem:[%s4613 + $0xd8] sm:$0xff]
    %v4642 = vld [vmem:[%s4613 + $0xe0] sm:$0xff]
    %v4643 = vld [vmem:[%s4613 + $0xe8] sm:$0xff]
    %v4644 = vld [vmem:[%s4613 + $0xf0] sm:$0xff]
    %v4645 = vld [vmem:[%s4613 + $0xf8] sm:$0xff]
    %s4646 = scalar_lea.vmem [#allocation7], 3
    %v4647 = vld [vmem:[%s4646] sm:$0x1]
    %v4649 = vlaneseq
    %v4650 = vshrl.u32 %v4649, 7
    %v4651 = vsub.s32 0, %v4650
    %v4652 = vrot.slane %v4647, %v4651
    %4654 = vmatprep.subr.mxu0 0.0
    %4655 = vmatpush1.msra.mxu0 %v4614
    %4656 = vmatprep.subr.mxu0 0.0
    %4657 = vmatpush1.msra.mxu0 %v4615
    %4658 = vmatprep.subr.mxu0 0.0
    %4659 = vmatpush1.msra.mxu0 %v4616
    %4660 = vmatprep.subr.mxu0 0.0
    %4661 = vmatpush1.msra.mxu0 %v4617
    %4662 = vmatprep.subr.mxu0 0.0
    %4663 = vmatpush1.msra.mxu0 %v4618
    %4664 = vmatprep.subr.mxu0 0.0
    %4665 = vmatpush1.msra.mxu0 %v4619
    %4666 = vmatprep.subr.mxu0 0.0
    %4667 = vmatpush1.msra.mxu0 %v4620
    %4668 = vmatprep.subr.mxu0 0.0
    %4669 = vmatpush1.msra.mxu0 %v4621
    %4670 = vmatprep.subr.mxu0 0.0
    %4671 = vmatpush1.msra.mxu0 %v4622
    %4672 = vmatprep.subr.mxu0 0.0
    %4673 = vmatpush1.msra.mxu0 %v4623
    %4674 = vmatprep.subr.mxu0 0.0
    %4675 = vmatpush1.msra.mxu0 %v4624
    %4676 = vmatprep.subr.mxu0 0.0
    %4677 = vmatpush1.msra.mxu0 %v4625
    %4678 = vmatprep.subr.mxu0 0.0
    %4679 = vmatpush1.msra.mxu0 %v4626
    %4680 = vmatprep.subr.mxu0 0.0
    %4681 = vmatpush1.msra.mxu0 %v4627
    %4682 = vmatprep.subr.mxu0 0.0
    %4683 = vmatpush1.msra.mxu0 %v4628
    %4684 = vmatprep.subr.mxu0 0.0
    %4685 = vmatpush1.msra.mxu0 %v4629
    %4686 = vmatprep.subr.mxu0 0.0
    %4687 = vmatpush1.msra.mxu0 %v4630
    %4688 = vmatprep.subr.mxu0 0.0
    %4689 = vmatpush1.msra.mxu0 %v4631
    %4690 = vmatprep.subr.mxu0 0.0
    %4691 = vmatpush1.msra.mxu0 %v4632
    %4692 = vmatprep.subr.mxu0 0.0
    %4693 = vmatpush1.msra.mxu0 %v4633
    %4694 = vmatprep.subr.mxu0 0.0
    %4695 = vmatpush1.msra.mxu0 %v4634
    %4696 = vmatprep.subr.mxu0 0.0
    %4697 = vmatpush1.msra.mxu0 %v4635
    %4698 = vmatprep.subr.mxu0 0.0
    %4699 = vmatpush1.msra.mxu0 %v4636
    %4700 = vmatprep.subr.mxu0 0.0
    %4701 = vmatpush1.msra.mxu0 %v4637
    %4702 = vmatprep.subr.mxu0 0.0
    %4703 = vmatpush1.msra.mxu0 %v4638
    %4704 = vmatprep.subr.mxu0 0.0
    %4705 = vmatpush1.msra.mxu0 %v4639
    %4706 = vmatprep.subr.mxu0 0.0
    %4707 = vmatpush1.msra.mxu0 %v4640
    %4708 = vmatprep.subr.mxu0 0.0
    %4709 = vmatpush1.msra.mxu0 %v4641
    %4710 = vmatprep.subr.mxu0 0.0
    %4711 = vmatpush1.msra.mxu0 %v4642
    %4712 = vmatprep.subr.mxu0 0.0
    %4713 = vmatpush1.msra.mxu0 %v4643
    %4714 = vmatprep.subr.mxu0 0.0
    %4715 = vmatpush1.msra.mxu0 %v4644
    %4716 = vmatprep.subr.mxu0 0.0
    %4717 = vmatpush1.msra.mxu0 %v4645
    %4718 = vmatprep.mubr.f32.mxu0 %v4610
    %4719 = vmatmul.mubr.f32.gmra.mrb[0].mxu0 %v4609
    %v4720 = vpop.f32.mrb[0].mxu0
    %v4721 = vadd.f32 %v4652, %v4720
    %v4722 = vpop.f32.mrb[0].mxu0
    %4723 = vmatprep.mubr.f32.mxu0 %v4612
    %4724 = vmatmul.mubr.f32.gmra.mrb[0].mxu0 %v4611
    %v4725 = vpop.f32.mrb[0].mxu0
    %v4726 = vadd.f32 %v4652, %v4725
    %v4727 = vpop.f32.mrb[0].mxu0
    %4728 = vdwg.mxu0
    %v4729 = vadd.f32 %v4484, %v4721
    %v4730 = vadd.f32 %v4485, %v4726
    %v4732 = vsel %vm126, %v4729, 0
    %v4735 = vsel %vm126, %v4730, 0
    %4737 = vmatprep.subr.mxu0 %v4488
    %4738 = vmatpush1.msra.mxu0 %v4487
    %4739 = vmatprep.subr.mxu0 %v4490
    %4740 = vmatpush1.msra.mxu0 %v4489
    %4741 = vmatprep.subr.mxu0 %v4492
    %4742 = vmatpush1.msra.mxu0 %v4491
    %4743 = vmatprep.subr.mxu0 %v4494
    %4744 = vmatpush1.msra.mxu0 %v4493
    %4745 = vmatprep.subr.mxu0 %v4496
    %4746 = vmatpush1.msra.mxu0 %v4495
    %4747 = vmatprep.subr.mxu0 %v4498
    %4748 = vmatpush1.msra.mxu0 %v4497
    %4749 = vmatprep.subr.mxu0 %v4500
    %4750 = vmatpush1.msra.mxu0 %v4499
    %4751 = vmatprep.subr.mxu0 %v4502
    %4752 = vmatpush1.msra.mxu0 %v4501
    %4753 = vmatprep.subr.mxu0 0.0
    %4754 = vmatpush1.msra.mxu0 0.0
    %4755 = vmatprep.subr.mxu0 0.0
    %4756 = vmatpush1.msra.mxu0 0.0
    %4757 = vmatprep.subr.mxu0 0.0
    %4758 = vmatpush1.msra.mxu0 0.0
    %4759 = vmatprep.subr.mxu0 0.0
    %4760 = vmatpush1.msra.mxu0 0.0
    %4761 = vmatprep.subr.mxu0 0.0
    %4762 = vmatpush1.msra.mxu0 0.0
    %4763 = vmatprep.subr.mxu0 0.0
    %4764 = vmatpush1.msra.mxu0 0.0
    %4765 = vmatprep.subr.mxu0 0.0
    %4766 = vmatpush1.msra.mxu0 0.0
    %4767 = vmatprep.subr.mxu0 0.0
    %4768 = vmatpush1.msra.mxu0 0.0
    %4769 = vmatprep.subr.mxu0 0.0
    %4770 = vmatpush1.msra.mxu0 0.0
    %4771 = vmatprep.subr.mxu0 0.0
    %4772 = vmatpush1.msra.mxu0 0.0
    %4773 = vmatprep.subr.mxu0 0.0
    %4774 = vmatpush1.msra.mxu0 0.0
    %4775 = vmatprep.subr.mxu0 0.0
    %4776 = vmatpush1.msra.mxu0 0.0
    %4777 = vmatprep.subr.mxu0 0.0
    %4778 = vmatpush1.msra.mxu0 0.0
    %4779 = vmatprep.subr.mxu0 0.0
    %4780 = vmatpush1.msra.mxu0 0.0
    %4781 = vmatprep.subr.mxu0 0.0
    %4782 = vmatpush1.msra.mxu0 0.0
    %4783 = vmatprep.subr.mxu0 0.0
    %4784 = vmatpush1.msra.mxu0 0.0
    %4785 = vmatprep.subr.mxu0 0.0
    %4786 = vmatpush1.msra.mxu0 0.0
    %4787 = vmatprep.subr.mxu0 0.0
    %4788 = vmatpush1.msra.mxu0 0.0
    %4789 = vmatprep.subr.mxu0 0.0
    %4790 = vmatpush1.msra.mxu0 0.0
    %4791 = vmatprep.subr.mxu0 0.0
    %4792 = vmatpush1.msra.mxu0 0.0
    %4793 = vmatprep.subr.mxu0 0.0
    %4794 = vmatpush1.msra.mxu0 0.0
    %4795 = vmatprep.subr.mxu0 0.0
    %4796 = vmatpush1.msra.mxu0 0.0
    %4797 = vmatprep.subr.mxu0 0.0
    %4798 = vmatpush1.msra.mxu0 0.0
    %4799 = vmatprep.subr.mxu0 0.0
    %4800 = vmatpush1.msra.mxu0 0.0
    %4801 = vmatprep.mubr.f32.mxu0 0.0
    %4802 = vmatmul.mubr.f32.gmra.mrb[0].mxu0 %v4732
    %v4803 = vpop.f32.mrb[0].mxu0
    %v4804 = vadd.f32 %v4509, %v4803
    %v4805 = vpop.f32.mrb[0].mxu0
    %v4806 = vadd.f32 %v4513, %v4805
    %4807 = vmatprep.mubr.f32.mxu0 0.0
    %4808 = vmatmul.mubr.f32.gmra.mrb[0].mxu0 %v4735
    %v4809 = vpop.f32.mrb[0].mxu0
    %v4810 = vadd.f32 %v4509, %v4809
    %v4811 = vpop.f32.mrb[0].mxu0
    %v4812 = vadd.f32 %v4513, %v4811
    %4813 = vdwg.mxu0
    %v4814 = vmul.f32 %v4804, 0.5
    %v4815 = vmul.f32 %v4806, 0.5
    %v4816 = vmul.f32 %v4810, 0.5
    %v4817 = vmul.f32 %v4812, 0.5
    %v4818 = vmul.f32 %v4804, 0.70710677
    %v4819 = vmul.f32 %v4806, 0.70710677
    %v4820 = vmul.f32 %v4810, 0.70710677
    %v4821 = vmul.f32 %v4812, 0.70710677
    %v4822 = verf.f32.pop %v4818
    %v4823 = verf.f32.pop %v4819
    %v4824 = verf.f32.pop %v4820
    %v4825 = verf.f32.pop %v4821
    %v4826 = vadd.f32 %v4822, 1.0
    %v4827 = vadd.f32 %v4823, 1.0
    %v4828 = vadd.f32 %v4824, 1.0
    %v4829 = vadd.f32 %v4825, 1.0
    %v4830 = vmul.f32 %v4814, %v4826
    %v4831 = vmul.f32 %v4815, %v4827
    %v4832 = vmul.f32 %v4816, %v4828
    %v4833 = vmul.f32 %v4817, %v4829
    %4834 = vmatprep.subr.mxu0 0.0
    %4835 = vmatpush1.msra.mxu0 %v4614
    %4836 = vmatprep.subr.mxu0 0.0
    %4837 = vmatpush1.msra.mxu0 %v4615
    %4838 = vmatprep.subr.mxu0 0.0
    %4839 = vmatpush1.msra.mxu0 %v4616
    %4840 = vmatprep.subr.mxu0 0.0
    %4841 = vmatpush1.msra.mxu0 %v4617
    %4842 = vmatprep.subr.mxu0 0.0
    %4843 = vmatpush1.msra.mxu0 %v4618
    %4844 = vmatprep.subr.mxu0 0.0
    %4845 = vmatpush1.msra.mxu0 %v4619
    %4846 = vmatprep.subr.mxu0 0.0
    %4847 = vmatpush1.msra.mxu0 %v4620
    %4848 = vmatprep.subr.mxu0 0.0
    %4849 = vmatpush1.msra.mxu0 %v4621
    %4850 = vmatprep.subr.mxu0 0.0
    %4851 = vmatpush1.msra.mxu0 %v4622
    %4852 = vmatprep.subr.mxu0 0.0
    %4853 = vmatpush1.msra.mxu0 %v4623
    %4854 = vmatprep.subr.mxu0 0.0
    %4855 = vmatpush1.msra.mxu0 %v4624
    %4856 = vmatprep.subr.mxu0 0.0
    %4857 = vmatpush1.msra.mxu0 %v4625
    %4858 = vmatprep.subr.mxu0 0.0
    %4859 = vmatpush1.msra.mxu0 %v4626
    %4860 = vmatprep.subr.mxu0 0.0
    %4861 = vmatpush1.msra.mxu0 %v4627
    %4862 = vmatprep.subr.mxu0 0.0
    %4863 = vmatpush1.msra.mxu0 %v4628
    %4864 = vmatprep.subr.mxu0 0.0
    %4865 = vmatpush1.msra.mxu0 %v4629
    %4866 = vmatprep.subr.mxu0 0.0
    %4867 = vmatpush1.msra.mxu0 %v4630
    %4868 = vmatprep.subr.mxu0 0.0
    %4869 = vmatpush1.msra.mxu0 %v4631
    %4870 = vmatprep.subr.mxu0 0.0
    %4871 = vmatpush1.msra.mxu0 %v4632
    %4872 = vmatprep.subr.mxu0 0.0
    %4873 = vmatpush1.msra.mxu0 %v4633
    %4874 = vmatprep.subr.mxu0 0.0
    %4875 = vmatpush1.msra.mxu0 %v4634
    %4876 = vmatprep.subr.mxu0 0.0
    %4877 = vmatpush1.msra.mxu0 %v4635
    %4878 = vmatprep.subr.mxu0 0.0
    %4879 = vmatpush1.msra.mxu0 %v4636
    %4880 = vmatprep.subr.mxu0 0.0
    %4881 = vmatpush1.msra.mxu0 %v4637
    %4882 = vmatprep.subr.mxu0 0.0
    %4883 = vmatpush1.msra.mxu0 %v4638
    %4884 = vmatprep.subr.mxu0 0.0
    %4885 = vmatpush1.msra.mxu0 %v4639
    %4886 = vmatprep.subr.mxu0 0.0
    %4887 = vmatpush1.msra.mxu0 %v4640
    %4888 = vmatprep.subr.mxu0 0.0
    %4889 = vmatpush1.msra.mxu0 %v4641
    %4890 = vmatprep.subr.mxu0 0.0
    %4891 = vmatpush1.msra.mxu0 %v4642
    %4892 = vmatprep.subr.mxu0 0.0
    %4893 = vmatpush1.msra.mxu0 %v4643
    %4894 = vmatprep.subr.mxu0 0.0
    %4895 = vmatpush1.msra.mxu0 %v4644
    %4896 = vmatprep.subr.mxu0 0.0
    %4897 = vmatpush1.msra.mxu0 %v4645
    %4898 = vmatprep.mubr.f32.mxu0 %v4831
    %4899 = vmatmul.mubr.f32.gmra.mrb[0].mxu0 %v4830
    %v4900 = vpop.f32.mrb[0].mxu0
    %v4901 = vadd.f32 %v4652, %v4900
    %v4902 = vpop.f32.mrb[0].mxu0
    %4903 = vmatprep.mubr.f32.mxu0 %v4833
    %4904 = vmatmul.mubr.f32.gmra.mrb[0].mxu0 %v4832
    %v4905 = vpop.f32.mrb[0].mxu0
    %v4906 = vadd.f32 %v4652, %v4905
    %v4907 = vpop.f32.mrb[0].mxu0
    %4908 = vdwg.mxu0
    %v4909 = vadd.f32 %v4484, %v4901
    %v4910 = vadd.f32 %v4485, %v4906
    %4911 = vst.msk [vmem:[#allocation8] sm:$0xff] %vm126, %v4909
    %4912 = vst.msk [vmem:[#allocation8 + $0x8] sm:$0xff] %vm126, %v4910
    // Predicated region
    $region86: #{transce_forward.1} parent=1 // pred_check
      _
    $region87: #{transce_forward.1} parent=1 // pred_check_branch
      %4914 = sbr.rel (0) target = $region89
    $region88: #{transce_forward.1} parent=1 // pred_region
      %s4916 = ssub.s32 256, 256
      %4917 = vsyncadd [#allocation4], %s4916
      %s4918 = sshll.u32 [#allocation8], 4
      %s4919 = int_to_ptr.vmem [resolvable:$true] %s4918
      %4924 = dma.vmem_to_hbm [thread:$0]  %s4919, 256, %s18, [#allocation4], 128, 128, 8
    $region89: #{transce_forward.1} parent=1 // pred_fallthru
      _
    // Predicated region
    $region90: #{transce_forward.1} parent=1 // pred_check
      _
    $region91: #{transce_forward.1} parent=1 // pred_check_branch
      %4926 = sbr.rel (0) target = $region93
    $region92: #{transce_forward.1} parent=1 // pred_region
      %4927 = dma.done [#allocation4], 256
    $region93: #{transce_forward.1} parent=1 // pred_fallthru
      _
    %4928 = vsyncpa [#allocation3], 1
    %4929 = vsyncpa [#allocation6], 1
    %4930 = vsyncpa [#allocation4], 1

</llo_original>
